<compile_context>
chip_gen: v5e
topology: v5e:2x2
jax: 0.10.0
libtpu: 0.0.40
codegen_flags: <defaults>
</compile_context>

<pallas_src>
import functools

import jax
import jax.numpy as jnp
from jax.experimental import pallas as pl
from jax.experimental.pallas import tpu as pltpu

_VMEM_LIMIT = 48 * 1024 * 1024  # safe on v5e/v6e (128 MiB phys) and v7x (64 MiB)


def _round_up(x, m):
    return ((x + m - 1) // m) * m


def _pick_tile(total, maxt, align):
    """Largest multiple of `align` that divides `total` and is <= maxt."""
    if total <= align:
        return total
    best = align
    t = align
    while t <= min(total, maxt):
        if total % t == 0:
            best = t
        t += align
    return best


# ----------------------------------------------------------------------------
# Generic dense kernel:  out = a @ w + b   (f32 accumulation on the MXU).
# Grid is (N-tiles, M-tiles): M is innermost, so the weight block index is
# constant across the inner loop and the weight stays resident in VMEM
# (fetched once per N tile instead of once per M tile).
# ----------------------------------------------------------------------------
def _dense_kernel(a_ref, w_ref, b_ref, o_ref):
    o_ref[...] = (
        jnp.dot(a_ref[...], w_ref[...], preferred_element_type=jnp.float32)
        + b_ref[...]
    ).astype(o_ref.dtype)


def _dense(a, w, b, *, tm=512, tn=512, out_dtype=jnp.float32):
    """a: (M, K); w: (K, Np) pre-padded, Np % 128 == 0; b: (Np,) f32.

    Returns (M, Np) in out_dtype.  Only the M axis is padded here (activations
    change every call); weights/bias arrive pre-padded from prep.
    """
    M, K = a.shape
    K2, Np = w.shape
    assert K == K2 and Np % 128 == 0

    tm = min(tm, _round_up(M, 8))        # big M tile (often the whole M axis)
    tn = _pick_tile(Np, tn, 128)         # lane-aligned N tile dividing Np
    m_pad = _round_up(M, tm)
    if m_pad != M:
        a = jnp.pad(a, ((0, m_pad - M), (0, 0)))
    b2 = b.reshape(1, Np).astype(jnp.float32)

    out = pl.pallas_call(
        _dense_kernel,
        out_shape=jax.ShapeDtypeStruct((m_pad, Np), out_dtype),
        grid_spec=pltpu.PrefetchScalarGridSpec(
            num_scalar_prefetch=0,
            grid=(Np // tn, m_pad // tm),            # N outer, M innermost
            in_specs=[
                pl.BlockSpec((tm, K), lambda j, i: (i, 0)),
                pl.BlockSpec((K, tn), lambda j, i: (0, j)),   # resident per j
                pl.BlockSpec((1, tn), lambda j, i: (0, j)),
            ],
            out_specs=pl.BlockSpec((tm, tn), lambda j, i: (i, j)),
        ),
        compiler_params=pltpu.CompilerParams(
            dimension_semantics=("parallel", "parallel"),
            vmem_limit_bytes=_VMEM_LIMIT,
        ),
    )(a, w, b2)
    return out[:M]


# ----------------------------------------------------------------------------
# LSTM recurrence kernel.  xg already contains x@W_ih^T + biases; per step we
# only do the small h@W_hh^T matmul plus elementwise gate math.  H is padded
# to a multiple of 128 so gate slices / h stores are full vregs.
# ----------------------------------------------------------------------------
def _lstm_recurrence_kernel(xg_ref, whh_ref, h_out_ref, h_sc, c_sc):
    # h/c scratch persists across grid steps; the T axis MUST stay "arbitrary"
    # (sequential) or the recurrence silently breaks.
    @pl.when(pl.program_id(0) == 0)
    def _():
        h_sc[...] = jnp.zeros_like(h_sc)
        c_sc[...] = jnp.zeros_like(c_sc)

    Hp = h_sc.shape[-1]
    tc = xg_ref.shape[0]

    def step(t, carry):
        # Read/write state through VMEM scratch each step (structured traffic,
        # no huge fori_loop carry -> controlled vreg pressure).
        h_prev = h_sc[...]
        c_prev = c_sc[...]
        gates = xg_ref[t].astype(jnp.float32) + jnp.dot(
            h_prev.astype(whh_ref.dtype),
            whh_ref[...],
            preferred_element_type=jnp.float32,
        )
        # PyTorch LSTM gate order: i, f, g, o   (lane-aligned slices, Hp%128==0)
        i_g = jax.nn.sigmoid(gates[:, 0 * Hp:1 * Hp])
        f_g = jax.nn.sigmoid(gates[:, 1 * Hp:2 * Hp])
        g_g = jnp.tanh(gates[:, 2 * Hp:3 * Hp])
        o_g = jax.nn.sigmoid(gates[:, 3 * Hp:4 * Hp])
        c_new = f_g * c_prev + i_g * g_g
        h_new = o_g * jnp.tanh(c_new)
        h_sc[...] = h_new
        c_sc[...] = c_new
        h_out_ref[t] = h_new.astype(h_out_ref.dtype)
        return carry

    # Bounded unroll (not full): enough ILP visibility, no regalloc blowup.
    jax.lax.fori_loop(0, tc, step, 0, unroll=min(8, tc))


def _lstm_recurrence(xg, whh, *, t_chunk=16, out_dtype=jnp.float32):
    """xg: (T, B, 4Hp) (bias folded in); whh: (Hp, 4Hp).  Returns (T, B, Hp)."""
    T, B, G = xg.shape
    Hp = whh.shape[0]
    assert G == 4 * Hp

    tc = min(t_chunk, T)                 # sized for v7x's 64 MiB VMEM at
    t_pad = _round_up(T, tc)             # realistic B/H; amortizes grid cost
    if t_pad != T:
        # NOTE: padded trailing timesteps still run and perturb h_sc/c_sc; the
        # final state is never emitted, so this is harmless.  Do not extend
        # this kernel to return (h_T, c_T) without masking the padded steps.
        xg = jnp.pad(xg, ((0, t_pad - T), (0, 0), (0, 0)))

    h_all = pl.pallas_call(
        _lstm_recurrence_kernel,
        out_shape=jax.ShapeDtypeStruct((t_pad, B, Hp), out_dtype),
        grid_spec=pltpu.PrefetchScalarGridSpec(
            num_scalar_prefetch=0,
            grid=(t_pad // tc,),
            in_specs=[
                pl.BlockSpec((tc, B, 4 * Hp), lambda c: (c, 0, 0)),  # xg chunk
                # Constant index_map -> W_hh^T fetched once, stays resident.
                pl.BlockSpec((Hp, 4 * Hp), lambda c: (0, 0)),
            ],
            out_specs=pl.BlockSpec((tc, B, Hp), lambda c: (c, 0, 0)),
            scratch_shapes=[
                pltpu.VMEM((B, Hp), jnp.float32),   # h state (f32)
                pltpu.VMEM((B, Hp), jnp.float32),   # c state (f32)
            ],
        ),
        compiler_params=pltpu.CompilerParams(
            # Recurrence over T: keep this "arbitrary" (sequential).
            dimension_semantics=("arbitrary",),
            vmem_limit_bytes=_VMEM_LIMIT,
        ),
    )(xg, whh)
    return h_all[:T]


# ----------------------------------------------------------------------------
# One-time parameter preparation (hoisted out of the per-call path):
# transpose, cast to the MXU dtype, and zero-pad per gate so H -> Hp (mult of
# 128) and V -> Vp (mult of 512).  Zero padding is exact: padded h/c lanes stay
# exactly 0 through the recurrence and padded weight columns contribute 0.
# ----------------------------------------------------------------------------
def prepare_decoder_params(params, weight_dtype=jnp.bfloat16):
    w_ih = params["lstm_w_ih"]          # (4H, E)
    w_hh = params["lstm_w_hh"]          # (4H, H)
    b_ih = params["lstm_b_ih"]          # (4H,)
    b_hh = params["lstm_b_hh"]          # (4H,)
    w_lin = params["linear_weight"]     # (V, H)
    b_lin = params["linear_bias"]       # (V,)

    H = w_hh.shape[1]
    V = w_lin.shape[0]
    Hp = _round_up(H, 128)
    Vp = _round_up(V, 512)

    def pad_gate_rows(w):               # (4H, X) -> (4Hp, X), per-gate pad
        w4 = w.reshape(4, H, w.shape[1])
        w4 = jnp.pad(w4, ((0, 0), (0, Hp - H), (0, 0)))
        return w4.reshape(4 * Hp, w.shape[1])

    wih_p = pad_gate_rows(w_ih)                                  # (4Hp, E)
    whh_p = jnp.pad(pad_gate_rows(w_hh), ((0, 0), (0, Hp - H)))  # (4Hp, Hp)
    bias = jnp.pad((b_ih + b_hh).reshape(4, H),
                   ((0, 0), (0, Hp - H))).reshape(4 * Hp)        # (4Hp,)
    wlin_p = jnp.pad(w_lin, ((0, Vp - V), (0, Hp - H)))          # (Vp, Hp)
    blin_p = jnp.pad(b_lin, ((0, Vp - V),))                      # (Vp,)

    return {
        "embed_weight": params["embed_weight"],                  # (V, E) f32
        "w_ih_t": jnp.transpose(wih_p).astype(weight_dtype),     # (E, 4Hp)
        "w_hh_t": jnp.transpose(whh_p).astype(weight_dtype),     # (Hp, 4Hp)
        "lstm_bias": bias.astype(jnp.float32),                   # (4Hp,)
        "w_lin_t": jnp.transpose(wlin_p).astype(weight_dtype),   # (Hp, Vp)
        "linear_bias": blin_p.astype(jnp.float32),               # (Vp,)
    }


# ----------------------------------------------------------------------------
# Full DecoderRNN forward.
# ----------------------------------------------------------------------------
@functools.partial(jax.jit, static_argnames=("vocab_size", "t_chunk"))
def decoder_rnn_forward(features, captions, prep, *, vocab_size, t_chunk=16):
    """features: (B, E) f32; captions: (B, T) int32.  Returns (B, T, V) f32."""
    emb_w = prep["embed_weight"]
    wih_t = prep["w_ih_t"]
    whh_t = prep["w_hh_t"]
    bias = prep["lstm_bias"]
    wlin_t = prep["w_lin_t"]
    blin = prep["linear_bias"]

    wdt = wih_t.dtype
    B, E = features.shape
    Hp = whh_t.shape[0]
    Vp = wlin_t.shape[1]

    # Sublane-align the batch (pad rows are sliced off at the end).
    B_pad = _round_up(B, 8)
    if B_pad != B:
        features = jnp.pad(features, ((0, B_pad - B), (0, 0)))
        captions = jnp.pad(captions, ((0, B_pad - B), (0, 0)))

    # Build the input sequence directly time-major (T, B, E): only the tiny
    # (B, T) int caption matrix is transposed -- no large activation transpose.
    cap_tm = captions[:, :-1].T                                  # (T-1, B)
    embeds_tm = jnp.take(emb_w, cap_tm, axis=0)                  # (T-1, B, E)
    x_tm = jnp.concatenate([features[None, :, :], embeds_tm], axis=0)
    T = x_tm.shape[0]

    # Stage 1: batched input->hidden GEMM, both biases folded in; xg emitted in
    # the weight dtype (bf16 by default) to halve the big intermediate.
    xg = _dense(x_tm.reshape(T * B_pad, E).astype(wdt), wih_t, bias,
                out_dtype=wdt)
    xg = xg.reshape(T, B_pad, 4 * Hp)

    # Stage 2: sequential LSTM recurrence (Pallas), emitting hidden states.
    h_all = _lstm_recurrence(xg, whh_t, t_chunk=t_chunk, out_dtype=wdt)

    # Stage 3: vocab projection hoisted out of the loop; M is one big tile /
    # innermost so the (Hp, Vp) weight is streamed from HBM only once.
    h_bt = jnp.transpose(h_all, (1, 0, 2)).reshape(B_pad * T, Hp)
    logits = _dense(h_bt.astype(wdt), wlin_t, blin, out_dtype=jnp.float32)
    return logits.reshape(B_pad, T, Vp)[:B, :, :vocab_size]
    # TODO(synk): DecoderRNN.sample() (data-dependent greedy decode loop with
    # early break) is host-side control flow and is not implemented here.


# ----------------------------------------------------------------------------
# Pure-JAX reference (mirrors torch.nn.LSTM semantics).
# ----------------------------------------------------------------------------
def _reference_forward(features, captions, params):
    emb_w = params["embed_weight"]
    w_ih, w_hh = params["lstm_w_ih"], params["lstm_w_hh"]
    b_ih, b_hh = params["lstm_b_ih"], params["lstm_b_hh"]
    w_lin, b_lin = params["linear_weight"], params["linear_bias"]

    B, E = features.shape
    H = w_hh.shape[1]
    embeds = jnp.take(emb_w, captions[:, :-1], axis=0)
    x = jnp.concatenate([features[:, None, :], embeds], axis=1)  # (B, T, E)

    def step(carry, x_t):
        h, c = carry
        gates = x_t @ w_ih.T + h @ w_hh.T + b_ih + b_hh
        i = jax.nn.sigmoid(gates[:, 0 * H:1 * H])
        f = jax.nn.sigmoid(gates[:, 1 * H:2 * H])
        g = jnp.tanh(gates[:, 2 * H:3 * H])
        o = jax.nn.sigmoid(gates[:, 3 * H:4 * H])
        c = f * c + i * g
        h = o * jnp.tanh(c)
        return (h, c), h

    init = (jnp.zeros((B, H), jnp.float32), jnp.zeros((B, H), jnp.float32))
    _, hs = jax.lax.scan(step, init, jnp.transpose(x, (1, 0, 2)))
    hs = jnp.transpose(hs, (1, 0, 2))            # (B, T, H)
    return hs @ w_lin.T + b_lin


def make_params(key, embed_size, hidden_size, vocab_size):
    ks = jax.random.split(key, 7)
    s = 0.1
    return {
        "embed_weight": s * jax.random.normal(ks[0], (vocab_size, embed_size), jnp.float32),
        "lstm_w_ih": s * jax.random.normal(ks[1], (4 * hidden_size, embed_size), jnp.float32),
        "lstm_w_hh": s * jax.random.normal(ks[2], (4 * hidden_size, hidden_size), jnp.float32),
        "lstm_b_ih": s * jax.random.normal(ks[3], (4 * hidden_size,), jnp.float32),
        "lstm_b_hh": s * jax.random.normal(ks[4], (4 * hidden_size,), jnp.float32),
        "linear_weight": s * jax.random.normal(ks[5], (vocab_size, hidden_size), jnp.float32),
        "linear_bias": s * jax.random.normal(ks[6], (vocab_size,), jnp.float32),
    }


if __name__ == "__main__":
    B, E, H, V, T_CAP = 2, 32, 32, 128, 8

    key = jax.random.PRNGKey(0)
    k_par, k_feat, k_cap = jax.random.split(key, 3)

    params = make_params(k_par, E, H, V)
    features = jax.random.normal(k_feat, (B, E), jnp.float32)
    captions = jax.random.randint(k_cap, (B, T_CAP), 0, V, dtype=jnp.int32)

    ref = jax.block_until_ready(_reference_forward(features, captions, params))

    # f32 weights: tight check against the reference (zero padding is exact).
    prep_f32 = prepare_decoder_params(params, weight_dtype=jnp.float32)
    out_f32 = jax.block_until_ready(
        decoder_rnn_forward(features, captions, prep_f32, vocab_size=V))
    assert out_f32.shape == (B, T_CAP, V), out_f32.shape
    assert jnp.allclose(out_f32, ref, atol=1e-4, rtol=1e-4), "f32 mismatch vs reference"

    # Default bf16 MXU weights + bf16 intermediates (f32 accumulation): loose check.
    prep_bf16 = prepare_decoder_params(params, weight_dtype=jnp.bfloat16)
    out_bf16 = jax.block_until_ready(
        decoder_rnn_forward(features, captions, prep_bf16, vocab_size=V))
    assert out_bf16.shape == (B, T_CAP, V), out_bf16.shape
    assert jnp.allclose(out_bf16, ref, atol=5e-2, rtol=5e-2), "bf16 mismatch vs reference"

    print("KERNEL_OK")
</pallas_src>

<mosaic_0001>
module attributes {stable_mosaic.version = 11 : i64} {
  func.func @_dense_kernel(%arg0: i32, %arg1: i32, %arg2: memref<64x128xf32, #tpu.memory_space<vmem>>, %arg3: memref<128x512xf32, #tpu.memory_space<vmem>>, %arg4: memref<1x512xf32, #tpu.memory_space<vmem>>, %arg5: memref<64x512xf32, #tpu.memory_space<vmem>>) attributes {dimension_semantics = [#tpu.dimension_semantics<parallel>, #tpu.dimension_semantics<parallel>], iteration_bounds = array<i64: 1, 1>, scalar_prefetch = 0 : i64, scratch_operands = 0 : i64, tpu.core_type = #tpu.core_type<tc>, window_params = [{transform_indices = @transform_0, window_bounds = array<i64: 64, 128>}, {transform_indices = @transform_1, window_bounds = array<i64: 128, 512>}, {transform_indices = @transform_2, window_bounds = array<i64: 1, 512>}, {transform_indices = @transform_3, window_bounds = array<i64: 64, 512>}]} {
    %c0 = arith.constant 0 : index
    %c0_0 = arith.constant 0 : index
    %0 = vector.load %arg2[%c0, %c0_0] : memref<64x128xf32, #tpu.memory_space<vmem>>, vector<64x128xf32>
    %c0_1 = arith.constant 0 : index
    %c0_2 = arith.constant 0 : index
    %1 = vector.load %arg3[%c0_1, %c0_2] : memref<128x512xf32, #tpu.memory_space<vmem>>, vector<128x512xf32>
    %cst = arith.constant dense<0.000000e+00> : vector<64x512xf32>
    %2 = tpu.matmul %0, %1, %cst {dimension_numbers = #tpu.dot_dimension_numbers<[1], [0], [0], [1], [0, 0, 1, 1], [], []>} : vector<64x128xf32>, vector<128x512xf32>, vector<64x512xf32> -> vector<64x512xf32>
    %c0_3 = arith.constant 0 : index
    %c0_4 = arith.constant 0 : index
    %3 = vector.load %arg4[%c0_3, %c0_4] : memref<1x512xf32, #tpu.memory_space<vmem>>, vector<1x512xf32>
    %4 = vector.broadcast %3 : vector<1x512xf32> to vector<64x512xf32>
    %5 = arith.addf %2, %4 : vector<64x512xf32>
    %c0_5 = arith.constant 0 : index
    %c0_6 = arith.constant 0 : index
    %6 = vector.load %arg5[%c0_5, %c0_6] : memref<64x512xf32, #tpu.memory_space<vmem>>, vector<64x512xf32>
    tpu.vector_store %arg5[%c0_5, %c0_6], %5 {strides = array<i32>} : memref<64x512xf32, #tpu.memory_space<vmem>>, vector<64x512xf32>,
    return
  }
  func.func @transform_0(%arg0: i32, %arg1: i32) -> (i32, i32) {
    %c0_i32 = arith.constant 0 : i32
    %c0_i32_0 = arith.constant 0 : i32
    return %arg1, %c0_i32 : i32, i32
  }
  func.func @transform_1(%arg0: i32, %arg1: i32) -> (i32, i32) {
    %c0_i32 = arith.constant 0 : i32
    %c0_i32_0 = arith.constant 0 : i32
    return %c0_i32, %arg0 : i32, i32
  }
  func.func @transform_2(%arg0: i32, %arg1: i32) -> (i32, i32) {
    %c0_i32 = arith.constant 0 : i32
    %c0_i32_0 = arith.constant 0 : i32
    return %c0_i32, %arg0 : i32, i32
  }
  func.func @transform_3(%arg0: i32, %arg1: i32) -> (i32, i32) {
    %c0_i32 = arith.constant 0 : i32
    return %arg1, %arg0 : i32, i32
  }
}

module attributes {stable_mosaic.version = 11 : i64} {
  func.func @_dense_kernel(%arg0: i32, %arg1: i32, %arg2: memref<64x32xf32, #tpu.memory_space<vmem>>, %arg3: memref<32x512xf32, #tpu.memory_space<vmem>>, %arg4: memref<1x512xf32, #tpu.memory_space<vmem>>, %arg5: memref<64x512xf32, #tpu.memory_space<vmem>>) attributes {dimension_semantics = [#tpu.dimension_semantics<parallel>, #tpu.dimension_semantics<parallel>], iteration_bounds = array<i64: 1, 1>, scalar_prefetch = 0 : i64, scratch_operands = 0 : i64, tpu.core_type = #tpu.core_type<tc>, window_params = [{transform_indices = @transform_0, window_bounds = array<i64: 64, 32>}, {transform_indices = @transform_1, window_bounds = array<i64: 32, 512>}, {transform_indices = @transform_2, window_bounds = array<i64: 1, 512>}, {transform_indices = @transform_3, window_bounds = array<i64: 64, 512>}]} {
    %c0 = arith.constant 0 : index
    %c0_0 = arith.constant 0 : index
    %0 = vector.load %arg2[%c0, %c0_0] : memref<64x32xf32, #tpu.memory_space<vmem>>, vector<64x32xf32>
    %c0_1 = arith.constant 0 : index
    %c0_2 = arith.constant 0 : index
    %1 = vector.load %arg3[%c0_1, %c0_2] : memref<32x512xf32, #tpu.memory_space<vmem>>, vector<32x512xf32>
    %cst = arith.constant dense<0.000000e+00> : vector<64x512xf32>
    %2 = tpu.matmul %0, %1, %cst {dimension_numbers = #tpu.dot_dimension_numbers<[1], [0], [0], [1], [0, 0, 1, 1], [], []>} : vector<64x32xf32>, vector<32x512xf32>, vector<64x512xf32> -> vector<64x512xf32>
    %c0_3 = arith.constant 0 : index
    %c0_4 = arith.constant 0 : index
    %3 = vector.load %arg4[%c0_3, %c0_4] : memref<1x512xf32, #tpu.memory_space<vmem>>, vector<1x512xf32>
    %4 = vector.broadcast %3 : vector<1x512xf32> to vector<64x512xf32>
    %5 = arith.addf %2, %4 : vector<64x512xf32>
    %c0_5 = arith.constant 0 : index
    %c0_6 = arith.constant 0 : index
    %6 = vector.load %arg5[%c0_5, %c0_6] : memref<64x512xf32, #tpu.memory_space<vmem>>, vector<64x512xf32>
    tpu.vector_store %arg5[%c0_5, %c0_6], %5 {strides = array<i32>} : memref<64x512xf32, #tpu.memory_space<vmem>>, vector<64x512xf32>,
    return
  }
  func.func @transform_0(%arg0: i32, %arg1: i32) -> (i32, i32) {
    %c0_i32 = arith.constant 0 : i32
    %c0_i32_0 = arith.constant 0 : i32
    return %arg1, %c0_i32 : i32, i32
  }
  func.func @transform_1(%arg0: i32, %arg1: i32) -> (i32, i32) {
    %c0_i32 = arith.constant 0 : i32
    %c0_i32_0 = arith.constant 0 : i32
    return %c0_i32, %arg0 : i32, i32
  }
  func.func @transform_2(%arg0: i32, %arg1: i32) -> (i32, i32) {
    %c0_i32 = arith.constant 0 : i32
    %c0_i32_0 = arith.constant 0 : i32
    return %c0_i32, %arg0 : i32, i32
  }
  func.func @transform_3(%arg0: i32, %arg1: i32) -> (i32, i32) {
    %c0_i32 = arith.constant 0 : i32
    return %arg1, %arg0 : i32, i32
  }
}

module attributes {stable_mosaic.version = 11 : i64} {
  func.func @_lstm_recurrence_kernel(%arg0: i32, %arg1: memref<8x8x512xf32, #tpu.memory_space<vmem>>, %arg2: memref<128x512xf32, #tpu.memory_space<vmem>>, %arg3: memref<8x8x128xf32, #tpu.memory_space<vmem>>, %arg4: memref<8x128xf32, #tpu.memory_space<vmem>>, %arg5: memref<8x128xf32, #tpu.memory_space<vmem>>) attributes {dimension_semantics = [#tpu.dimension_semantics<arbitrary>], iteration_bounds = array<i64: 1>, scalar_prefetch = 0 : i64, scratch_operands = 2 : i64, tpu.core_type = #tpu.core_type<tc>, window_params = [{transform_indices = @transform_0, window_bounds = array<i64: 8, 8, 512>}, {pipeline_mode = #tpu.pipeline_mode<synchronous>, transform_indices = @transform_1, window_bounds = array<i64: 128, 512>}, {transform_indices = @transform_2, window_bounds = array<i64: 8, 8, 128>}]} {
    %c0_i32 = arith.constant 0 : i32
    %0 = arith.cmpi eq, %arg0, %c0_i32 : i32
    %1 = arith.extui %0 : i1 to i32
    %c0_i32_0 = arith.constant 0 : i32
    %2 = arith.cmpi ne, %1, %c0_i32_0 : i32
    scf.if %2 {
      %cst_144 = arith.constant 0.000000e+00 : f32
      %315 = vector.broadcast %cst_144 : f32 to vector<8x128xf32>
      %c0_145 = arith.constant 0 : index
      %c0_146 = arith.constant 0 : index
      %316 = vector.load %arg4[%c0_145, %c0_146] : memref<8x128xf32, #tpu.memory_space<vmem>>, vector<8x128xf32>
      tpu.vector_store %arg4[%c0_145, %c0_146], %315 {strides = array<i32>} : memref<8x128xf32, #tpu.memory_space<vmem>>, vector<8x128xf32>,
      %cst_147 = arith.constant 0.000000e+00 : f32
      %317 = vector.broadcast %cst_147 : f32 to vector<8x128xf32>
      %c0_148 = arith.constant 0 : index
      %c0_149 = arith.constant 0 : index
      %318 = vector.load %arg5[%c0_148, %c0_149] : memref<8x128xf32, #tpu.memory_space<vmem>>, vector<8x128xf32>
      tpu.vector_store %arg5[%c0_148, %c0_149], %317 {strides = array<i32>} : memref<8x128xf32, #tpu.memory_space<vmem>>, vector<8x128xf32>,
    } else {
    }
    %c0_i32_1 = arith.constant 0 : i32
    %c0 = arith.constant 0 : index
    %c0_2 = arith.constant 0 : index
    %3 = vector.load %arg4[%c0, %c0_2] : memref<8x128xf32, #tpu.memory_space<vmem>>, vector<8x128xf32>
    %c0_3 = arith.constant 0 : index
    %c0_4 = arith.constant 0 : index
    %4 = vector.load %arg5[%c0_3, %c0_4] : memref<8x128xf32, #tpu.memory_space<vmem>>, vector<8x128xf32>
    %5 = arith.index_cast %c0_i32_1 : i32 to index
    %c0_5 = arith.constant 0 : index
    %c0_6 = arith.constant 0 : index
    %6 = vector.load %arg1[%5, %c0_5, %c0_6] : memref<8x8x512xf32, #tpu.memory_space<vmem>>, vector<1x8x512xf32>
    %7 = vector.shape_cast %6 : vector<1x8x512xf32> to vector<8x512xf32>
    %c0_7 = arith.constant 0 : index
    %c0_8 = arith.constant 0 : index
    %8 = vector.load %arg2[%c0_7, %c0_8] : memref<128x512xf32, #tpu.memory_space<vmem>>, vector<128x512xf32>
    %cst = arith.constant dense<0.000000e+00> : vector<8x512xf32>
    %9 = tpu.matmul %3, %8, %cst {dimension_numbers = #tpu.dot_dimension_numbers<[1], [0], [0], [1], [0, 0, 1, 1], [], []>} : vector<8x128xf32>, vector<128x512xf32>, vector<8x512xf32> -> vector<8x512xf32>
    %10 = arith.addf %7, %9 : vector<8x512xf32>
    %11 = vector.extract_strided_slice %10 {offsets = [0, 0], sizes = [8, 128], strides = [1, 1]} : vector<8x512xf32> to vector<8x128xf32>
    %12 = arith.negf %11 : vector<8x128xf32>
    %13 = math.exp %12 : vector<8x128xf32>
    %cst_9 = arith.constant 1.000000e+00 : f32
    %14 = vector.broadcast %cst_9 : f32 to vector<8x128xf32>
    %15 = arith.addf %14, %13 : vector<8x128xf32>
    %16 = arith.divf %14, %15 : vector<8x128xf32>
    %17 = vector.extract_strided_slice %10 {offsets = [0, 128], sizes = [8, 128], strides = [1, 1]} : vector<8x512xf32> to vector<8x128xf32>
    %18 = arith.negf %17 : vector<8x128xf32>
    %19 = math.exp %18 : vector<8x128xf32>
    %cst_10 = arith.constant 1.000000e+00 : f32
    %20 = vector.broadcast %cst_10 : f32 to vector<8x128xf32>
    %21 = arith.addf %20, %19 : vector<8x128xf32>
    %22 = arith.divf %20, %21 : vector<8x128xf32>
    %23 = vector.extract_strided_slice %10 {offsets = [0, 256], sizes = [8, 128], strides = [1, 1]} : vector<8x512xf32> to vector<8x128xf32>
    %24 = math.tanh %23 : vector<8x128xf32>
    %25 = vector.extract_strided_slice %10 {offsets = [0, 384], sizes = [8, 128], strides = [1, 1]} : vector<8x512xf32> to vector<8x128xf32>
    %26 = arith.negf %25 : vector<8x128xf32>
    %27 = math.exp %26 : vector<8x128xf32>
    %cst_11 = arith.constant 1.000000e+00 : f32
    %28 = vector.broadcast %cst_11 : f32 to vector<8x128xf32>
    %29 = arith.addf %28, %27 : vector<8x128xf32>
    %30 = arith.divf %28, %29 : vector<8x128xf32>
    %31 = arith.mulf %22, %4 : vector<8x128xf32>
    %32 = arith.mulf %16, %24 : vector<8x128xf32>
    %33 = arith.addf %31, %32 : vector<8x128xf32>
    %34 = math.tanh %33 : vector<8x128xf32>
    %35 = arith.mulf %30, %34 : vector<8x128xf32>
    %c0_12 = arith.constant 0 : index
    %c0_13 = arith.constant 0 : index
    %36 = vector.load %arg4[%c0_12, %c0_13] : memref<8x128xf32, #tpu.memory_space<vmem>>, vector<8x128xf32>
    tpu.vector_store %arg4[%c0_12, %c0_13], %35 {strides = array<i32>} : memref<8x128xf32, #tpu.memory_space<vmem>>, vector<8x128xf32>,
    %c0_14 = arith.constant 0 : index
    %c0_15 = arith.constant 0 : index
    %37 = vector.load %arg5[%c0_14, %c0_15] : memref<8x128xf32, #tpu.memory_space<vmem>>, vector<8x128xf32>
    tpu.vector_store %arg5[%c0_14, %c0_15], %33 {strides = array<i32>} : memref<8x128xf32, #tpu.memory_space<vmem>>, vector<8x128xf32>,
    %38 = arith.index_cast %c0_i32_1 : i32 to index
    %c0_16 = arith.constant 0 : index
    %c0_17 = arith.constant 0 : index
    %39 = vector.load %arg3[%38, %c0_16, %c0_17] : memref<8x8x128xf32, #tpu.memory_space<vmem>>, vector<1x8x128xf32>
    %40 = vector.shape_cast %39 : vector<1x8x128xf32> to vector<8x128xf32>
    %41 = vector.shape_cast %35 : vector<8x128xf32> to vector<1x8x128xf32>
    tpu.vector_store %arg3[%38, %c0_16, %c0_17], %41 {strides = array<i32>} : memref<8x8x128xf32, #tpu.memory_space<vmem>>, vector<1x8x128xf32>,
    %c1_i32 = arith.constant 1 : i32
    %c0_18 = arith.constant 0 : index
    %c0_19 = arith.constant 0 : index
    %42 = vector.load %arg4[%c0_18, %c0_19] : memref<8x128xf32, #tpu.memory_space<vmem>>, vector<8x128xf32>
    %c0_20 = arith.constant 0 : index
    %c0_21 = arith.constant 0 : index
    %43 = vector.load %arg5[%c0_20, %c0_21] : memref<8x128xf32, #tpu.memory_space<vmem>>, vector<8x128xf32>
    %44 = arith.index_cast %c1_i32 : i32 to index
    %c0_22 = arith.constant 0 : index
    %c0_23 = arith.constant 0 : index
    %45 = vector.load %arg1[%44, %c0_22, %c0_23] : memref<8x8x512xf32, #tpu.memory_space<vmem>>, vector<1x8x512xf32>
    %46 = vector.shape_cast %45 : vector<1x8x512xf32> to vector<8x512xf32>
    %c0_24 = arith.constant 0 : index
    %c0_25 = arith.constant 0 : index
    %47 = vector.load %arg2[%c0_24, %c0_25] : memref<128x512xf32, #tpu.memory_space<vmem>>, vector<128x512xf32>
    %cst_26 = arith.constant dense<0.000000e+00> : vector<8x512xf32>
    %48 = tpu.matmul %42, %47, %cst_26 {dimension_numbers = #tpu.dot_dimension_numbers<[1], [0], [0], [1], [0, 0, 1, 1], [], []>} : vector<8x128xf32>, vector<128x512xf32>, vector<8x512xf32> -> vector<8x512xf32>
    %49 = arith.addf %46, %48 : vector<8x512xf32>
    %50 = vector.extract_strided_slice %49 {offsets = [0, 0], sizes = [8, 128], strides = [1, 1]} : vector<8x512xf32> to vector<8x128xf32>
    %51 = arith.negf %50 : vector<8x128xf32>
    %52 = math.exp %51 : vector<8x128xf32>
    %cst_27 = arith.constant 1.000000e+00 : f32
    %53 = vector.broadcast %cst_27 : f32 to vector<8x128xf32>
    %54 = arith.addf %53, %52 : vector<8x128xf32>
    %55 = arith.divf %53, %54 : vector<8x128xf32>
    %56 = vector.extract_strided_slice %49 {offsets = [0, 128], sizes = [8, 128], strides = [1, 1]} : vector<8x512xf32> to vector<8x128xf32>
    %57 = arith.negf %56 : vector<8x128xf32>
    %58 = math.exp %57 : vector<8x128xf32>
    %cst_28 = arith.constant 1.000000e+00 : f32
    %59 = vector.broadcast %cst_28 : f32 to vector<8x128xf32>
    %60 = arith.addf %59, %58 : vector<8x128xf32>
    %61 = arith.divf %59, %60 : vector<8x128xf32>
    %62 = vector.extract_strided_slice %49 {offsets = [0, 256], sizes = [8, 128], strides = [1, 1]} : vector<8x512xf32> to vector<8x128xf32>
    %63 = math.tanh %62 : vector<8x128xf32>
    %64 = vector.extract_strided_slice %49 {offsets = [0, 384], sizes = [8, 128], strides = [1, 1]} : vector<8x512xf32> to vector<8x128xf32>
    %65 = arith.negf %64 : vector<8x128xf32>
    %66 = math.exp %65 : vector<8x128xf32>
    %cst_29 = arith.constant 1.000000e+00 : f32
    %67 = vector.broadcast %cst_29 : f32 to vector<8x128xf32>
    %68 = arith.addf %67, %66 : vector<8x128xf32>
    %69 = arith.divf %67, %68 : vector<8x128xf32>
    %70 = arith.mulf %61, %43 : vector<8x128xf32>
    %71 = arith.mulf %55, %63 : vector<8x128xf32>
    %72 = arith.addf %70, %71 : vector<8x128xf32>
    %73 = math.tanh %72 : vector<8x128xf32>
    %74 = arith.mulf %69, %73 : vector<8x128xf32>
    %c0_30 = arith.constant 0 : index
    %c0_31 = arith.constant 0 : index
    %75 = vector.load %arg4[%c0_30, %c0_31] : memref<8x128xf32, #tpu.memory_space<vmem>>, vector<8x128xf32>
    tpu.vector_store %arg4[%c0_30, %c0_31], %74 {strides = array<i32>} : memref<8x128xf32, #tpu.memory_space<vmem>>, vector<8x128xf32>,
    %c0_32 = arith.constant 0 : index
    %c0_33 = arith.constant 0 : index
    %76 = vector.load %arg5[%c0_32, %c0_33] : memref<8x128xf32, #tpu.memory_space<vmem>>, vector<8x128xf32>
    tpu.vector_store %arg5[%c0_32, %c0_33], %72 {strides = array<i32>} : memref<8x128xf32, #tpu.memory_space<vmem>>, vector<8x128xf32>,
    %77 = arith.index_cast %c1_i32 : i32 to index
    %c0_34 = arith.constant 0 : index
    %c0_35 = arith.constant 0 : index
    %78 = vector.load %arg3[%77, %c0_34, %c0_35] : memref<8x8x128xf32, #tpu.memory_space<vmem>>, vector<1x8x128xf32>
    %79 = vector.shape_cast %78 : vector<1x8x128xf32> to vector<8x128xf32>
    %80 = vector.shape_cast %74 : vector<8x128xf32> to vector<1x8x128xf32>
    tpu.vector_store %arg3[%77, %c0_34, %c0_35], %80 {strides = array<i32>} : memref<8x8x128xf32, #tpu.memory_space<vmem>>, vector<1x8x128xf32>,
    %c2_i32 = arith.constant 2 : i32
    %c0_36 = arith.constant 0 : index
    %c0_37 = arith.constant 0 : index
    %81 = vector.load %arg4[%c0_36, %c0_37] : memref<8x128xf32, #tpu.memory_space<vmem>>, vector<8x128xf32>
    %c0_38 = arith.constant 0 : index
    %c0_39 = arith.constant 0 : index
    %82 = vector.load %arg5[%c0_38, %c0_39] : memref<8x128xf32, #tpu.memory_space<vmem>>, vector<8x128xf32>
    %83 = arith.index_cast %c2_i32 : i32 to index
    %c0_40 = arith.constant 0 : index
    %c0_41 = arith.constant 0 : index
    %84 = vector.load %arg1[%83, %c0_40, %c0_41] : memref<8x8x512xf32, #tpu.memory_space<vmem>>, vector<1x8x512xf32>
    %85 = vector.shape_cast %84 : vector<1x8x512xf32> to vector<8x512xf32>
    %c0_42 = arith.constant 0 : index
    %c0_43 = arith.constant 0 : index
    %86 = vector.load %arg2[%c0_42, %c0_43] : memref<128x512xf32, #tpu.memory_space<vmem>>, vector<128x512xf32>
    %cst_44 = arith.constant dense<0.000000e+00> : vector<8x512xf32>
    %87 = tpu.matmul %81, %86, %cst_44 {dimension_numbers = #tpu.dot_dimension_numbers<[1], [0], [0], [1], [0, 0, 1, 1], [], []>} : vector<8x128xf32>, vector<128x512xf32>, vector<8x512xf32> -> vector<8x512xf32>
    %88 = arith.addf %85, %87 : vector<8x512xf32>
    %89 = vector.extract_strided_slice %88 {offsets = [0, 0], sizes = [8, 128], strides = [1, 1]} : vector<8x512xf32> to vector<8x128xf32>
    %90 = arith.negf %89 : vector<8x128xf32>
    %91 = math.exp %90 : vector<8x128xf32>
    %cst_45 = arith.constant 1.000000e+00 : f32
    %92 = vector.broadcast %cst_45 : f32 to vector<8x128xf32>
    %93 = arith.addf %92, %91 : vector<8x128xf32>
    %94 = arith.divf %92, %93 : vector<8x128xf32>
    %95 = vector.extract_strided_slice %88 {offsets = [0, 128], sizes = [8, 128], strides = [1, 1]} : vector<8x512xf32> to vector<8x128xf32>
    %96 = arith.negf %95 : vector<8x128xf32>
    %97 = math.exp %96 : vector<8x128xf32>
    %cst_46 = arith.constant 1.000000e+00 : f32
    %98 = vector.broadcast %cst_46 : f32 to vector<8x128xf32>
    %99 = arith.addf %98, %97 : vector<8x128xf32>
    %100 = arith.divf %98, %99 : vector<8x128xf32>
    %101 = vector.extract_strided_slice %88 {offsets = [0, 256], sizes = [8, 128], strides = [1, 1]} : vector<8x512xf32> to vector<8x128xf32>
    %102 = math.tanh %101 : vector<8x128xf32>
    %103 = vector.extract_strided_slice %88 {offsets = [0, 384], sizes = [8, 128], strides = [1, 1]} : vector<8x512xf32> to vector<8x128xf32>
    %104 = arith.negf %103 : vector<8x128xf32>
    %105 = math.exp %104 : vector<8x128xf32>
    %cst_47 = arith.constant 1.000000e+00 : f32
    %106 = vector.broadcast %cst_47 : f32 to vector<8x128xf32>
    %107 = arith.addf %106, %105 : vector<8x128xf32>
    %108 = arith.divf %106, %107 : vector<8x128xf32>
    %109 = arith.mulf %100, %82 : vector<8x128xf32>
    %110 = arith.mulf %94, %102 : vector<8x128xf32>
    %111 = arith.addf %109, %110 : vector<8x128xf32>
    %112 = math.tanh %111 : vector<8x128xf32>
    %113 = arith.mulf %108, %112 : vector<8x128xf32>
    %c0_48 = arith.constant 0 : index
    %c0_49 = arith.constant 0 : index
    %114 = vector.load %arg4[%c0_48, %c0_49] : memref<8x128xf32, #tpu.memory_space<vmem>>, vector<8x128xf32>
    tpu.vector_store %arg4[%c0_48, %c0_49], %113 {strides = array<i32>} : memref<8x128xf32, #tpu.memory_space<vmem>>, vector<8x128xf32>,
    %c0_50 = arith.constant 0 : index
    %c0_51 = arith.constant 0 : index
    %115 = vector.load %arg5[%c0_50, %c0_51] : memref<8x128xf32, #tpu.memory_space<vmem>>, vector<8x128xf32>
    tpu.vector_store %arg5[%c0_50, %c0_51], %111 {strides = array<i32>} : memref<8x128xf32, #tpu.memory_space<vmem>>, vector<8x128xf32>,
    %116 = arith.index_cast %c2_i32 : i32 to index
    %c0_52 = arith.constant 0 : index
    %c0_53 = arith.constant 0 : index
    %117 = vector.load %arg3[%116, %c0_52, %c0_53] : memref<8x8x128xf32, #tpu.memory_space<vmem>>, vector<1x8x128xf32>
    %118 = vector.shape_cast %117 : vector<1x8x128xf32> to vector<8x128xf32>
    %119 = vector.shape_cast %113 : vector<8x128xf32> to vector<1x8x128xf32>
    tpu.vector_store %arg3[%116, %c0_52, %c0_53], %119 {strides = array<i32>} : memref<8x8x128xf32, #tpu.memory_space<vmem>>, vector<1x8x128xf32>,
    %c3_i32 = arith.constant 3 : i32
    %c0_54 = arith.constant 0 : index
    %c0_55 = arith.constant 0 : index
    %120 = vector.load %arg4[%c0_54, %c0_55] : memref<8x128xf32, #tpu.memory_space<vmem>>, vector<8x128xf32>
    %c0_56 = arith.constant 0 : index
    %c0_57 = arith.constant 0 : index
    %121 = vector.load %arg5[%c0_56, %c0_57] : memref<8x128xf32, #tpu.memory_space<vmem>>, vector<8x128xf32>
    %122 = arith.index_cast %c3_i32 : i32 to index
    %c0_58 = arith.constant 0 : index
    %c0_59 = arith.constant 0 : index
    %123 = vector.load %arg1[%122, %c0_58, %c0_59] : memref<8x8x512xf32, #tpu.memory_space<vmem>>, vector<1x8x512xf32>
    %124 = vector.shape_cast %123 : vector<1x8x512xf32> to vector<8x512xf32>
    %c0_60 = arith.constant 0 : index
    %c0_61 = arith.constant 0 : index
    %125 = vector.load %arg2[%c0_60, %c0_61] : memref<128x512xf32, #tpu.memory_space<vmem>>, vector<128x512xf32>
    %cst_62 = arith.constant dense<0.000000e+00> : vector<8x512xf32>
    %126 = tpu.matmul %120, %125, %cst_62 {dimension_numbers = #tpu.dot_dimension_numbers<[1], [0], [0], [1], [0, 0, 1, 1], [], []>} : vector<8x128xf32>, vector<128x512xf32>, vector<8x512xf32> -> vector<8x512xf32>
    %127 = arith.addf %124, %126 : vector<8x512xf32>
    %128 = vector.extract_strided_slice %127 {offsets = [0, 0], sizes = [8, 128], strides = [1, 1]} : vector<8x512xf32> to vector<8x128xf32>
    %129 = arith.negf %128 : vector<8x128xf32>
    %130 = math.exp %129 : vector<8x128xf32>
    %cst_63 = arith.constant 1.000000e+00 : f32
    %131 = vector.broadcast %cst_63 : f32 to vector<8x128xf32>
    %132 = arith.addf %131, %130 : vector<8x128xf32>
    %133 = arith.divf %131, %132 : vector<8x128xf32>
    %134 = vector.extract_strided_slice %127 {offsets = [0, 128], sizes = [8, 128], strides = [1, 1]} : vector<8x512xf32> to vector<8x128xf32>
    %135 = arith.negf %134 : vector<8x128xf32>
    %136 = math.exp %135 : vector<8x128xf32>
    %cst_64 = arith.constant 1.000000e+00 : f32
    %137 = vector.broadcast %cst_64 : f32 to vector<8x128xf32>
    %138 = arith.addf %137, %136 : vector<8x128xf32>
    %139 = arith.divf %137, %138 : vector<8x128xf32>
    %140 = vector.extract_strided_slice %127 {offsets = [0, 256], sizes = [8, 128], strides = [1, 1]} : vector<8x512xf32> to vector<8x128xf32>
    %141 = math.tanh %140 : vector<8x128xf32>
    %142 = vector.extract_strided_slice %127 {offsets = [0, 384], sizes = [8, 128], strides = [1, 1]} : vector<8x512xf32> to vector<8x128xf32>
    %143 = arith.negf %142 : vector<8x128xf32>
    %144 = math.exp %143 : vector<8x128xf32>
    %cst_65 = arith.constant 1.000000e+00 : f32
    %145 = vector.broadcast %cst_65 : f32 to vector<8x128xf32>
    %146 = arith.addf %145, %144 : vector<8x128xf32>
    %147 = arith.divf %145, %146 : vector<8x128xf32>
    %148 = arith.mulf %139, %121 : vector<8x128xf32>
    %149 = arith.mulf %133, %141 : vector<8x128xf32>
    %150 = arith.addf %148, %149 : vector<8x128xf32>
    %151 = math.tanh %150 : vector<8x128xf32>
    %152 = arith.mulf %147, %151 : vector<8x128xf32>
    %c0_66 = arith.constant 0 : index
    %c0_67 = arith.constant 0 : index
    %153 = vector.load %arg4[%c0_66, %c0_67] : memref<8x128xf32, #tpu.memory_space<vmem>>, vector<8x128xf32>
    tpu.vector_store %arg4[%c0_66, %c0_67], %152 {strides = array<i32>} : memref<8x128xf32, #tpu.memory_space<vmem>>, vector<8x128xf32>,
    %c0_68 = arith.constant 0 : index
    %c0_69 = arith.constant 0 : index
    %154 = vector.load %arg5[%c0_68, %c0_69] : memref<8x128xf32, #tpu.memory_space<vmem>>, vector<8x128xf32>
    tpu.vector_store %arg5[%c0_68, %c0_69], %150 {strides = array<i32>} : memref<8x128xf32, #tpu.memory_space<vmem>>, vector<8x128xf32>,
    %155 = arith.index_cast %c3_i32 : i32 to index
    %c0_70 = arith.constant 0 : index
    %c0_71 = arith.constant 0 : index
    %156 = vector.load %arg3[%155, %c0_70, %c0_71] : memref<8x8x128xf32, #tpu.memory_space<vmem>>, vector<1x8x128xf32>
    %157 = vector.shape_cast %156 : vector<1x8x128xf32> to vector<8x128xf32>
    %158 = vector.shape_cast %152 : vector<8x128xf32> to vector<1x8x128xf32>
    tpu.vector_store %arg3[%155, %c0_70, %c0_71], %158 {strides = array<i32>} : memref<8x8x128xf32, #tpu.memory_space<vmem>>, vector<1x8x128xf32>,
    %c4_i32 = arith.constant 4 : i32
    %c0_72 = arith.constant 0 : index
    %c0_73 = arith.constant 0 : index
    %159 = vector.load %arg4[%c0_72, %c0_73] : memref<8x128xf32, #tpu.memory_space<vmem>>, vector<8x128xf32>
    %c0_74 = arith.constant 0 : index
    %c0_75 = arith.constant 0 : index
    %160 = vector.load %arg5[%c0_74, %c0_75] : memref<8x128xf32, #tpu.memory_space<vmem>>, vector<8x128xf32>
    %161 = arith.index_cast %c4_i32 : i32 to index
    %c0_76 = arith.constant 0 : index
    %c0_77 = arith.constant 0 : index
    %162 = vector.load %arg1[%161, %c0_76, %c0_77] : memref<8x8x512xf32, #tpu.memory_space<vmem>>, vector<1x8x512xf32>
    %163 = vector.shape_cast %162 : vector<1x8x512xf32> to vector<8x512xf32>
    %c0_78 = arith.constant 0 : index
    %c0_79 = arith.constant 0 : index
    %164 = vector.load %arg2[%c0_78, %c0_79] : memref<128x512xf32, #tpu.memory_space<vmem>>, vector<128x512xf32>
    %cst_80 = arith.constant dense<0.000000e+00> : vector<8x512xf32>
    %165 = tpu.matmul %159, %164, %cst_80 {dimension_numbers = #tpu.dot_dimension_numbers<[1], [0], [0], [1], [0, 0, 1, 1], [], []>} : vector<8x128xf32>, vector<128x512xf32>, vector<8x512xf32> -> vector<8x512xf32>
    %166 = arith.addf %163, %165 : vector<8x512xf32>
    %167 = vector.extract_strided_slice %166 {offsets = [0, 0], sizes = [8, 128], strides = [1, 1]} : vector<8x512xf32> to vector<8x128xf32>
    %168 = arith.negf %167 : vector<8x128xf32>
    %169 = math.exp %168 : vector<8x128xf32>
    %cst_81 = arith.constant 1.000000e+00 : f32
    %170 = vector.broadcast %cst_81 : f32 to vector<8x128xf32>
    %171 = arith.addf %170, %169 : vector<8x128xf32>
    %172 = arith.divf %170, %171 : vector<8x128xf32>
    %173 = vector.extract_strided_slice %166 {offsets = [0, 128], sizes = [8, 128], strides = [1, 1]} : vector<8x512xf32> to vector<8x128xf32>
    %174 = arith.negf %173 : vector<8x128xf32>
    %175 = math.exp %174 : vector<8x128xf32>
    %cst_82 = arith.constant 1.000000e+00 : f32
    %176 = vector.broadcast %cst_82 : f32 to vector<8x128xf32>
    %177 = arith.addf %176, %175 : vector<8x128xf32>
    %178 = arith.divf %176, %177 : vector<8x128xf32>
    %179 = vector.extract_strided_slice %166 {offsets = [0, 256], sizes = [8, 128], strides = [1, 1]} : vector<8x512xf32> to vector<8x128xf32>
    %180 = math.tanh %179 : vector<8x128xf32>
    %181 = vector.extract_strided_slice %166 {offsets = [0, 384], sizes = [8, 128], strides = [1, 1]} : vector<8x512xf32> to vector<8x128xf32>
    %182 = arith.negf %181 : vector<8x128xf32>
    %183 = math.exp %182 : vector<8x128xf32>
    %cst_83 = arith.constant 1.000000e+00 : f32
    %184 = vector.broadcast %cst_83 : f32 to vector<8x128xf32>
    %185 = arith.addf %184, %183 : vector<8x128xf32>
    %186 = arith.divf %184, %185 : vector<8x128xf32>
    %187 = arith.mulf %178, %160 : vector<8x128xf32>
    %188 = arith.mulf %172, %180 : vector<8x128xf32>
    %189 = arith.addf %187, %188 : vector<8x128xf32>
    %190 = math.tanh %189 : vector<8x128xf32>
    %191 = arith.mulf %186, %190 : vector<8x128xf32>
    %c0_84 = arith.constant 0 : index
    %c0_85 = arith.constant 0 : index
    %192 = vector.load %arg4[%c0_84, %c0_85] : memref<8x128xf32, #tpu.memory_space<vmem>>, vector<8x128xf32>
    tpu.vector_store %arg4[%c0_84, %c0_85], %191 {strides = array<i32>} : memref<8x128xf32, #tpu.memory_space<vmem>>, vector<8x128xf32>,
    %c0_86 = arith.constant 0 : index
    %c0_87 = arith.constant 0 : index
    %193 = vector.load %arg5[%c0_86, %c0_87] : memref<8x128xf32, #tpu.memory_space<vmem>>, vector<8x128xf32>
    tpu.vector_store %arg5[%c0_86, %c0_87], %189 {strides = array<i32>} : memref<8x128xf32, #tpu.memory_space<vmem>>, vector<8x128xf32>,
    %194 = arith.index_cast %c4_i32 : i32 to index
    %c0_88 = arith.constant 0 : index
    %c0_89 = arith.constant 0 : index
    %195 = vector.load %arg3[%194, %c0_88, %c0_89] : memref<8x8x128xf32, #tpu.memory_space<vmem>>, vector<1x8x128xf32>
    %196 = vector.shape_cast %195 : vector<1x8x128xf32> to vector<8x128xf32>
    %197 = vector.shape_cast %191 : vector<8x128xf32> to vector<1x8x128xf32>
    tpu.vector_store %arg3[%194, %c0_88, %c0_89], %197 {strides = array<i32>} : memref<8x8x128xf32, #tpu.memory_space<vmem>>, vector<1x8x128xf32>,
    %c5_i32 = arith.constant 5 : i32
    %c0_90 = arith.constant 0 : index
    %c0_91 = arith.constant 0 : index
    %198 = vector.load %arg4[%c0_90, %c0_91] : memref<8x128xf32, #tpu.memory_space<vmem>>, vector<8x128xf32>
    %c0_92 = arith.constant 0 : index
    %c0_93 = arith.constant 0 : index
    %199 = vector.load %arg5[%c0_92, %c0_93] : memref<8x128xf32, #tpu.memory_space<vmem>>, vector<8x128xf32>
    %200 = arith.index_cast %c5_i32 : i32 to index
    %c0_94 = arith.constant 0 : index
    %c0_95 = arith.constant 0 : index
    %201 = vector.load %arg1[%200, %c0_94, %c0_95] : memref<8x8x512xf32, #tpu.memory_space<vmem>>, vector<1x8x512xf32>
    %202 = vector.shape_cast %201 : vector<1x8x512xf32> to vector<8x512xf32>
    %c0_96 = arith.constant 0 : index
    %c0_97 = arith.constant 0 : index
    %203 = vector.load %arg2[%c0_96, %c0_97] : memref<128x512xf32, #tpu.memory_space<vmem>>, vector<128x512xf32>
    %cst_98 = arith.constant dense<0.000000e+00> : vector<8x512xf32>
    %204 = tpu.matmul %198, %203, %cst_98 {dimension_numbers = #tpu.dot_dimension_numbers<[1], [0], [0], [1], [0, 0, 1, 1], [], []>} : vector<8x128xf32>, vector<128x512xf32>, vector<8x512xf32> -> vector<8x512xf32>
    %205 = arith.addf %202, %204 : vector<8x512xf32>
    %206 = vector.extract_strided_slice %205 {offsets = [0, 0], sizes = [8, 128], strides = [1, 1]} : vector<8x512xf32> to vector<8x128xf32>
    %207 = arith.negf %206 : vector<8x128xf32>
    %208 = math.exp %207 : vector<8x128xf32>
    %cst_99 = arith.constant 1.000000e+00 : f32
    %209 = vector.broadcast %cst_99 : f32 to vector<8x128xf32>
    %210 = arith.addf %209, %208 : vector<8x128xf32>
    %211 = arith.divf %209, %210 : vector<8x128xf32>
    %212 = vector.extract_strided_slice %205 {offsets = [0, 128], sizes = [8, 128], strides = [1, 1]} : vector<8x512xf32> to vector<8x128xf32>
    %213 = arith.negf %212 : vector<8x128xf32>
    %214 = math.exp %213 : vector<8x128xf32>
    %cst_100 = arith.constant 1.000000e+00 : f32
    %215 = vector.broadcast %cst_100 : f32 to vector<8x128xf32>
    %216 = arith.addf %215, %214 : vector<8x128xf32>
    %217 = arith.divf %215, %216 : vector<8x128xf32>
    %218 = vector.extract_strided_slice %205 {offsets = [0, 256], sizes = [8, 128], strides = [1, 1]} : vector<8x512xf32> to vector<8x128xf32>
    %219 = math.tanh %218 : vector<8x128xf32>
    %220 = vector.extract_strided_slice %205 {offsets = [0, 384], sizes = [8, 128], strides = [1, 1]} : vector<8x512xf32> to vector<8x128xf32>
    %221 = arith.negf %220 : vector<8x128xf32>
    %222 = math.exp %221 : vector<8x128xf32>
    %cst_101 = arith.constant 1.000000e+00 : f32
    %223 = vector.broadcast %cst_101 : f32 to vector<8x128xf32>
    %224 = arith.addf %223, %222 : vector<8x128xf32>
    %225 = arith.divf %223, %224 : vector<8x128xf32>
    %226 = arith.mulf %217, %199 : vector<8x128xf32>
    %227 = arith.mulf %211, %219 : vector<8x128xf32>
    %228 = arith.addf %226, %227 : vector<8x128xf32>
    %229 = math.tanh %228 : vector<8x128xf32>
    %230 = arith.mulf %225, %229 : vector<8x128xf32>
    %c0_102 = arith.constant 0 : index
    %c0_103 = arith.constant 0 : index
    %231 = vector.load %arg4[%c0_102, %c0_103] : memref<8x128xf32, #tpu.memory_space<vmem>>, vector<8x128xf32>
    tpu.vector_store %arg4[%c0_102, %c0_103], %230 {strides = array<i32>} : memref<8x128xf32, #tpu.memory_space<vmem>>, vector<8x128xf32>,
    %c0_104 = arith.constant 0 : index
    %c0_105 = arith.constant 0 : index
    %232 = vector.load %arg5[%c0_104, %c0_105] : memref<8x128xf32, #tpu.memory_space<vmem>>, vector<8x128xf32>
    tpu.vector_store %arg5[%c0_104, %c0_105], %228 {strides = array<i32>} : memref<8x128xf32, #tpu.memory_space<vmem>>, vector<8x128xf32>,
    %233 = arith.index_cast %c5_i32 : i32 to index
    %c0_106 = arith.constant 0 : index
    %c0_107 = arith.constant 0 : index
    %234 = vector.load %arg3[%233, %c0_106, %c0_107] : memref<8x8x128xf32, #tpu.memory_space<vmem>>, vector<1x8x128xf32>
    %235 = vector.shape_cast %234 : vector<1x8x128xf32> to vector<8x128xf32>
    %236 = vector.shape_cast %230 : vector<8x128xf32> to vector<1x8x128xf32>
    tpu.vector_store %arg3[%233, %c0_106, %c0_107], %236 {strides = array<i32>} : memref<8x8x128xf32, #tpu.memory_space<vmem>>, vector<1x8x128xf32>,
    %c6_i32 = arith.constant 6 : i32
    %c0_108 = arith.constant 0 : index
    %c0_109 = arith.constant 0 : index
    %237 = vector.load %arg4[%c0_108, %c0_109] : memref<8x128xf32, #tpu.memory_space<vmem>>, vector<8x128xf32>
    %c0_110 = arith.constant 0 : index
    %c0_111 = arith.constant 0 : index
    %238 = vector.load %arg5[%c0_110, %c0_111] : memref<8x128xf32, #tpu.memory_space<vmem>>, vector<8x128xf32>
    %239 = arith.index_cast %c6_i32 : i32 to index
    %c0_112 = arith.constant 0 : index
    %c0_113 = arith.constant 0 : index
    %240 = vector.load %arg1[%239, %c0_112, %c0_113] : memref<8x8x512xf32, #tpu.memory_space<vmem>>, vector<1x8x512xf32>
    %241 = vector.shape_cast %240 : vector<1x8x512xf32> to vector<8x512xf32>
    %c0_114 = arith.constant 0 : index
    %c0_115 = arith.constant 0 : index
    %242 = vector.load %arg2[%c0_114, %c0_115] : memref<128x512xf32, #tpu.memory_space<vmem>>, vector<128x512xf32>
    %cst_116 = arith.constant dense<0.000000e+00> : vector<8x512xf32>
    %243 = tpu.matmul %237, %242, %cst_116 {dimension_numbers = #tpu.dot_dimension_numbers<[1], [0], [0], [1], [0, 0, 1, 1], [], []>} : vector<8x128xf32>, vector<128x512xf32>, vector<8x512xf32> -> vector<8x512xf32>
    %244 = arith.addf %241, %243 : vector<8x512xf32>
    %245 = vector.extract_strided_slice %244 {offsets = [0, 0], sizes = [8, 128], strides = [1, 1]} : vector<8x512xf32> to vector<8x128xf32>
    %246 = arith.negf %245 : vector<8x128xf32>
    %247 = math.exp %246 : vector<8x128xf32>
    %cst_117 = arith.constant 1.000000e+00 : f32
    %248 = vector.broadcast %cst_117 : f32 to vector<8x128xf32>
    %249 = arith.addf %248, %247 : vector<8x128xf32>
    %250 = arith.divf %248, %249 : vector<8x128xf32>
    %251 = vector.extract_strided_slice %244 {offsets = [0, 128], sizes = [8, 128], strides = [1, 1]} : vector<8x512xf32> to vector<8x128xf32>
    %252 = arith.negf %251 : vector<8x128xf32>
    %253 = math.exp %252 : vector<8x128xf32>
    %cst_118 = arith.constant 1.000000e+00 : f32
    %254 = vector.broadcast %cst_118 : f32 to vector<8x128xf32>
    %255 = arith.addf %254, %253 : vector<8x128xf32>
    %256 = arith.divf %254, %255 : vector<8x128xf32>
    %257 = vector.extract_strided_slice %244 {offsets = [0, 256], sizes = [8, 128], strides = [1, 1]} : vector<8x512xf32> to vector<8x128xf32>
    %258 = math.tanh %257 : vector<8x128xf32>
    %259 = vector.extract_strided_slice %244 {offsets = [0, 384], sizes = [8, 128], strides = [1, 1]} : vector<8x512xf32> to vector<8x128xf32>
    %260 = arith.negf %259 : vector<8x128xf32>
    %261 = math.exp %260 : vector<8x128xf32>
    %cst_119 = arith.constant 1.000000e+00 : f32
    %262 = vector.broadcast %cst_119 : f32 to vector<8x128xf32>
    %263 = arith.addf %262, %261 : vector<8x128xf32>
    %264 = arith.divf %262, %263 : vector<8x128xf32>
    %265 = arith.mulf %256, %238 : vector<8x128xf32>
    %266 = arith.mulf %250, %258 : vector<8x128xf32>
    %267 = arith.addf %265, %266 : vector<8x128xf32>
    %268 = math.tanh %267 : vector<8x128xf32>
    %269 = arith.mulf %264, %268 : vector<8x128xf32>
    %c0_120 = arith.constant 0 : index
    %c0_121 = arith.constant 0 : index
    %270 = vector.load %arg4[%c0_120, %c0_121] : memref<8x128xf32, #tpu.memory_space<vmem>>, vector<8x128xf32>
    tpu.vector_store %arg4[%c0_120, %c0_121], %269 {strides = array<i32>} : memref<8x128xf32, #tpu.memory_space<vmem>>, vector<8x128xf32>,
    %c0_122 = arith.constant 0 : index
    %c0_123 = arith.constant 0 : index
    %271 = vector.load %arg5[%c0_122, %c0_123] : memref<8x128xf32, #tpu.memory_space<vmem>>, vector<8x128xf32>
    tpu.vector_store %arg5[%c0_122, %c0_123], %267 {strides = array<i32>} : memref<8x128xf32, #tpu.memory_space<vmem>>, vector<8x128xf32>,
    %272 = arith.index_cast %c6_i32 : i32 to index
    %c0_124 = arith.constant 0 : index
    %c0_125 = arith.constant 0 : index
    %273 = vector.load %arg3[%272, %c0_124, %c0_125] : memref<8x8x128xf32, #tpu.memory_space<vmem>>, vector<1x8x128xf32>
    %274 = vector.shape_cast %273 : vector<1x8x128xf32> to vector<8x128xf32>
    %275 = vector.shape_cast %269 : vector<8x128xf32> to vector<1x8x128xf32>
    tpu.vector_store %arg3[%272, %c0_124, %c0_125], %275 {strides = array<i32>} : memref<8x8x128xf32, #tpu.memory_space<vmem>>, vector<1x8x128xf32>,
    %c7_i32 = arith.constant 7 : i32
    %c0_126 = arith.constant 0 : index
    %c0_127 = arith.constant 0 : index
    %276 = vector.load %arg4[%c0_126, %c0_127] : memref<8x128xf32, #tpu.memory_space<vmem>>, vector<8x128xf32>
    %c0_128 = arith.constant 0 : index
    %c0_129 = arith.constant 0 : index
    %277 = vector.load %arg5[%c0_128, %c0_129] : memref<8x128xf32, #tpu.memory_space<vmem>>, vector<8x128xf32>
    %278 = arith.index_cast %c7_i32 : i32 to index
    %c0_130 = arith.constant 0 : index
    %c0_131 = arith.constant 0 : index
    %279 = vector.load %arg1[%278, %c0_130, %c0_131] : memref<8x8x512xf32, #tpu.memory_space<vmem>>, vector<1x8x512xf32>
    %280 = vector.shape_cast %279 : vector<1x8x512xf32> to vector<8x512xf32>
    %c0_132 = arith.constant 0 : index
    %c0_133 = arith.constant 0 : index
    %281 = vector.load %arg2[%c0_132, %c0_133] : memref<128x512xf32, #tpu.memory_space<vmem>>, vector<128x512xf32>
    %cst_134 = arith.constant dense<0.000000e+00> : vector<8x512xf32>
    %282 = tpu.matmul %276, %281, %cst_134 {dimension_numbers = #tpu.dot_dimension_numbers<[1], [0], [0], [1], [0, 0, 1, 1], [], []>} : vector<8x128xf32>, vector<128x512xf32>, vector<8x512xf32> -> vector<8x512xf32>
    %283 = arith.addf %280, %282 : vector<8x512xf32>
    %284 = vector.extract_strided_slice %283 {offsets = [0, 0], sizes = [8, 128], strides = [1, 1]} : vector<8x512xf32> to vector<8x128xf32>
    %285 = arith.negf %284 : vector<8x128xf32>
    %286 = math.exp %285 : vector<8x128xf32>
    %cst_135 = arith.constant 1.000000e+00 : f32
    %287 = vector.broadcast %cst_135 : f32 to vector<8x128xf32>
    %288 = arith.addf %287, %286 : vector<8x128xf32>
    %289 = arith.divf %287, %288 : vector<8x128xf32>
    %290 = vector.extract_strided_slice %283 {offsets = [0, 128], sizes = [8, 128], strides = [1, 1]} : vector<8x512xf32> to vector<8x128xf32>
    %291 = arith.negf %290 : vector<8x128xf32>
    %292 = math.exp %291 : vector<8x128xf32>
    %cst_136 = arith.constant 1.000000e+00 : f32
    %293 = vector.broadcast %cst_136 : f32 to vector<8x128xf32>
    %294 = arith.addf %293, %292 : vector<8x128xf32>
    %295 = arith.divf %293, %294 : vector<8x128xf32>
    %296 = vector.extract_strided_slice %283 {offsets = [0, 256], sizes = [8, 128], strides = [1, 1]} : vector<8x512xf32> to vector<8x128xf32>
    %297 = math.tanh %296 : vector<8x128xf32>
    %298 = vector.extract_strided_slice %283 {offsets = [0, 384], sizes = [8, 128], strides = [1, 1]} : vector<8x512xf32> to vector<8x128xf32>
    %299 = arith.negf %298 : vector<8x128xf32>
    %300 = math.exp %299 : vector<8x128xf32>
    %cst_137 = arith.constant 1.000000e+00 : f32
    %301 = vector.broadcast %cst_137 : f32 to vector<8x128xf32>
    %302 = arith.addf %301, %300 : vector<8x128xf32>
    %303 = arith.divf %301, %302 : vector<8x128xf32>
    %304 = arith.mulf %295, %277 : vector<8x128xf32>
    %305 = arith.mulf %289, %297 : vector<8x128xf32>
    %306 = arith.addf %304, %305 : vector<8x128xf32>
    %307 = math.tanh %306 : vector<8x128xf32>
    %308 = arith.mulf %303, %307 : vector<8x128xf32>
    %c0_138 = arith.constant 0 : index
    %c0_139 = arith.constant 0 : index
    %309 = vector.load %arg4[%c0_138, %c0_139] : memref<8x128xf32, #tpu.memory_space<vmem>>, vector<8x128xf32>
    tpu.vector_store %arg4[%c0_138, %c0_139], %308 {strides = array<i32>} : memref<8x128xf32, #tpu.memory_space<vmem>>, vector<8x128xf32>,
    %c0_140 = arith.constant 0 : index
    %c0_141 = arith.constant 0 : index
    %310 = vector.load %arg5[%c0_140, %c0_141] : memref<8x128xf32, #tpu.memory_space<vmem>>, vector<8x128xf32>
    tpu.vector_store %arg5[%c0_140, %c0_141], %306 {strides = array<i32>} : memref<8x128xf32, #tpu.memory_space<vmem>>, vector<8x128xf32>,
    %311 = arith.index_cast %c7_i32 : i32 to index
    %c0_142 = arith.constant 0 : index
    %c0_143 = arith.constant 0 : index
    %312 = vector.load %arg3[%311, %c0_142, %c0_143] : memref<8x8x128xf32, #tpu.memory_space<vmem>>, vector<1x8x128xf32>
    %313 = vector.shape_cast %312 : vector<1x8x128xf32> to vector<8x128xf32>
    %314 = vector.shape_cast %308 : vector<8x128xf32> to vector<1x8x128xf32>
    tpu.vector_store %arg3[%311, %c0_142, %c0_143], %314 {strides = array<i32>} : memref<8x8x128xf32, #tpu.memory_space<vmem>>, vector<1x8x128xf32>,
    %c8_i32 = arith.constant 8 : i32
    return
  }
  func.func @transform_0(%arg0: i32) -> (i32, i32, i32) {
    %c0_i32 = arith.constant 0 : i32
    %c0_i32_0 = arith.constant 0 : i32
    %c0_i32_1 = arith.constant 0 : i32
    return %arg0, %c0_i32, %c0_i32_0 : i32, i32, i32
  }
  func.func @transform_1(%arg0: i32) -> (i32, i32) {
    %c0_i32 = arith.constant 0 : i32
    %c0_i32_0 = arith.constant 0 : i32
    %c0_i32_1 = arith.constant 0 : i32
    return %c0_i32, %c0_i32_0 : i32, i32
  }
  func.func @transform_2(%arg0: i32) -> (i32, i32, i32) {
    %c0_i32 = arith.constant 0 : i32
    %c0_i32_0 = arith.constant 0 : i32
    %c0_i32_1 = arith.constant 0 : i32
    return %arg0, %c0_i32, %c0_i32_0 : i32, i32, i32
  }
}

</mosaic_0001>

<llo_original>
// kernel: decoder_rnn_forward.3
$region0: #{decoder_rnn_forward.3}
  #allocation0 [shape = 'u32[]', space=smem, size = 0x4, offset = 0x4, fixed_abs, tag = 'smem constant byte address 0x4 - core index']
  #allocation1 [shape = 'u32[72,128]{1,0:T(1,128)}', space=vmem, size = 0x9000, scoped, tag = 'internal scratch']
  %s0 = inlined_call_operand.vmem [shape: f32[64,32], index: 0, kind: input, shape index: {}]
  %s1 = inlined_call_operand.hbm [shape: f32[32,512], index: 1, kind: input, shape index: {}]
  %s2 = inlined_call_operand.vmem [shape: f32[1,512], index: 2, kind: input, shape index: {}]
  %s3 = inlined_call_operand.vmem [shape: f32[64,512], index: 3, kind: output, shape index: {}]
  %s4 = sld [smem:[#allocation0]]
  $region26: #{decoder_rnn_forward.3} parent=0
    _
  %s6 = ssub.s32 1, %s4
  %s7 = scalar_select 0, %s6, %s4
  $region1: #{decoder_rnn_forward.3} parent=0
    #allocation2 [shape = 'u8[65536]{0}', space=vmem, size = 0x10000, scoped, tag = 'input window, operand 1, single buffered']
    #allocation3 [shape = 's32[1]{0}', space=sflag, size = 0x4, scoped, tag = 'scoped memory for decoder_rnn_forward.3']
    %8 = vsyncpa [#allocation3], 0
    // Predicated region
    $region2: #{decoder_rnn_forward.3} parent=1 // pred_check
      _
    $region3: #{decoder_rnn_forward.3} parent=1 // pred_check_branch
      %10 = sbr.rel (0) target = $region5
    $region4: #{decoder_rnn_forward.3} parent=1 // pred_region
      _
    $region5: #{decoder_rnn_forward.3} parent=1 // pred_fallthru
      _
    // Predicated region
    $region6: #{decoder_rnn_forward.3} parent=1 // pred_check
      _
    $region7: #{decoder_rnn_forward.3} parent=1 // pred_check_branch
      %12 = sbr.rel (0) target = $region9
    $region8: #{decoder_rnn_forward.3} parent=1 // pred_region
      %14 = vsyncadd [#allocation3], 0
      %s15 = sshll.u32 %s1, 4
      %s16 = int_to_ptr.hbm [resolvable:$true] %s15
      %s17 = sshll.u32 [#allocation2], 4
      %s18 = int_to_ptr.vmem [resolvable:$true] %s17
      %23 = dma.hbm_to_vmem [thread:$0]  %s16, 2048, %s18, [#allocation3], 512, 512, 32
    $region9: #{decoder_rnn_forward.3} parent=1 // pred_fallthru
      _
    // Predicated region
    $region10: #{decoder_rnn_forward.3} parent=1 // pred_check
      _
    $region11: #{decoder_rnn_forward.3} parent=1 // pred_check_branch
      %25 = sbr.rel (0) target = $region13
    $region12: #{decoder_rnn_forward.3} parent=1 // pred_region
      _
    $region13: #{decoder_rnn_forward.3} parent=1 // pred_fallthru
      _
    // Predicated region
    $region14: #{decoder_rnn_forward.3} parent=1 // pred_check
      _
    $region15: #{decoder_rnn_forward.3} parent=1 // pred_check_branch
      %27 = sbr.rel (0) target = $region17
    $region16: #{decoder_rnn_forward.3} parent=1 // pred_region
      %29 = dma.done [#allocation3], 2048
    $region17: #{decoder_rnn_forward.3} parent=1 // pred_fallthru
      _
    %v30 = vld [vmem:[%s0] sm:$0xff]
    %v31 = vld [vmem:[%s0 + $0x8] sm:$0xff]
    %v32 = vld [vmem:[%s0 + $0x10] sm:$0xff]
    %v33 = vld [vmem:[%s0 + $0x18] sm:$0xff]
    %v34 = vld [vmem:[%s0 + $0x20] sm:$0xff]
    %v35 = vld [vmem:[%s0 + $0x28] sm:$0xff]
    %v36 = vld [vmem:[%s0 + $0x30] sm:$0xff]
    %v37 = vld [vmem:[%s0 + $0x38] sm:$0xff]
    %v38 = vld [vmem:[#allocation2] sm:$0xff]
    %v39 = vld [vmem:[#allocation2 + $0x8] sm:$0xff]
    %v40 = vld [vmem:[#allocation2 + $0x10] sm:$0xff]
    %v41 = vld [vmem:[#allocation2 + $0x18] sm:$0xff]
    %v42 = vld [vmem:[#allocation2 + $0x20] sm:$0xff]
    %v43 = vld [vmem:[#allocation2 + $0x28] sm:$0xff]
    %v44 = vld [vmem:[#allocation2 + $0x30] sm:$0xff]
    %v45 = vld [vmem:[#allocation2 + $0x38] sm:$0xff]
    %v46 = vld [vmem:[#allocation2 + $0x40] sm:$0xff]
    %v47 = vld [vmem:[#allocation2 + $0x48] sm:$0xff]
    %v48 = vld [vmem:[#allocation2 + $0x50] sm:$0xff]
    %v49 = vld [vmem:[#allocation2 + $0x58] sm:$0xff]
    %v50 = vld [vmem:[#allocation2 + $0x60] sm:$0xff]
    %v51 = vld [vmem:[#allocation2 + $0x68] sm:$0xff]
    %v52 = vld [vmem:[#allocation2 + $0x70] sm:$0xff]
    %v53 = vld [vmem:[#allocation2 + $0x78] sm:$0xff]
    %v54 = vld [vmem:[%s2] sm:$0xf]
    %v56 = vperm.slane %v54, 0
    %v57 = vperm.slane %v54, 1
    %v58 = vperm.slane %v54, 2
    %v59 = vperm.slane %v54, 3
    %vm64 = vcmask 261120
    %v66 = vsel %vm64, %v30, 0
    %v69 = vsel %vm64, %v31, 0
    %v72 = vsel %vm64, %v32, 0
    %v75 = vsel %vm64, %v33, 0
    %v78 = vsel %vm64, %v34, 0
    %v81 = vsel %vm64, %v35, 0
    %v84 = vsel %vm64, %v36, 0
    %v87 = vsel %vm64, %v37, 0
    %89 = vmatpush.msra.mxu0 0.0
    %90 = vmatpush.msra.mxu0 0.0
    %91 = vmatpush.msra.mxu0 0.0
    %92 = vmatpush.msra.mxu0 0.0
    %93 = vmatpush.msra.mxu0 0.0
    %94 = vmatpush.msra.mxu0 0.0
    %95 = vmatpush.msra.mxu0 0.0
    %96 = vmatpush.msra.mxu0 0.0
    %97 = vmatpush.msra.mxu0 0.0
    %98 = vmatpush.msra.mxu0 0.0
    %99 = vmatpush.msra.mxu0 0.0
    %100 = vmatpush.msra.mxu0 0.0
    %101 = vmatpush.msra.mxu0 %v50
    %102 = vmatpush.msra.mxu0 %v46
    %103 = vmatpush.msra.mxu0 %v42
    %104 = vmatpush.msra.mxu0 %v38
    %105 = vmatmul.f32.gmra.mxu0 %v66
    %v106 = vpop.f32.mrf.mxu0
    %v107 = vadd.f32 %v56, %v106
    %108 = vmatmul.f32.gmra.mxu0 %v69
    %v109 = vpop.f32.mrf.mxu0
    %v110 = vadd.f32 %v56, %v109
    %111 = vmatmul.f32.gmra.mxu0 %v72
    %v112 = vpop.f32.mrf.mxu0
    %v113 = vadd.f32 %v56, %v112
    %114 = vmatmul.f32.gmra.mxu0 %v75
    %v115 = vpop.f32.mrf.mxu0
    %v116 = vadd.f32 %v56, %v115
    %117 = vmatmul.f32.gmra.mxu0 %v78
    %v118 = vpop.f32.mrf.mxu0
    %v119 = vadd.f32 %v56, %v118
    %120 = vmatmul.f32.gmra.mxu0 %v81
    %v121 = vpop.f32.mrf.mxu0
    %v122 = vadd.f32 %v56, %v121
    %123 = vmatmul.f32.gmra.mxu0 %v84
    %v124 = vpop.f32.mrf.mxu0
    %v125 = vadd.f32 %v56, %v124
    %126 = vmatmul.f32.gmra.mxu0 %v87
    %v127 = vpop.f32.mrf.mxu0
    %v128 = vadd.f32 %v56, %v127
    %129 = vdwg.mxu0
    %130 = vmatpush.msra.mxu0 0.0
    %131 = vmatpush.msra.mxu0 0.0
    %132 = vmatpush.msra.mxu0 0.0
    %133 = vmatpush.msra.mxu0 0.0
    %134 = vmatpush.msra.mxu0 0.0
    %135 = vmatpush.msra.mxu0 0.0
    %136 = vmatpush.msra.mxu0 0.0
    %137 = vmatpush.msra.mxu0 0.0
    %138 = vmatpush.msra.mxu0 0.0
    %139 = vmatpush.msra.mxu0 0.0
    %140 = vmatpush.msra.mxu0 0.0
    %141 = vmatpush.msra.mxu0 0.0
    %142 = vmatpush.msra.mxu0 %v51
    %143 = vmatpush.msra.mxu0 %v47
    %144 = vmatpush.msra.mxu0 %v43
    %145 = vmatpush.msra.mxu0 %v39
    %146 = vmatmul.f32.gmra.mxu0 %v66
    %v147 = vpop.f32.mrf.mxu0
    %v148 = vadd.f32 %v57, %v147
    %149 = vmatmul.f32.gmra.mxu0 %v69
    %v150 = vpop.f32.mrf.mxu0
    %v151 = vadd.f32 %v57, %v150
    %152 = vmatmul.f32.gmra.mxu0 %v72
    %v153 = vpop.f32.mrf.mxu0
    %v154 = vadd.f32 %v57, %v153
    %155 = vmatmul.f32.gmra.mxu0 %v75
    %v156 = vpop.f32.mrf.mxu0
    %v157 = vadd.f32 %v57, %v156
    %158 = vmatmul.f32.gmra.mxu0 %v78
    %v159 = vpop.f32.mrf.mxu0
    %v160 = vadd.f32 %v57, %v159
    %161 = vmatmul.f32.gmra.mxu0 %v81
    %v162 = vpop.f32.mrf.mxu0
    %v163 = vadd.f32 %v57, %v162
    %164 = vmatmul.f32.gmra.mxu0 %v84
    %v165 = vpop.f32.mrf.mxu0
    %v166 = vadd.f32 %v57, %v165
    %167 = vmatmul.f32.gmra.mxu0 %v87
    %v168 = vpop.f32.mrf.mxu0
    %v169 = vadd.f32 %v57, %v168
    %170 = vdwg.mxu0
    %171 = vmatpush.msra.mxu0 0.0
    %172 = vmatpush.msra.mxu0 0.0
    %173 = vmatpush.msra.mxu0 0.0
    %174 = vmatpush.msra.mxu0 0.0
    %175 = vmatpush.msra.mxu0 0.0
    %176 = vmatpush.msra.mxu0 0.0
    %177 = vmatpush.msra.mxu0 0.0
    %178 = vmatpush.msra.mxu0 0.0
    %179 = vmatpush.msra.mxu0 0.0
    %180 = vmatpush.msra.mxu0 0.0
    %181 = vmatpush.msra.mxu0 0.0
    %182 = vmatpush.msra.mxu0 0.0
    %183 = vmatpush.msra.mxu0 %v52
    %184 = vmatpush.msra.mxu0 %v48
    %185 = vmatpush.msra.mxu0 %v44
    %186 = vmatpush.msra.mxu0 %v40
    %187 = vmatmul.f32.gmra.mxu0 %v66
    %v188 = vpop.f32.mrf.mxu0
    %v189 = vadd.f32 %v58, %v188
    %190 = vmatmul.f32.gmra.mxu0 %v69
    %v191 = vpop.f32.mrf.mxu0
    %v192 = vadd.f32 %v58, %v191
    %193 = vmatmul.f32.gmra.mxu0 %v72
    %v194 = vpop.f32.mrf.mxu0
    %v195 = vadd.f32 %v58, %v194
    %196 = vmatmul.f32.gmra.mxu0 %v75
    %v197 = vpop.f32.mrf.mxu0
    %v198 = vadd.f32 %v58, %v197
    %199 = vmatmul.f32.gmra.mxu0 %v78
    %v200 = vpop.f32.mrf.mxu0
    %v201 = vadd.f32 %v58, %v200
    %202 = vmatmul.f32.gmra.mxu0 %v81
    %v203 = vpop.f32.mrf.mxu0
    %v204 = vadd.f32 %v58, %v203
    %205 = vmatmul.f32.gmra.mxu0 %v84
    %v206 = vpop.f32.mrf.mxu0
    %v207 = vadd.f32 %v58, %v206
    %208 = vmatmul.f32.gmra.mxu0 %v87
    %v209 = vpop.f32.mrf.mxu0
    %v210 = vadd.f32 %v58, %v209
    %211 = vdwg.mxu0
    %212 = vmatpush.msra.mxu0 0.0
    %213 = vmatpush.msra.mxu0 0.0
    %214 = vmatpush.msra.mxu0 0.0
    %215 = vmatpush.msra.mxu0 0.0
    %216 = vmatpush.msra.mxu0 0.0
    %217 = vmatpush.msra.mxu0 0.0
    %218 = vmatpush.msra.mxu0 0.0
    %219 = vmatpush.msra.mxu0 0.0
    %220 = vmatpush.msra.mxu0 0.0
    %221 = vmatpush.msra.mxu0 0.0
    %222 = vmatpush.msra.mxu0 0.0
    %223 = vmatpush.msra.mxu0 0.0
    %224 = vmatpush.msra.mxu0 %v53
    %225 = vmatpush.msra.mxu0 %v49
    %226 = vmatpush.msra.mxu0 %v45
    %227 = vmatpush.msra.mxu0 %v41
    %228 = vmatmul.f32.gmra.mxu0 %v66
    %v229 = vpop.f32.mrf.mxu0
    %v230 = vadd.f32 %v59, %v229
    %231 = vmatmul.f32.gmra.mxu0 %v69
    %v232 = vpop.f32.mrf.mxu0
    %v233 = vadd.f32 %v59, %v232
    %234 = vmatmul.f32.gmra.mxu0 %v72
    %v235 = vpop.f32.mrf.mxu0
    %v236 = vadd.f32 %v59, %v235
    %237 = vmatmul.f32.gmra.mxu0 %v75
    %v238 = vpop.f32.mrf.mxu0
    %v239 = vadd.f32 %v59, %v238
    %240 = vmatmul.f32.gmra.mxu0 %v78
    %v241 = vpop.f32.mrf.mxu0
    %v242 = vadd.f32 %v59, %v241
    %243 = vmatmul.f32.gmra.mxu0 %v81
    %v244 = vpop.f32.mrf.mxu0
    %v245 = vadd.f32 %v59, %v244
    %246 = vmatmul.f32.gmra.mxu0 %v84
    %v247 = vpop.f32.mrf.mxu0
    %v248 = vadd.f32 %v59, %v247
    %249 = vmatmul.f32.gmra.mxu0 %v87
    %v250 = vpop.f32.mrf.mxu0
    %v251 = vadd.f32 %v59, %v250
    %252 = vdwg.mxu0
    %253 = vst [vmem:[%s3] sm:$0xff] %v107
    %254 = vst [vmem:[%s3 + $0x8] sm:$0xff] %v148
    %255 = vst [vmem:[%s3 + $0x10] sm:$0xff] %v189
    %256 = vst [vmem:[%s3 + $0x18] sm:$0xff] %v230
    %257 = vst [vmem:[%s3 + $0x20] sm:$0xff] %v110
    %258 = vst [vmem:[%s3 + $0x28] sm:$0xff] %v151
    %259 = vst [vmem:[%s3 + $0x30] sm:$0xff] %v192
    %260 = vst [vmem:[%s3 + $0x38] sm:$0xff] %v233
    %261 = vst [vmem:[%s3 + $0x40] sm:$0xff] %v113
    %262 = vst [vmem:[%s3 + $0x48] sm:$0xff] %v154
    %263 = vst [vmem:[%s3 + $0x50] sm:$0xff] %v195
    %264 = vst [vmem:[%s3 + $0x58] sm:$0xff] %v236
    %265 = vst [vmem:[%s3 + $0x60] sm:$0xff] %v116
    %266 = vst [vmem:[%s3 + $0x68] sm:$0xff] %v157
    %267 = vst [vmem:[%s3 + $0x70] sm:$0xff] %v198
    %268 = vst [vmem:[%s3 + $0x78] sm:$0xff] %v239
    %269 = vst [vmem:[%s3 + $0x80] sm:$0xff] %v119
    %270 = vst [vmem:[%s3 + $0x88] sm:$0xff] %v160
    %271 = vst [vmem:[%s3 + $0x90] sm:$0xff] %v201
    %272 = vst [vmem:[%s3 + $0x98] sm:$0xff] %v242
    %273 = vst [vmem:[%s3 + $0xa0] sm:$0xff] %v122
    %274 = vst [vmem:[%s3 + $0xa8] sm:$0xff] %v163
    %275 = vst [vmem:[%s3 + $0xb0] sm:$0xff] %v204
    %276 = vst [vmem:[%s3 + $0xb8] sm:$0xff] %v245
    %277 = vst [vmem:[%s3 + $0xc0] sm:$0xff] %v125
    %278 = vst [vmem:[%s3 + $0xc8] sm:$0xff] %v166
    %279 = vst [vmem:[%s3 + $0xd0] sm:$0xff] %v207
    %280 = vst [vmem:[%s3 + $0xd8] sm:$0xff] %v248
    %281 = vst [vmem:[%s3 + $0xe0] sm:$0xff] %v128
    %282 = vst [vmem:[%s3 + $0xe8] sm:$0xff] %v169
    %283 = vst [vmem:[%s3 + $0xf0] sm:$0xff] %v210
    %284 = vst [vmem:[%s3 + $0xf8] sm:$0xff] %v251
    // Predicated region
    $region18: #{decoder_rnn_forward.3} parent=1 // pred_check
      _
    $region19: #{decoder_rnn_forward.3} parent=1 // pred_check_branch
      %286 = sbr.rel (0) target = $region21
    $region20: #{decoder_rnn_forward.3} parent=1 // pred_region
      _
    $region21: #{decoder_rnn_forward.3} parent=1 // pred_fallthru
      _
    // Predicated region
    $region22: #{decoder_rnn_forward.3} parent=1 // pred_check
      _
    $region23: #{decoder_rnn_forward.3} parent=1 // pred_check_branch
      %288 = sbr.rel (0) target = $region25
    $region24: #{decoder_rnn_forward.3} parent=1 // pred_region
      _
    $region25: #{decoder_rnn_forward.3} parent=1 // pred_fallthru
      _
    %289 = vsyncpa [#allocation3], 1

// kernel: decoder_rnn_forward.5
$region0: #{decoder_rnn_forward.5}
  #allocation0 [shape = 'u32[]', space=smem, size = 0x4, offset = 0x4, fixed_abs, tag = 'smem constant byte address 0x4 - core index']
  #allocation1 [shape = 'u32[72,128]{1,0:T(1,128)}', space=vmem, size = 0x9000, scoped, tag = 'internal scratch']
  %s0 = inlined_call_operand.vmem [shape: f32[64,128], index: 0, kind: input, shape index: {}]
  %s1 = inlined_call_operand.vmem [shape: f32[128,512], index: 1, kind: input, shape index: {}]
  %s2 = inlined_call_operand.vmem [shape: f32[1,512], index: 2, kind: input, shape index: {}]
  %s3 = inlined_call_operand.vmem [shape: f32[64,512], index: 3, kind: output, shape index: {}]
  %s4 = sld [smem:[#allocation0]]
  $region22: #{decoder_rnn_forward.5} parent=0
    _
  %s6 = ssub.s32 1, %s4
  %s7 = scalar_select 0, %s6, %s4
  // Predicated region
  $region2: #{decoder_rnn_forward.5} parent=0 // pred_check
    _
  $region3: #{decoder_rnn_forward.5} parent=0 // pred_check_branch
    %9 = sbr.rel (0) target = $region5
  $region4: #{decoder_rnn_forward.5} parent=0 // pred_region
    _
  $region5: #{decoder_rnn_forward.5} parent=0 // pred_fallthru
    _
  // Predicated region
  $region6: #{decoder_rnn_forward.5} parent=0 // pred_check
    _
  $region7: #{decoder_rnn_forward.5} parent=0 // pred_check_branch
    %11 = sbr.rel (0) target = $region9
  $region8: #{decoder_rnn_forward.5} parent=0 // pred_region
    _
  $region9: #{decoder_rnn_forward.5} parent=0 // pred_fallthru
    _
  // Predicated region
  $region10: #{decoder_rnn_forward.5} parent=0 // pred_check
    _
  $region11: #{decoder_rnn_forward.5} parent=0 // pred_check_branch
    %13 = sbr.rel (0) target = $region13
  $region12: #{decoder_rnn_forward.5} parent=0 // pred_region
    _
  $region13: #{decoder_rnn_forward.5} parent=0 // pred_fallthru
    _
  %v14 = vld [vmem:[%s0] sm:$0xff]
  %v15 = vld [vmem:[%s0 + $0x8] sm:$0xff]
  %v16 = vld [vmem:[%s0 + $0x10] sm:$0xff]
  %v17 = vld [vmem:[%s0 + $0x18] sm:$0xff]
  %v18 = vld [vmem:[%s0 + $0x20] sm:$0xff]
  %v19 = vld [vmem:[%s0 + $0x28] sm:$0xff]
  %v20 = vld [vmem:[%s0 + $0x30] sm:$0xff]
  %v21 = vld [vmem:[%s0 + $0x38] sm:$0xff]
  %v22 = vld [vmem:[%s1] sm:$0xff]
  %v23 = vld [vmem:[%s1 + $0x8] sm:$0xff]
  %v24 = vld [vmem:[%s1 + $0x10] sm:$0xff]
  %v25 = vld [vmem:[%s1 + $0x18] sm:$0xff]
  %v26 = vld [vmem:[%s1 + $0x20] sm:$0xff]
  %v27 = vld [vmem:[%s1 + $0x28] sm:$0xff]
  %v28 = vld [vmem:[%s1 + $0x30] sm:$0xff]
  %v29 = vld [vmem:[%s1 + $0x38] sm:$0xff]
  %v30 = vld [vmem:[%s1 + $0x40] sm:$0xff]
  %v31 = vld [vmem:[%s1 + $0x48] sm:$0xff]
  %v32 = vld [vmem:[%s1 + $0x50] sm:$0xff]
  %v33 = vld [vmem:[%s1 + $0x58] sm:$0xff]
  %v34 = vld [vmem:[%s1 + $0x60] sm:$0xff]
  %v35 = vld [vmem:[%s1 + $0x68] sm:$0xff]
  %v36 = vld [vmem:[%s1 + $0x70] sm:$0xff]
  %v37 = vld [vmem:[%s1 + $0x78] sm:$0xff]
  %v38 = vld [vmem:[%s1 + $0x80] sm:$0xff]
  %v39 = vld [vmem:[%s1 + $0x88] sm:$0xff]
  %v40 = vld [vmem:[%s1 + $0x90] sm:$0xff]
  %v41 = vld [vmem:[%s1 + $0x98] sm:$0xff]
  %v42 = vld [vmem:[%s1 + $0xa0] sm:$0xff]
  %v43 = vld [vmem:[%s1 + $0xa8] sm:$0xff]
  %v44 = vld [vmem:[%s1 + $0xb0] sm:$0xff]
  %v45 = vld [vmem:[%s1 + $0xb8] sm:$0xff]
  %v46 = vld [vmem:[%s1 + $0xc0] sm:$0xff]
  %v47 = vld [vmem:[%s1 + $0xc8] sm:$0xff]
  %v48 = vld [vmem:[%s1 + $0xd0] sm:$0xff]
  %v49 = vld [vmem:[%s1 + $0xd8] sm:$0xff]
  %v50 = vld [vmem:[%s1 + $0xe0] sm:$0xff]
  %v51 = vld [vmem:[%s1 + $0xe8] sm:$0xff]
  %v52 = vld [vmem:[%s1 + $0xf0] sm:$0xff]
  %v53 = vld [vmem:[%s1 + $0xf8] sm:$0xff]
  %v54 = vld [vmem:[%s1 + $0x100] sm:$0xff]
  %v55 = vld [vmem:[%s1 + $0x108] sm:$0xff]
  %v56 = vld [vmem:[%s1 + $0x110] sm:$0xff]
  %v57 = vld [vmem:[%s1 + $0x118] sm:$0xff]
  %v58 = vld [vmem:[%s1 + $0x120] sm:$0xff]
  %v59 = vld [vmem:[%s1 + $0x128] sm:$0xff]
  %v60 = vld [vmem:[%s1 + $0x130] sm:$0xff]
  %v61 = vld [vmem:[%s1 + $0x138] sm:$0xff]
  %v62 = vld [vmem:[%s1 + $0x140] sm:$0xff]
  %v63 = vld [vmem:[%s1 + $0x148] sm:$0xff]
  %v64 = vld [vmem:[%s1 + $0x150] sm:$0xff]
  %v65 = vld [vmem:[%s1 + $0x158] sm:$0xff]
  %v66 = vld [vmem:[%s1 + $0x160] sm:$0xff]
  %v67 = vld [vmem:[%s1 + $0x168] sm:$0xff]
  %v68 = vld [vmem:[%s1 + $0x170] sm:$0xff]
  %v69 = vld [vmem:[%s1 + $0x178] sm:$0xff]
  %v70 = vld [vmem:[%s1 + $0x180] sm:$0xff]
  %v71 = vld [vmem:[%s1 + $0x188] sm:$0xff]
  %v72 = vld [vmem:[%s1 + $0x190] sm:$0xff]
  %v73 = vld [vmem:[%s1 + $0x198] sm:$0xff]
  %v74 = vld [vmem:[%s1 + $0x1a0] sm:$0xff]
  %v75 = vld [vmem:[%s1 + $0x1a8] sm:$0xff]
  %v76 = vld [vmem:[%s1 + $0x1b0] sm:$0xff]
  %v77 = vld [vmem:[%s1 + $0x1b8] sm:$0xff]
  %v78 = vld [vmem:[%s1 + $0x1c0] sm:$0xff]
  %v79 = vld [vmem:[%s1 + $0x1c8] sm:$0xff]
  %v80 = vld [vmem:[%s1 + $0x1d0] sm:$0xff]
  %v81 = vld [vmem:[%s1 + $0x1d8] sm:$0xff]
  %v82 = vld [vmem:[%s1 + $0x1e0] sm:$0xff]
  %v83 = vld [vmem:[%s1 + $0x1e8] sm:$0xff]
  %v84 = vld [vmem:[%s1 + $0x1f0] sm:$0xff]
  %v85 = vld [vmem:[%s1 + $0x1f8] sm:$0xff]
  %v86 = vld [vmem:[%s2] sm:$0xf]
  %v88 = vperm.slane %v86, 0
  %v89 = vperm.slane %v86, 1
  %v90 = vperm.slane %v86, 2
  %v91 = vperm.slane %v86, 3
  %96 = vmatpush.msra.mxu0 %v82
  %97 = vmatpush.msra.mxu0 %v78
  %98 = vmatpush.msra.mxu0 %v74
  %99 = vmatpush.msra.mxu0 %v70
  %100 = vmatpush.msra.mxu0 %v66
  %101 = vmatpush.msra.mxu0 %v62
  %102 = vmatpush.msra.mxu0 %v58
  %103 = vmatpush.msra.mxu0 %v54
  %104 = vmatpush.msra.mxu0 %v50
  %105 = vmatpush.msra.mxu0 %v46
  %106 = vmatpush.msra.mxu0 %v42
  %107 = vmatpush.msra.mxu0 %v38
  %108 = vmatpush.msra.mxu0 %v34
  %109 = vmatpush.msra.mxu0 %v30
  %110 = vmatpush.msra.mxu0 %v26
  %111 = vmatpush.msra.mxu0 %v22
  %112 = vmatmul.f32.gmra.mxu0 %v14
  %v113 = vpop.f32.mrf.mxu0
  %v114 = vadd.f32 %v88, %v113
  %115 = vmatmul.f32.gmra.mxu0 %v15
  %v116 = vpop.f32.mrf.mxu0
  %v117 = vadd.f32 %v88, %v116
  %118 = vmatmul.f32.gmra.mxu0 %v16
  %v119 = vpop.f32.mrf.mxu0
  %v120 = vadd.f32 %v88, %v119
  %121 = vmatmul.f32.gmra.mxu0 %v17
  %v122 = vpop.f32.mrf.mxu0
  %v123 = vadd.f32 %v88, %v122
  %124 = vmatmul.f32.gmra.mxu0 %v18
  %v125 = vpop.f32.mrf.mxu0
  %v126 = vadd.f32 %v88, %v125
  %127 = vmatmul.f32.gmra.mxu0 %v19
  %v128 = vpop.f32.mrf.mxu0
  %v129 = vadd.f32 %v88, %v128
  %130 = vmatmul.f32.gmra.mxu0 %v20
  %v131 = vpop.f32.mrf.mxu0
  %v132 = vadd.f32 %v88, %v131
  %133 = vmatmul.f32.gmra.mxu0 %v21
  %v134 = vpop.f32.mrf.mxu0
  %v135 = vadd.f32 %v88, %v134
  %136 = vdwg.mxu0
  %137 = vmatpush.msra.mxu0 %v83
  %138 = vmatpush.msra.mxu0 %v79
  %139 = vmatpush.msra.mxu0 %v75
  %140 = vmatpush.msra.mxu0 %v71
  %141 = vmatpush.msra.mxu0 %v67
  %142 = vmatpush.msra.mxu0 %v63
  %143 = vmatpush.msra.mxu0 %v59
  %144 = vmatpush.msra.mxu0 %v55
  %145 = vmatpush.msra.mxu0 %v51
  %146 = vmatpush.msra.mxu0 %v47
  %147 = vmatpush.msra.mxu0 %v43
  %148 = vmatpush.msra.mxu0 %v39
  %149 = vmatpush.msra.mxu0 %v35
  %150 = vmatpush.msra.mxu0 %v31
  %151 = vmatpush.msra.mxu0 %v27
  %152 = vmatpush.msra.mxu0 %v23
  %153 = vmatmul.f32.gmra.mxu0 %v14
  %v154 = vpop.f32.mrf.mxu0
  %v155 = vadd.f32 %v89, %v154
  %156 = vmatmul.f32.gmra.mxu0 %v15
  %v157 = vpop.f32.mrf.mxu0
  %v158 = vadd.f32 %v89, %v157
  %159 = vmatmul.f32.gmra.mxu0 %v16
  %v160 = vpop.f32.mrf.mxu0
  %v161 = vadd.f32 %v89, %v160
  %162 = vmatmul.f32.gmra.mxu0 %v17
  %v163 = vpop.f32.mrf.mxu0
  %v164 = vadd.f32 %v89, %v163
  %165 = vmatmul.f32.gmra.mxu0 %v18
  %v166 = vpop.f32.mrf.mxu0
  %v167 = vadd.f32 %v89, %v166
  %168 = vmatmul.f32.gmra.mxu0 %v19
  %v169 = vpop.f32.mrf.mxu0
  %v170 = vadd.f32 %v89, %v169
  %171 = vmatmul.f32.gmra.mxu0 %v20
  %v172 = vpop.f32.mrf.mxu0
  %v173 = vadd.f32 %v89, %v172
  %174 = vmatmul.f32.gmra.mxu0 %v21
  %v175 = vpop.f32.mrf.mxu0
  %v176 = vadd.f32 %v89, %v175
  %177 = vdwg.mxu0
  %178 = vmatpush.msra.mxu0 %v84
  %179 = vmatpush.msra.mxu0 %v80
  %180 = vmatpush.msra.mxu0 %v76
  %181 = vmatpush.msra.mxu0 %v72
  %182 = vmatpush.msra.mxu0 %v68
  %183 = vmatpush.msra.mxu0 %v64
  %184 = vmatpush.msra.mxu0 %v60
  %185 = vmatpush.msra.mxu0 %v56
  %186 = vmatpush.msra.mxu0 %v52
  %187 = vmatpush.msra.mxu0 %v48
  %188 = vmatpush.msra.mxu0 %v44
  %189 = vmatpush.msra.mxu0 %v40
  %190 = vmatpush.msra.mxu0 %v36
  %191 = vmatpush.msra.mxu0 %v32
  %192 = vmatpush.msra.mxu0 %v28
  %193 = vmatpush.msra.mxu0 %v24
  %194 = vmatmul.f32.gmra.mxu0 %v14
  %v195 = vpop.f32.mrf.mxu0
  %v196 = vadd.f32 %v90, %v195
  %197 = vmatmul.f32.gmra.mxu0 %v15
  %v198 = vpop.f32.mrf.mxu0
  %v199 = vadd.f32 %v90, %v198
  %200 = vmatmul.f32.gmra.mxu0 %v16
  %v201 = vpop.f32.mrf.mxu0
  %v202 = vadd.f32 %v90, %v201
  %203 = vmatmul.f32.gmra.mxu0 %v17
  %v204 = vpop.f32.mrf.mxu0
  %v205 = vadd.f32 %v90, %v204
  %206 = vmatmul.f32.gmra.mxu0 %v18
  %v207 = vpop.f32.mrf.mxu0
  %v208 = vadd.f32 %v90, %v207
  %209 = vmatmul.f32.gmra.mxu0 %v19
  %v210 = vpop.f32.mrf.mxu0
  %v211 = vadd.f32 %v90, %v210
  %212 = vmatmul.f32.gmra.mxu0 %v20
  %v213 = vpop.f32.mrf.mxu0
  %v214 = vadd.f32 %v90, %v213
  %215 = vmatmul.f32.gmra.mxu0 %v21
  %v216 = vpop.f32.mrf.mxu0
  %v217 = vadd.f32 %v90, %v216
  %218 = vdwg.mxu0
  %219 = vmatpush.msra.mxu0 %v85
  %220 = vmatpush.msra.mxu0 %v81
  %221 = vmatpush.msra.mxu0 %v77
  %222 = vmatpush.msra.mxu0 %v73
  %223 = vmatpush.msra.mxu0 %v69
  %224 = vmatpush.msra.mxu0 %v65
  %225 = vmatpush.msra.mxu0 %v61
  %226 = vmatpush.msra.mxu0 %v57
  %227 = vmatpush.msra.mxu0 %v53
  %228 = vmatpush.msra.mxu0 %v49
  %229 = vmatpush.msra.mxu0 %v45
  %230 = vmatpush.msra.mxu0 %v41
  %231 = vmatpush.msra.mxu0 %v37
  %232 = vmatpush.msra.mxu0 %v33
  %233 = vmatpush.msra.mxu0 %v29
  %234 = vmatpush.msra.mxu0 %v25
  %235 = vmatmul.f32.gmra.mxu0 %v14
  %v236 = vpop.f32.mrf.mxu0
  %v237 = vadd.f32 %v91, %v236
  %238 = vmatmul.f32.gmra.mxu0 %v15
  %v239 = vpop.f32.mrf.mxu0
  %v240 = vadd.f32 %v91, %v239
  %241 = vmatmul.f32.gmra.mxu0 %v16
  %v242 = vpop.f32.mrf.mxu0
  %v243 = vadd.f32 %v91, %v242
  %244 = vmatmul.f32.gmra.mxu0 %v17
  %v245 = vpop.f32.mrf.mxu0
  %v246 = vadd.f32 %v91, %v245
  %247 = vmatmul.f32.gmra.mxu0 %v18
  %v248 = vpop.f32.mrf.mxu0
  %v249 = vadd.f32 %v91, %v248
  %250 = vmatmul.f32.gmra.mxu0 %v19
  %v251 = vpop.f32.mrf.mxu0
  %v252 = vadd.f32 %v91, %v251
  %253 = vmatmul.f32.gmra.mxu0 %v20
  %v254 = vpop.f32.mrf.mxu0
  %v255 = vadd.f32 %v91, %v254
  %256 = vmatmul.f32.gmra.mxu0 %v21
  %v257 = vpop.f32.mrf.mxu0
  %v258 = vadd.f32 %v91, %v257
  %259 = vdwg.mxu0
  %260 = vst [vmem:[%s3] sm:$0xff] %v114
  %261 = vst [vmem:[%s3 + $0x8] sm:$0xff] %v155
  %262 = vst [vmem:[%s3 + $0x10] sm:$0xff] %v196
  %263 = vst [vmem:[%s3 + $0x18] sm:$0xff] %v237
  %264 = vst [vmem:[%s3 + $0x20] sm:$0xff] %v117
  %265 = vst [vmem:[%s3 + $0x28] sm:$0xff] %v158
  %266 = vst [vmem:[%s3 + $0x30] sm:$0xff] %v199
  %267 = vst [vmem:[%s3 + $0x38] sm:$0xff] %v240
  %268 = vst [vmem:[%s3 + $0x40] sm:$0xff] %v120
  %269 = vst [vmem:[%s3 + $0x48] sm:$0xff] %v161
  %270 = vst [vmem:[%s3 + $0x50] sm:$0xff] %v202
  %271 = vst [vmem:[%s3 + $0x58] sm:$0xff] %v243
  %272 = vst [vmem:[%s3 + $0x60] sm:$0xff] %v123
  %273 = vst [vmem:[%s3 + $0x68] sm:$0xff] %v164
  %274 = vst [vmem:[%s3 + $0x70] sm:$0xff] %v205
  %275 = vst [vmem:[%s3 + $0x78] sm:$0xff] %v246
  %276 = vst [vmem:[%s3 + $0x80] sm:$0xff] %v126
  %277 = vst [vmem:[%s3 + $0x88] sm:$0xff] %v167
  %278 = vst [vmem:[%s3 + $0x90] sm:$0xff] %v208
  %279 = vst [vmem:[%s3 + $0x98] sm:$0xff] %v249
  %280 = vst [vmem:[%s3 + $0xa0] sm:$0xff] %v129
  %281 = vst [vmem:[%s3 + $0xa8] sm:$0xff] %v170
  %282 = vst [vmem:[%s3 + $0xb0] sm:$0xff] %v211
  %283 = vst [vmem:[%s3 + $0xb8] sm:$0xff] %v252
  %284 = vst [vmem:[%s3 + $0xc0] sm:$0xff] %v132
  %285 = vst [vmem:[%s3 + $0xc8] sm:$0xff] %v173
  %286 = vst [vmem:[%s3 + $0xd0] sm:$0xff] %v214
  %287 = vst [vmem:[%s3 + $0xd8] sm:$0xff] %v255
  %288 = vst [vmem:[%s3 + $0xe0] sm:$0xff] %v135
  %289 = vst [vmem:[%s3 + $0xe8] sm:$0xff] %v176
  %290 = vst [vmem:[%s3 + $0xf0] sm:$0xff] %v217
  %291 = vst [vmem:[%s3 + $0xf8] sm:$0xff] %v258
  // Predicated region
  $region14: #{decoder_rnn_forward.5} parent=0 // pred_check
    _
  $region15: #{decoder_rnn_forward.5} parent=0 // pred_check_branch
    %293 = sbr.rel (0) target = $region17
  $region16: #{decoder_rnn_forward.5} parent=0 // pred_region
    _
  $region17: #{decoder_rnn_forward.5} parent=0 // pred_fallthru
    _
  // Predicated region
  $region18: #{decoder_rnn_forward.5} parent=0 // pred_check
    _
  $region19: #{decoder_rnn_forward.5} parent=0 // pred_check_branch
    %295 = sbr.rel (0) target = $region21
  $region20: #{decoder_rnn_forward.5} parent=0 // pred_region
    _
  $region21: #{decoder_rnn_forward.5} parent=0 // pred_fallthru
    _

// kernel: decoder_rnn_forward.4
$region0: #{decoder_rnn_forward.4}
  #allocation0 [shape = 'u32[]', space=smem, size = 0x4, offset = 0x4, fixed_abs, tag = 'smem constant byte address 0x4 - core index']
  #allocation1 [shape = 'u32[72,128]{1,0:T(1,128)}', space=vmem, size = 0x9000, scoped, tag = 'internal scratch']
  #allocation2 [shape = 'f32[8,128]{1,0:T(8,128)}', space=vmem, size = 0x1000, scoped, tag = 'scratch operand']
  #allocation3 [shape = 'f32[8,128]{1,0:T(8,128)}', space=vmem, size = 0x1000, scoped, tag = 'scratch operand']
  %s0 = inlined_call_operand.vmem [shape: f32[8,8,512], index: 0, kind: input, shape index: {}]
  %s1 = inlined_call_operand.vmem [shape: f32[128,512], index: 1, kind: input, shape index: {}]
  %s2 = inlined_call_operand.vmem [shape: f32[8,8,128], index: 2, kind: output, shape index: {}]
  %s3 = sld [smem:[#allocation0]]
  $region22: #{decoder_rnn_forward.4} parent=0
    _
  %s5 = ssub.s32 1, %s3
  %s6 = scalar_select 0, %s5, %s3
  // Predicated region
  $region2: #{decoder_rnn_forward.4} parent=0 // pred_check
    _
  $region3: #{decoder_rnn_forward.4} parent=0 // pred_check_branch
    %8 = sbr.rel (0) target = $region5
  $region4: #{decoder_rnn_forward.4} parent=0 // pred_region
    _
  $region5: #{decoder_rnn_forward.4} parent=0 // pred_fallthru
    _
  // Predicated region
  $region6: #{decoder_rnn_forward.4} parent=0 // pred_check
    _
  $region7: #{decoder_rnn_forward.4} parent=0 // pred_check_branch
    %10 = sbr.rel (0) target = $region9
  $region8: #{decoder_rnn_forward.4} parent=0 // pred_region
    _
  $region9: #{decoder_rnn_forward.4} parent=0 // pred_fallthru
    _
  %p11 = scmp.eq.s32.totalorder 0, 0
  // Predicated region
  $region10: #{decoder_rnn_forward.4} parent=0 // pred_check
    %p12 = pneg %p11
  $region11: #{decoder_rnn_forward.4} parent=0 // pred_check_branch
    %14 = sbr.rel (%p12) target = $region13
  $region12: #{decoder_rnn_forward.4} parent=0 // pred_region
    %15 = vst [vmem:[#allocation2] sm:$0xff] 0.0
    %16 = vst [vmem:[#allocation3] sm:$0xff] 0.0
  $region13: #{decoder_rnn_forward.4} parent=0 // pred_fallthru
    _
  %v17 = vld [vmem:[#allocation2] sm:$0xff]
  %v18 = vld [vmem:[#allocation3] sm:$0xff]
  %v19 = vld [vmem:[%s0] sm:$0xff]
  %v20 = vld [vmem:[%s0 + $0x8] sm:$0xff]
  %v21 = vld [vmem:[%s0 + $0x10] sm:$0xff]
  %v22 = vld [vmem:[%s0 + $0x18] sm:$0xff]
  %v23 = vld [vmem:[%s1] sm:$0xff]
  %v24 = vld [vmem:[%s1 + $0x8] sm:$0xff]
  %v25 = vld [vmem:[%s1 + $0x10] sm:$0xff]
  %v26 = vld [vmem:[%s1 + $0x18] sm:$0xff]
  %v27 = vld [vmem:[%s1 + $0x20] sm:$0xff]
  %v28 = vld [vmem:[%s1 + $0x28] sm:$0xff]
  %v29 = vld [vmem:[%s1 + $0x30] sm:$0xff]
  %v30 = vld [vmem:[%s1 + $0x38] sm:$0xff]
  %v31 = vld [vmem:[%s1 + $0x40] sm:$0xff]
  %v32 = vld [vmem:[%s1 + $0x48] sm:$0xff]
  %v33 = vld [vmem:[%s1 + $0x50] sm:$0xff]
  %v34 = vld [vmem:[%s1 + $0x58] sm:$0xff]
  %v35 = vld [vmem:[%s1 + $0x60] sm:$0xff]
  %v36 = vld [vmem:[%s1 + $0x68] sm:$0xff]
  %v37 = vld [vmem:[%s1 + $0x70] sm:$0xff]
  %v38 = vld [vmem:[%s1 + $0x78] sm:$0xff]
  %v39 = vld [vmem:[%s1 + $0x80] sm:$0xff]
  %v40 = vld [vmem:[%s1 + $0x88] sm:$0xff]
  %v41 = vld [vmem:[%s1 + $0x90] sm:$0xff]
  %v42 = vld [vmem:[%s1 + $0x98] sm:$0xff]
  %v43 = vld [vmem:[%s1 + $0xa0] sm:$0xff]
  %v44 = vld [vmem:[%s1 + $0xa8] sm:$0xff]
  %v45 = vld [vmem:[%s1 + $0xb0] sm:$0xff]
  %v46 = vld [vmem:[%s1 + $0xb8] sm:$0xff]
  %v47 = vld [vmem:[%s1 + $0xc0] sm:$0xff]
  %v48 = vld [vmem:[%s1 + $0xc8] sm:$0xff]
  %v49 = vld [vmem:[%s1 + $0xd0] sm:$0xff]
  %v50 = vld [vmem:[%s1 + $0xd8] sm:$0xff]
  %v51 = vld [vmem:[%s1 + $0xe0] sm:$0xff]
  %v52 = vld [vmem:[%s1 + $0xe8] sm:$0xff]
  %v53 = vld [vmem:[%s1 + $0xf0] sm:$0xff]
  %v54 = vld [vmem:[%s1 + $0xf8] sm:$0xff]
  %v55 = vld [vmem:[%s1 + $0x100] sm:$0xff]
  %v56 = vld [vmem:[%s1 + $0x108] sm:$0xff]
  %v57 = vld [vmem:[%s1 + $0x110] sm:$0xff]
  %v58 = vld [vmem:[%s1 + $0x118] sm:$0xff]
  %v59 = vld [vmem:[%s1 + $0x120] sm:$0xff]
  %v60 = vld [vmem:[%s1 + $0x128] sm:$0xff]
  %v61 = vld [vmem:[%s1 + $0x130] sm:$0xff]
  %v62 = vld [vmem:[%s1 + $0x138] sm:$0xff]
  %v63 = vld [vmem:[%s1 + $0x140] sm:$0xff]
  %v64 = vld [vmem:[%s1 + $0x148] sm:$0xff]
  %v65 = vld [vmem:[%s1 + $0x150] sm:$0xff]
  %v66 = vld [vmem:[%s1 + $0x158] sm:$0xff]
  %v67 = vld [vmem:[%s1 + $0x160] sm:$0xff]
  %v68 = vld [vmem:[%s1 + $0x168] sm:$0xff]
  %v69 = vld [vmem:[%s1 + $0x170] sm:$0xff]
  %v70 = vld [vmem:[%s1 + $0x178] sm:$0xff]
  %v71 = vld [vmem:[%s1 + $0x180] sm:$0xff]
  %v72 = vld [vmem:[%s1 + $0x188] sm:$0xff]
  %v73 = vld [vmem:[%s1 + $0x190] sm:$0xff]
  %v74 = vld [vmem:[%s1 + $0x198] sm:$0xff]
  %v75 = vld [vmem:[%s1 + $0x1a0] sm:$0xff]
  %v76 = vld [vmem:[%s1 + $0x1a8] sm:$0xff]
  %v77 = vld [vmem:[%s1 + $0x1b0] sm:$0xff]
  %v78 = vld [vmem:[%s1 + $0x1b8] sm:$0xff]
  %v79 = vld [vmem:[%s1 + $0x1c0] sm:$0xff]
  %v80 = vld [vmem:[%s1 + $0x1c8] sm:$0xff]
  %v81 = vld [vmem:[%s1 + $0x1d0] sm:$0xff]
  %v82 = vld [vmem:[%s1 + $0x1d8] sm:$0xff]
  %v83 = vld [vmem:[%s1 + $0x1e0] sm:$0xff]
  %v84 = vld [vmem:[%s1 + $0x1e8] sm:$0xff]
  %v85 = vld [vmem:[%s1 + $0x1f0] sm:$0xff]
  %v86 = vld [vmem:[%s1 + $0x1f8] sm:$0xff]
  %87 = vmatpush.msra.mxu0 %v83
  %88 = vmatpush.msra.mxu0 %v79
  %89 = vmatpush.msra.mxu0 %v75
  %90 = vmatpush.msra.mxu0 %v71
  %91 = vmatpush.msra.mxu0 %v67
  %92 = vmatpush.msra.mxu0 %v63
  %93 = vmatpush.msra.mxu0 %v59
  %94 = vmatpush.msra.mxu0 %v55
  %95 = vmatpush.msra.mxu0 %v51
  %96 = vmatpush.msra.mxu0 %v47
  %97 = vmatpush.msra.mxu0 %v43
  %98 = vmatpush.msra.mxu0 %v39
  %99 = vmatpush.msra.mxu0 %v35
  %100 = vmatpush.msra.mxu0 %v31
  %101 = vmatpush.msra.mxu0 %v27
  %102 = vmatpush.msra.mxu0 %v23
  %103 = vmatmul.f32.gmra.mxu0 %v17
  %v104 = vpop.f32.mrf.mxu0
  %v105 = vadd.f32 0.0, %v104
  %106 = vdwg.mxu0
  %107 = vmatpush.msra.mxu0 %v84
  %108 = vmatpush.msra.mxu0 %v80
  %109 = vmatpush.msra.mxu0 %v76
  %110 = vmatpush.msra.mxu0 %v72
  %111 = vmatpush.msra.mxu0 %v68
  %112 = vmatpush.msra.mxu0 %v64
  %113 = vmatpush.msra.mxu0 %v60
  %114 = vmatpush.msra.mxu0 %v56
  %115 = vmatpush.msra.mxu0 %v52
  %116 = vmatpush.msra.mxu0 %v48
  %117 = vmatpush.msra.mxu0 %v44
  %118 = vmatpush.msra.mxu0 %v40
  %119 = vmatpush.msra.mxu0 %v36
  %120 = vmatpush.msra.mxu0 %v32
  %121 = vmatpush.msra.mxu0 %v28
  %122 = vmatpush.msra.mxu0 %v24
  %123 = vmatmul.f32.gmra.mxu0 %v17
  %v124 = vpop.f32.mrf.mxu0
  %v125 = vadd.f32 0.0, %v124
  %126 = vdwg.mxu0
  %127 = vmatpush.msra.mxu0 %v85
  %128 = vmatpush.msra.mxu0 %v81
  %129 = vmatpush.msra.mxu0 %v77
  %130 = vmatpush.msra.mxu0 %v73
  %131 = vmatpush.msra.mxu0 %v69
  %132 = vmatpush.msra.mxu0 %v65
  %133 = vmatpush.msra.mxu0 %v61
  %134 = vmatpush.msra.mxu0 %v57
  %135 = vmatpush.msra.mxu0 %v53
  %136 = vmatpush.msra.mxu0 %v49
  %137 = vmatpush.msra.mxu0 %v45
  %138 = vmatpush.msra.mxu0 %v41
  %139 = vmatpush.msra.mxu0 %v37
  %140 = vmatpush.msra.mxu0 %v33
  %141 = vmatpush.msra.mxu0 %v29
  %142 = vmatpush.msra.mxu0 %v25
  %143 = vmatmul.f32.gmra.mxu0 %v17
  %v144 = vpop.f32.mrf.mxu0
  %v145 = vadd.f32 0.0, %v144
  %146 = vdwg.mxu0
  %147 = vmatpush.msra.mxu0 %v86
  %148 = vmatpush.msra.mxu0 %v82
  %149 = vmatpush.msra.mxu0 %v78
  %150 = vmatpush.msra.mxu0 %v74
  %151 = vmatpush.msra.mxu0 %v70
  %152 = vmatpush.msra.mxu0 %v66
  %153 = vmatpush.msra.mxu0 %v62
  %154 = vmatpush.msra.mxu0 %v58
  %155 = vmatpush.msra.mxu0 %v54
  %156 = vmatpush.msra.mxu0 %v50
  %157 = vmatpush.msra.mxu0 %v46
  %158 = vmatpush.msra.mxu0 %v42
  %159 = vmatpush.msra.mxu0 %v38
  %160 = vmatpush.msra.mxu0 %v34
  %161 = vmatpush.msra.mxu0 %v30
  %162 = vmatpush.msra.mxu0 %v26
  %163 = vmatmul.f32.gmra.mxu0 %v17
  %v164 = vpop.f32.mrf.mxu0
  %v165 = vadd.f32 0.0, %v164
  %166 = vdwg.mxu0
  %v167 = vadd.f32 %v19, %v105
  %v168 = vadd.f32 %v20, %v125
  %v169 = vadd.f32 %v21, %v145
  %v170 = vadd.f32 %v22, %v165
  %v171 = vxor.u32 %v167, 2147483648
  %v172 = vmul.f32 %v171, 1.442695
  %v173 = vpow.pop %v172
  %v174 = vadd.f32 %v173, 1.0
  %v175 = vrcp.pop %v174
  %v176 = vmul.f32 %v174, %v175
  %v177 = vsub.f32 1.0, %v176
  %v178 = vmul.f32 %v175, %v177
  %v179 = vadd.f32 %v175, %v178
  %vm180 = vweird.f32 %v174
  %vm181 = vweird.f32 %v175
  %vm182 = vmor %vm180, %vm181
  %v183 = vsel %vm182, %v175, %v179
  %v184 = vand.u32 2147483647, %v174
  %vm185 = vcmp.eq.f32.partialorder %v184, 8.507059e+37
  %v186 = vand.u32 %v174, 2147483648
  %v187 = vor.u32 1.1754944e-38, %v186
  %v188 = vsel %vm185, %v187, %v183
  %v189 = vmul.f32 1.0, %v188
  %v190 = vxor.u32 %v168, 2147483648
  %v191 = vmul.f32 %v190, 1.442695
  %v192 = vpow.pop %v191
  %v193 = vadd.f32 %v192, 1.0
  %v194 = vrcp.pop %v193
  %v195 = vmul.f32 %v193, %v194
  %v196 = vsub.f32 1.0, %v195
  %v197 = vmul.f32 %v194, %v196
  %v198 = vadd.f32 %v194, %v197
  %vm199 = vweird.f32 %v193
  %vm200 = vweird.f32 %v194
  %vm201 = vmor %vm199, %vm200
  %v202 = vsel %vm201, %v194, %v198
  %v203 = vand.u32 2147483647, %v193
  %vm204 = vcmp.eq.f32.partialorder %v203, 8.507059e+37
  %v205 = vand.u32 %v193, 2147483648
  %v206 = vor.u32 1.1754944e-38, %v205
  %v207 = vsel %vm204, %v206, %v202
  %v208 = vmul.f32 1.0, %v207
  %v209 = vtanh.pop %v169
  %v210 = vxor.u32 %v170, 2147483648
  %v211 = vmul.f32 %v210, 1.442695
  %v212 = vpow.pop %v211
  %v213 = vadd.f32 %v212, 1.0
  %v214 = vrcp.pop %v213
  %v215 = vmul.f32 %v213, %v214
  %v216 = vsub.f32 1.0, %v215
  %v217 = vmul.f32 %v214, %v216
  %v218 = vadd.f32 %v214, %v217
  %vm219 = vweird.f32 %v213
  %vm220 = vweird.f32 %v214
  %vm221 = vmor %vm219, %vm220
  %v222 = vsel %vm221, %v214, %v218
  %v223 = vand.u32 2147483647, %v213
  %vm224 = vcmp.eq.f32.partialorder %v223, 8.507059e+37
  %v225 = vand.u32 %v213, 2147483648
  %v226 = vor.u32 1.1754944e-38, %v225
  %v227 = vsel %vm224, %v226, %v222
  %v228 = vmul.f32 1.0, %v227
  %v229 = vmul.f32 %v208, %v18
  %v230 = vmul.f32 %v189, %v209
  %v231 = vadd.f32 %v229, %v230
  %v232 = vtanh.pop %v231
  %v233 = vmul.f32 %v228, %v232
  %234 = vst [vmem:[#allocation2] sm:$0xff] %v233
  %235 = vst [vmem:[#allocation3] sm:$0xff] %v231
  %236 = vst [vmem:[%s2] sm:$0xff] %v233
  %v237 = vld [vmem:[#allocation2] sm:$0xff]
  %v238 = vld [vmem:[#allocation3] sm:$0xff]
  %s239 = scalar_lea.vmem %s0, 32
  %v240 = vld [vmem:[%s239] sm:$0xff]
  %v241 = vld [vmem:[%s239 + $0x8] sm:$0xff]
  %v242 = vld [vmem:[%s239 + $0x10] sm:$0xff]
  %v243 = vld [vmem:[%s239 + $0x18] sm:$0xff]
  %v244 = vld [vmem:[%s1] sm:$0xff]
  %v245 = vld [vmem:[%s1 + $0x8] sm:$0xff]
  %v246 = vld [vmem:[%s1 + $0x10] sm:$0xff]
  %v247 = vld [vmem:[%s1 + $0x18] sm:$0xff]
  %v248 = vld [vmem:[%s1 + $0x20] sm:$0xff]
  %v249 = vld [vmem:[%s1 + $0x28] sm:$0xff]
  %v250 = vld [vmem:[%s1 + $0x30] sm:$0xff]
  %v251 = vld [vmem:[%s1 + $0x38] sm:$0xff]
  %v252 = vld [vmem:[%s1 + $0x40] sm:$0xff]
  %v253 = vld [vmem:[%s1 + $0x48] sm:$0xff]
  %v254 = vld [vmem:[%s1 + $0x50] sm:$0xff]
  %v255 = vld [vmem:[%s1 + $0x58] sm:$0xff]
  %v256 = vld [vmem:[%s1 + $0x60] sm:$0xff]
  %v257 = vld [vmem:[%s1 + $0x68] sm:$0xff]
  %v258 = vld [vmem:[%s1 + $0x70] sm:$0xff]
  %v259 = vld [vmem:[%s1 + $0x78] sm:$0xff]
  %v260 = vld [vmem:[%s1 + $0x80] sm:$0xff]
  %v261 = vld [vmem:[%s1 + $0x88] sm:$0xff]
  %v262 = vld [vmem:[%s1 + $0x90] sm:$0xff]
  %v263 = vld [vmem:[%s1 + $0x98] sm:$0xff]
  %v264 = vld [vmem:[%s1 + $0xa0] sm:$0xff]
  %v265 = vld [vmem:[%s1 + $0xa8] sm:$0xff]
  %v266 = vld [vmem:[%s1 + $0xb0] sm:$0xff]
  %v267 = vld [vmem:[%s1 + $0xb8] sm:$0xff]
  %v268 = vld [vmem:[%s1 + $0xc0] sm:$0xff]
  %v269 = vld [vmem:[%s1 + $0xc8] sm:$0xff]
  %v270 = vld [vmem:[%s1 + $0xd0] sm:$0xff]
  %v271 = vld [vmem:[%s1 + $0xd8] sm:$0xff]
  %v272 = vld [vmem:[%s1 + $0xe0] sm:$0xff]
  %v273 = vld [vmem:[%s1 + $0xe8] sm:$0xff]
  %v274 = vld [vmem:[%s1 + $0xf0] sm:$0xff]
  %v275 = vld [vmem:[%s1 + $0xf8] sm:$0xff]
  %v276 = vld [vmem:[%s1 + $0x100] sm:$0xff]
  %v277 = vld [vmem:[%s1 + $0x108] sm:$0xff]
  %v278 = vld [vmem:[%s1 + $0x110] sm:$0xff]
  %v279 = vld [vmem:[%s1 + $0x118] sm:$0xff]
  %v280 = vld [vmem:[%s1 + $0x120] sm:$0xff]
  %v281 = vld [vmem:[%s1 + $0x128] sm:$0xff]
  %v282 = vld [vmem:[%s1 + $0x130] sm:$0xff]
  %v283 = vld [vmem:[%s1 + $0x138] sm:$0xff]
  %v284 = vld [vmem:[%s1 + $0x140] sm:$0xff]
  %v285 = vld [vmem:[%s1 + $0x148] sm:$0xff]
  %v286 = vld [vmem:[%s1 + $0x150] sm:$0xff]
  %v287 = vld [vmem:[%s1 + $0x158] sm:$0xff]
  %v288 = vld [vmem:[%s1 + $0x160] sm:$0xff]
  %v289 = vld [vmem:[%s1 + $0x168] sm:$0xff]
  %v290 = vld [vmem:[%s1 + $0x170] sm:$0xff]
  %v291 = vld [vmem:[%s1 + $0x178] sm:$0xff]
  %v292 = vld [vmem:[%s1 + $0x180] sm:$0xff]
  %v293 = vld [vmem:[%s1 + $0x188] sm:$0xff]
  %v294 = vld [vmem:[%s1 + $0x190] sm:$0xff]
  %v295 = vld [vmem:[%s1 + $0x198] sm:$0xff]
  %v296 = vld [vmem:[%s1 + $0x1a0] sm:$0xff]
  %v297 = vld [vmem:[%s1 + $0x1a8] sm:$0xff]
  %v298 = vld [vmem:[%s1 + $0x1b0] sm:$0xff]
  %v299 = vld [vmem:[%s1 + $0x1b8] sm:$0xff]
  %v300 = vld [vmem:[%s1 + $0x1c0] sm:$0xff]
  %v301 = vld [vmem:[%s1 + $0x1c8] sm:$0xff]
  %v302 = vld [vmem:[%s1 + $0x1d0] sm:$0xff]
  %v303 = vld [vmem:[%s1 + $0x1d8] sm:$0xff]
  %v304 = vld [vmem:[%s1 + $0x1e0] sm:$0xff]
  %v305 = vld [vmem:[%s1 + $0x1e8] sm:$0xff]
  %v306 = vld [vmem:[%s1 + $0x1f0] sm:$0xff]
  %v307 = vld [vmem:[%s1 + $0x1f8] sm:$0xff]
  %308 = vmatpush.msra.mxu0 %v304
  %309 = vmatpush.msra.mxu0 %v300
  %310 = vmatpush.msra.mxu0 %v296
  %311 = vmatpush.msra.mxu0 %v292
  %312 = vmatpush.msra.mxu0 %v288
  %313 = vmatpush.msra.mxu0 %v284
  %314 = vmatpush.msra.mxu0 %v280
  %315 = vmatpush.msra.mxu0 %v276
  %316 = vmatpush.msra.mxu0 %v272
  %317 = vmatpush.msra.mxu0 %v268
  %318 = vmatpush.msra.mxu0 %v264
  %319 = vmatpush.msra.mxu0 %v260
  %320 = vmatpush.msra.mxu0 %v256
  %321 = vmatpush.msra.mxu0 %v252
  %322 = vmatpush.msra.mxu0 %v248
  %323 = vmatpush.msra.mxu0 %v244
  %324 = vmatmul.f32.gmra.mxu0 %v237
  %v325 = vpop.f32.mrf.mxu0
  %v326 = vadd.f32 0.0, %v325
  %327 = vdwg.mxu0
  %328 = vmatpush.msra.mxu0 %v305
  %329 = vmatpush.msra.mxu0 %v301
  %330 = vmatpush.msra.mxu0 %v297
  %331 = vmatpush.msra.mxu0 %v293
  %332 = vmatpush.msra.mxu0 %v289
  %333 = vmatpush.msra.mxu0 %v285
  %334 = vmatpush.msra.mxu0 %v281
  %335 = vmatpush.msra.mxu0 %v277
  %336 = vmatpush.msra.mxu0 %v273
  %337 = vmatpush.msra.mxu0 %v269
  %338 = vmatpush.msra.mxu0 %v265
  %339 = vmatpush.msra.mxu0 %v261
  %340 = vmatpush.msra.mxu0 %v257
  %341 = vmatpush.msra.mxu0 %v253
  %342 = vmatpush.msra.mxu0 %v249
  %343 = vmatpush.msra.mxu0 %v245
  %344 = vmatmul.f32.gmra.mxu0 %v237
  %v345 = vpop.f32.mrf.mxu0
  %v346 = vadd.f32 0.0, %v345
  %347 = vdwg.mxu0
  %348 = vmatpush.msra.mxu0 %v306
  %349 = vmatpush.msra.mxu0 %v302
  %350 = vmatpush.msra.mxu0 %v298
  %351 = vmatpush.msra.mxu0 %v294
  %352 = vmatpush.msra.mxu0 %v290
  %353 = vmatpush.msra.mxu0 %v286
  %354 = vmatpush.msra.mxu0 %v282
  %355 = vmatpush.msra.mxu0 %v278
  %356 = vmatpush.msra.mxu0 %v274
  %357 = vmatpush.msra.mxu0 %v270
  %358 = vmatpush.msra.mxu0 %v266
  %359 = vmatpush.msra.mxu0 %v262
  %360 = vmatpush.msra.mxu0 %v258
  %361 = vmatpush.msra.mxu0 %v254
  %362 = vmatpush.msra.mxu0 %v250
  %363 = vmatpush.msra.mxu0 %v246
  %364 = vmatmul.f32.gmra.mxu0 %v237
  %v365 = vpop.f32.mrf.mxu0
  %v366 = vadd.f32 0.0, %v365
  %367 = vdwg.mxu0
  %368 = vmatpush.msra.mxu0 %v307
  %369 = vmatpush.msra.mxu0 %v303
  %370 = vmatpush.msra.mxu0 %v299
  %371 = vmatpush.msra.mxu0 %v295
  %372 = vmatpush.msra.mxu0 %v291
  %373 = vmatpush.msra.mxu0 %v287
  %374 = vmatpush.msra.mxu0 %v283
  %375 = vmatpush.msra.mxu0 %v279
  %376 = vmatpush.msra.mxu0 %v275
  %377 = vmatpush.msra.mxu0 %v271
  %378 = vmatpush.msra.mxu0 %v267
  %379 = vmatpush.msra.mxu0 %v263
  %380 = vmatpush.msra.mxu0 %v259
  %381 = vmatpush.msra.mxu0 %v255
  %382 = vmatpush.msra.mxu0 %v251
  %383 = vmatpush.msra.mxu0 %v247
  %384 = vmatmul.f32.gmra.mxu0 %v237
  %v385 = vpop.f32.mrf.mxu0
  %v386 = vadd.f32 0.0, %v385
  %387 = vdwg.mxu0
  %v388 = vadd.f32 %v240, %v326
  %v389 = vadd.f32 %v241, %v346
  %v390 = vadd.f32 %v242, %v366
  %v391 = vadd.f32 %v243, %v386
  %v392 = vxor.u32 %v388, 2147483648
  %v393 = vmul.f32 %v392, 1.442695
  %v394 = vpow.pop %v393
  %v395 = vadd.f32 %v394, 1.0
  %v396 = vrcp.pop %v395
  %v397 = vmul.f32 %v395, %v396
  %v398 = vsub.f32 1.0, %v397
  %v399 = vmul.f32 %v396, %v398
  %v400 = vadd.f32 %v396, %v399
  %vm401 = vweird.f32 %v395
  %vm402 = vweird.f32 %v396
  %vm403 = vmor %vm401, %vm402
  %v404 = vsel %vm403, %v396, %v400
  %v405 = vand.u32 2147483647, %v395
  %vm406 = vcmp.eq.f32.partialorder %v405, 8.507059e+37
  %v407 = vand.u32 %v395, 2147483648
  %v408 = vor.u32 1.1754944e-38, %v407
  %v409 = vsel %vm406, %v408, %v404
  %v410 = vmul.f32 1.0, %v409
  %v411 = vxor.u32 %v389, 2147483648
  %v412 = vmul.f32 %v411, 1.442695
  %v413 = vpow.pop %v412
  %v414 = vadd.f32 %v413, 1.0
  %v415 = vrcp.pop %v414
  %v416 = vmul.f32 %v414, %v415
  %v417 = vsub.f32 1.0, %v416
  %v418 = vmul.f32 %v415, %v417
  %v419 = vadd.f32 %v415, %v418
  %vm420 = vweird.f32 %v414
  %vm421 = vweird.f32 %v415
  %vm422 = vmor %vm420, %vm421
  %v423 = vsel %vm422, %v415, %v419
  %v424 = vand.u32 2147483647, %v414
  %vm425 = vcmp.eq.f32.partialorder %v424, 8.507059e+37
  %v426 = vand.u32 %v414, 2147483648
  %v427 = vor.u32 1.1754944e-38, %v426
  %v428 = vsel %vm425, %v427, %v423
  %v429 = vmul.f32 1.0, %v428
  %v430 = vtanh.pop %v390
  %v431 = vxor.u32 %v391, 2147483648
  %v432 = vmul.f32 %v431, 1.442695
  %v433 = vpow.pop %v432
  %v434 = vadd.f32 %v433, 1.0
  %v435 = vrcp.pop %v434
  %v436 = vmul.f32 %v434, %v435
  %v437 = vsub.f32 1.0, %v436
  %v438 = vmul.f32 %v435, %v437
  %v439 = vadd.f32 %v435, %v438
  %vm440 = vweird.f32 %v434
  %vm441 = vweird.f32 %v435
  %vm442 = vmor %vm440, %vm441
  %v443 = vsel %vm442, %v435, %v439
  %v444 = vand.u32 2147483647, %v434
  %vm445 = vcmp.eq.f32.partialorder %v444, 8.507059e+37
  %v446 = vand.u32 %v434, 2147483648
  %v447 = vor.u32 1.1754944e-38, %v446
  %v448 = vsel %vm445, %v447, %v443
  %v449 = vmul.f32 1.0, %v448
  %v450 = vmul.f32 %v429, %v238
  %v451 = vmul.f32 %v410, %v430
  %v452 = vadd.f32 %v450, %v451
  %v453 = vtanh.pop %v452
  %v454 = vmul.f32 %v449, %v453
  %455 = vst [vmem:[#allocation2] sm:$0xff] %v454
  %456 = vst [vmem:[#allocation3] sm:$0xff] %v452
  %s457 = scalar_lea.vmem %s2, 8
  %458 = vst [vmem:[%s457] sm:$0xff] %v454
  %v459 = vld [vmem:[#allocation2] sm:$0xff]
  %v460 = vld [vmem:[#allocation3] sm:$0xff]
  %s461 = scalar_lea.vmem %s0, 64
  %v462 = vld [vmem:[%s461] sm:$0xff]
  %v463 = vld [vmem:[%s461 + $0x8] sm:$0xff]
  %v464 = vld [vmem:[%s461 + $0x10] sm:$0xff]
  %v465 = vld [vmem:[%s461 + $0x18] sm:$0xff]
  %v466 = vld [vmem:[%s1] sm:$0xff]
  %v467 = vld [vmem:[%s1 + $0x8] sm:$0xff]
  %v468 = vld [vmem:[%s1 + $0x10] sm:$0xff]
  %v469 = vld [vmem:[%s1 + $0x18] sm:$0xff]
  %v470 = vld [vmem:[%s1 + $0x20] sm:$0xff]
  %v471 = vld [vmem:[%s1 + $0x28] sm:$0xff]
  %v472 = vld [vmem:[%s1 + $0x30] sm:$0xff]
  %v473 = vld [vmem:[%s1 + $0x38] sm:$0xff]
  %v474 = vld [vmem:[%s1 + $0x40] sm:$0xff]
  %v475 = vld [vmem:[%s1 + $0x48] sm:$0xff]
  %v476 = vld [vmem:[%s1 + $0x50] sm:$0xff]
  %v477 = vld [vmem:[%s1 + $0x58] sm:$0xff]
  %v478 = vld [vmem:[%s1 + $0x60] sm:$0xff]
  %v479 = vld [vmem:[%s1 + $0x68] sm:$0xff]
  %v480 = vld [vmem:[%s1 + $0x70] sm:$0xff]
  %v481 = vld [vmem:[%s1 + $0x78] sm:$0xff]
  %v482 = vld [vmem:[%s1 + $0x80] sm:$0xff]
  %v483 = vld [vmem:[%s1 + $0x88] sm:$0xff]
  %v484 = vld [vmem:[%s1 + $0x90] sm:$0xff]
  %v485 = vld [vmem:[%s1 + $0x98] sm:$0xff]
  %v486 = vld [vmem:[%s1 + $0xa0] sm:$0xff]
  %v487 = vld [vmem:[%s1 + $0xa8] sm:$0xff]
  %v488 = vld [vmem:[%s1 + $0xb0] sm:$0xff]
  %v489 = vld [vmem:[%s1 + $0xb8] sm:$0xff]
  %v490 = vld [vmem:[%s1 + $0xc0] sm:$0xff]
  %v491 = vld [vmem:[%s1 + $0xc8] sm:$0xff]
  %v492 = vld [vmem:[%s1 + $0xd0] sm:$0xff]
  %v493 = vld [vmem:[%s1 + $0xd8] sm:$0xff]
  %v494 = vld [vmem:[%s1 + $0xe0] sm:$0xff]
  %v495 = vld [vmem:[%s1 + $0xe8] sm:$0xff]
  %v496 = vld [vmem:[%s1 + $0xf0] sm:$0xff]
  %v497 = vld [vmem:[%s1 + $0xf8] sm:$0xff]
  %v498 = vld [vmem:[%s1 + $0x100] sm:$0xff]
  %v499 = vld [vmem:[%s1 + $0x108] sm:$0xff]
  %v500 = vld [vmem:[%s1 + $0x110] sm:$0xff]
  %v501 = vld [vmem:[%s1 + $0x118] sm:$0xff]
  %v502 = vld [vmem:[%s1 + $0x120] sm:$0xff]
  %v503 = vld [vmem:[%s1 + $0x128] sm:$0xff]
  %v504 = vld [vmem:[%s1 + $0x130] sm:$0xff]
  %v505 = vld [vmem:[%s1 + $0x138] sm:$0xff]
  %v506 = vld [vmem:[%s1 + $0x140] sm:$0xff]
  %v507 = vld [vmem:[%s1 + $0x148] sm:$0xff]
  %v508 = vld [vmem:[%s1 + $0x150] sm:$0xff]
  %v509 = vld [vmem:[%s1 + $0x158] sm:$0xff]
  %v510 = vld [vmem:[%s1 + $0x160] sm:$0xff]
  %v511 = vld [vmem:[%s1 + $0x168] sm:$0xff]
  %v512 = vld [vmem:[%s1 + $0x170] sm:$0xff]
  %v513 = vld [vmem:[%s1 + $0x178] sm:$0xff]
  %v514 = vld [vmem:[%s1 + $0x180] sm:$0xff]
  %v515 = vld [vmem:[%s1 + $0x188] sm:$0xff]
  %v516 = vld [vmem:[%s1 + $0x190] sm:$0xff]
  %v517 = vld [vmem:[%s1 + $0x198] sm:$0xff]
  %v518 = vld [vmem:[%s1 + $0x1a0] sm:$0xff]
  %v519 = vld [vmem:[%s1 + $0x1a8] sm:$0xff]
  %v520 = vld [vmem:[%s1 + $0x1b0] sm:$0xff]
  %v521 = vld [vmem:[%s1 + $0x1b8] sm:$0xff]
  %v522 = vld [vmem:[%s1 + $0x1c0] sm:$0xff]
  %v523 = vld [vmem:[%s1 + $0x1c8] sm:$0xff]
  %v524 = vld [vmem:[%s1 + $0x1d0] sm:$0xff]
  %v525 = vld [vmem:[%s1 + $0x1d8] sm:$0xff]
  %v526 = vld [vmem:[%s1 + $0x1e0] sm:$0xff]
  %v527 = vld [vmem:[%s1 + $0x1e8] sm:$0xff]
  %v528 = vld [vmem:[%s1 + $0x1f0] sm:$0xff]
  %v529 = vld [vmem:[%s1 + $0x1f8] sm:$0xff]
  %530 = vmatpush.msra.mxu0 %v526
  %531 = vmatpush.msra.mxu0 %v522
  %532 = vmatpush.msra.mxu0 %v518
  %533 = vmatpush.msra.mxu0 %v514
  %534 = vmatpush.msra.mxu0 %v510
  %535 = vmatpush.msra.mxu0 %v506
  %536 = vmatpush.msra.mxu0 %v502
  %537 = vmatpush.msra.mxu0 %v498
  %538 = vmatpush.msra.mxu0 %v494
  %539 = vmatpush.msra.mxu0 %v490
  %540 = vmatpush.msra.mxu0 %v486
  %541 = vmatpush.msra.mxu0 %v482
  %542 = vmatpush.msra.mxu0 %v478
  %543 = vmatpush.msra.mxu0 %v474
  %544 = vmatpush.msra.mxu0 %v470
  %545 = vmatpush.msra.mxu0 %v466
  %546 = vmatmul.f32.gmra.mxu0 %v459
  %v547 = vpop.f32.mrf.mxu0
  %v548 = vadd.f32 0.0, %v547
  %549 = vdwg.mxu0
  %550 = vmatpush.msra.mxu0 %v527
  %551 = vmatpush.msra.mxu0 %v523
  %552 = vmatpush.msra.mxu0 %v519
  %553 = vmatpush.msra.mxu0 %v515
  %554 = vmatpush.msra.mxu0 %v511
  %555 = vmatpush.msra.mxu0 %v507
  %556 = vmatpush.msra.mxu0 %v503
  %557 = vmatpush.msra.mxu0 %v499
  %558 = vmatpush.msra.mxu0 %v495
  %559 = vmatpush.msra.mxu0 %v491
  %560 = vmatpush.msra.mxu0 %v487
  %561 = vmatpush.msra.mxu0 %v483
  %562 = vmatpush.msra.mxu0 %v479
  %563 = vmatpush.msra.mxu0 %v475
  %564 = vmatpush.msra.mxu0 %v471
  %565 = vmatpush.msra.mxu0 %v467
  %566 = vmatmul.f32.gmra.mxu0 %v459
  %v567 = vpop.f32.mrf.mxu0
  %v568 = vadd.f32 0.0, %v567
  %569 = vdwg.mxu0
  %570 = vmatpush.msra.mxu0 %v528
  %571 = vmatpush.msra.mxu0 %v524
  %572 = vmatpush.msra.mxu0 %v520
  %573 = vmatpush.msra.mxu0 %v516
  %574 = vmatpush.msra.mxu0 %v512
  %575 = vmatpush.msra.mxu0 %v508
  %576 = vmatpush.msra.mxu0 %v504
  %577 = vmatpush.msra.mxu0 %v500
  %578 = vmatpush.msra.mxu0 %v496
  %579 = vmatpush.msra.mxu0 %v492
  %580 = vmatpush.msra.mxu0 %v488
  %581 = vmatpush.msra.mxu0 %v484
  %582 = vmatpush.msra.mxu0 %v480
  %583 = vmatpush.msra.mxu0 %v476
  %584 = vmatpush.msra.mxu0 %v472
  %585 = vmatpush.msra.mxu0 %v468
  %586 = vmatmul.f32.gmra.mxu0 %v459
  %v587 = vpop.f32.mrf.mxu0
  %v588 = vadd.f32 0.0, %v587
  %589 = vdwg.mxu0
  %590 = vmatpush.msra.mxu0 %v529
  %591 = vmatpush.msra.mxu0 %v525
  %592 = vmatpush.msra.mxu0 %v521
  %593 = vmatpush.msra.mxu0 %v517
  %594 = vmatpush.msra.mxu0 %v513
  %595 = vmatpush.msra.mxu0 %v509
  %596 = vmatpush.msra.mxu0 %v505
  %597 = vmatpush.msra.mxu0 %v501
  %598 = vmatpush.msra.mxu0 %v497
  %599 = vmatpush.msra.mxu0 %v493
  %600 = vmatpush.msra.mxu0 %v489
  %601 = vmatpush.msra.mxu0 %v485
  %602 = vmatpush.msra.mxu0 %v481
  %603 = vmatpush.msra.mxu0 %v477
  %604 = vmatpush.msra.mxu0 %v473
  %605 = vmatpush.msra.mxu0 %v469
  %606 = vmatmul.f32.gmra.mxu0 %v459
  %v607 = vpop.f32.mrf.mxu0
  %v608 = vadd.f32 0.0, %v607
  %609 = vdwg.mxu0
  %v610 = vadd.f32 %v462, %v548
  %v611 = vadd.f32 %v463, %v568
  %v612 = vadd.f32 %v464, %v588
  %v613 = vadd.f32 %v465, %v608
  %v614 = vxor.u32 %v610, 2147483648
  %v615 = vmul.f32 %v614, 1.442695
  %v616 = vpow.pop %v615
  %v617 = vadd.f32 %v616, 1.0
  %v618 = vrcp.pop %v617
  %v619 = vmul.f32 %v617, %v618
  %v620 = vsub.f32 1.0, %v619
  %v621 = vmul.f32 %v618, %v620
  %v622 = vadd.f32 %v618, %v621
  %vm623 = vweird.f32 %v617
  %vm624 = vweird.f32 %v618
  %vm625 = vmor %vm623, %vm624
  %v626 = vsel %vm625, %v618, %v622
  %v627 = vand.u32 2147483647, %v617
  %vm628 = vcmp.eq.f32.partialorder %v627, 8.507059e+37
  %v629 = vand.u32 %v617, 2147483648
  %v630 = vor.u32 1.1754944e-38, %v629
  %v631 = vsel %vm628, %v630, %v626
  %v632 = vmul.f32 1.0, %v631
  %v633 = vxor.u32 %v611, 2147483648
  %v634 = vmul.f32 %v633, 1.442695
  %v635 = vpow.pop %v634
  %v636 = vadd.f32 %v635, 1.0
  %v637 = vrcp.pop %v636
  %v638 = vmul.f32 %v636, %v637
  %v639 = vsub.f32 1.0, %v638
  %v640 = vmul.f32 %v637, %v639
  %v641 = vadd.f32 %v637, %v640
  %vm642 = vweird.f32 %v636
  %vm643 = vweird.f32 %v637
  %vm644 = vmor %vm642, %vm643
  %v645 = vsel %vm644, %v637, %v641
  %v646 = vand.u32 2147483647, %v636
  %vm647 = vcmp.eq.f32.partialorder %v646, 8.507059e+37
  %v648 = vand.u32 %v636, 2147483648
  %v649 = vor.u32 1.1754944e-38, %v648
  %v650 = vsel %vm647, %v649, %v645
  %v651 = vmul.f32 1.0, %v650
  %v652 = vtanh.pop %v612
  %v653 = vxor.u32 %v613, 2147483648
  %v654 = vmul.f32 %v653, 1.442695
  %v655 = vpow.pop %v654
  %v656 = vadd.f32 %v655, 1.0
  %v657 = vrcp.pop %v656
  %v658 = vmul.f32 %v656, %v657
  %v659 = vsub.f32 1.0, %v658
  %v660 = vmul.f32 %v657, %v659
  %v661 = vadd.f32 %v657, %v660
  %vm662 = vweird.f32 %v656
  %vm663 = vweird.f32 %v657
  %vm664 = vmor %vm662, %vm663
  %v665 = vsel %vm664, %v657, %v661
  %v666 = vand.u32 2147483647, %v656
  %vm667 = vcmp.eq.f32.partialorder %v666, 8.507059e+37
  %v668 = vand.u32 %v656, 2147483648
  %v669 = vor.u32 1.1754944e-38, %v668
  %v670 = vsel %vm667, %v669, %v665
  %v671 = vmul.f32 1.0, %v670
  %v672 = vmul.f32 %v651, %v460
  %v673 = vmul.f32 %v632, %v652
  %v674 = vadd.f32 %v672, %v673
  %v675 = vtanh.pop %v674
  %v676 = vmul.f32 %v671, %v675
  %677 = vst [vmem:[#allocation2] sm:$0xff] %v676
  %678 = vst [vmem:[#allocation3] sm:$0xff] %v674
  %s679 = scalar_lea.vmem %s2, 16
  %680 = vst [vmem:[%s679] sm:$0xff] %v676
  %v681 = vld [vmem:[#allocation2] sm:$0xff]
  %v682 = vld [vmem:[#allocation3] sm:$0xff]
  %s683 = scalar_lea.vmem %s0, 96
  %v684 = vld [vmem:[%s683] sm:$0xff]
  %v685 = vld [vmem:[%s683 + $0x8] sm:$0xff]
  %v686 = vld [vmem:[%s683 + $0x10] sm:$0xff]
  %v687 = vld [vmem:[%s683 + $0x18] sm:$0xff]
  %v688 = vld [vmem:[%s1] sm:$0xff]
  %v689 = vld [vmem:[%s1 + $0x8] sm:$0xff]
  %v690 = vld [vmem:[%s1 + $0x10] sm:$0xff]
  %v691 = vld [vmem:[%s1 + $0x18] sm:$0xff]
  %v692 = vld [vmem:[%s1 + $0x20] sm:$0xff]
  %v693 = vld [vmem:[%s1 + $0x28] sm:$0xff]
  %v694 = vld [vmem:[%s1 + $0x30] sm:$0xff]
  %v695 = vld [vmem:[%s1 + $0x38] sm:$0xff]
  %v696 = vld [vmem:[%s1 + $0x40] sm:$0xff]
  %v697 = vld [vmem:[%s1 + $0x48] sm:$0xff]
  %v698 = vld [vmem:[%s1 + $0x50] sm:$0xff]
  %v699 = vld [vmem:[%s1 + $0x58] sm:$0xff]
  %v700 = vld [vmem:[%s1 + $0x60] sm:$0xff]
  %v701 = vld [vmem:[%s1 + $0x68] sm:$0xff]
  %v702 = vld [vmem:[%s1 + $0x70] sm:$0xff]
  %v703 = vld [vmem:[%s1 + $0x78] sm:$0xff]
  %v704 = vld [vmem:[%s1 + $0x80] sm:$0xff]
  %v705 = vld [vmem:[%s1 + $0x88] sm:$0xff]
  %v706 = vld [vmem:[%s1 + $0x90] sm:$0xff]
  %v707 = vld [vmem:[%s1 + $0x98] sm:$0xff]
  %v708 = vld [vmem:[%s1 + $0xa0] sm:$0xff]
  %v709 = vld [vmem:[%s1 + $0xa8] sm:$0xff]
  %v710 = vld [vmem:[%s1 + $0xb0] sm:$0xff]
  %v711 = vld [vmem:[%s1 + $0xb8] sm:$0xff]
  %v712 = vld [vmem:[%s1 + $0xc0] sm:$0xff]
  %v713 = vld [vmem:[%s1 + $0xc8] sm:$0xff]
  %v714 = vld [vmem:[%s1 + $0xd0] sm:$0xff]
  %v715 = vld [vmem:[%s1 + $0xd8] sm:$0xff]
  %v716 = vld [vmem:[%s1 + $0xe0] sm:$0xff]
  %v717 = vld [vmem:[%s1 + $0xe8] sm:$0xff]
  %v718 = vld [vmem:[%s1 + $0xf0] sm:$0xff]
  %v719 = vld [vmem:[%s1 + $0xf8] sm:$0xff]
  %v720 = vld [vmem:[%s1 + $0x100] sm:$0xff]
  %v721 = vld [vmem:[%s1 + $0x108] sm:$0xff]
  %v722 = vld [vmem:[%s1 + $0x110] sm:$0xff]
  %v723 = vld [vmem:[%s1 + $0x118] sm:$0xff]
  %v724 = vld [vmem:[%s1 + $0x120] sm:$0xff]
  %v725 = vld [vmem:[%s1 + $0x128] sm:$0xff]
  %v726 = vld [vmem:[%s1 + $0x130] sm:$0xff]
  %v727 = vld [vmem:[%s1 + $0x138] sm:$0xff]
  %v728 = vld [vmem:[%s1 + $0x140] sm:$0xff]
  %v729 = vld [vmem:[%s1 + $0x148] sm:$0xff]
  %v730 = vld [vmem:[%s1 + $0x150] sm:$0xff]
  %v731 = vld [vmem:[%s1 + $0x158] sm:$0xff]
  %v732 = vld [vmem:[%s1 + $0x160] sm:$0xff]
  %v733 = vld [vmem:[%s1 + $0x168] sm:$0xff]
  %v734 = vld [vmem:[%s1 + $0x170] sm:$0xff]
  %v735 = vld [vmem:[%s1 + $0x178] sm:$0xff]
  %v736 = vld [vmem:[%s1 + $0x180] sm:$0xff]
  %v737 = vld [vmem:[%s1 + $0x188] sm:$0xff]
  %v738 = vld [vmem:[%s1 + $0x190] sm:$0xff]
  %v739 = vld [vmem:[%s1 + $0x198] sm:$0xff]
  %v740 = vld [vmem:[%s1 + $0x1a0] sm:$0xff]
  %v741 = vld [vmem:[%s1 + $0x1a8] sm:$0xff]
  %v742 = vld [vmem:[%s1 + $0x1b0] sm:$0xff]
  %v743 = vld [vmem:[%s1 + $0x1b8] sm:$0xff]
  %v744 = vld [vmem:[%s1 + $0x1c0] sm:$0xff]
  %v745 = vld [vmem:[%s1 + $0x1c8] sm:$0xff]
  %v746 = vld [vmem:[%s1 + $0x1d0] sm:$0xff]
  %v747 = vld [vmem:[%s1 + $0x1d8] sm:$0xff]
  %v748 = vld [vmem:[%s1 + $0x1e0] sm:$0xff]
  %v749 = vld [vmem:[%s1 + $0x1e8] sm:$0xff]
  %v750 = vld [vmem:[%s1 + $0x1f0] sm:$0xff]
  %v751 = vld [vmem:[%s1 + $0x1f8] sm:$0xff]
  %752 = vmatpush.msra.mxu0 %v748
  %753 = vmatpush.msra.mxu0 %v744
  %754 = vmatpush.msra.mxu0 %v740
  %755 = vmatpush.msra.mxu0 %v736
  %756 = vmatpush.msra.mxu0 %v732
  %757 = vmatpush.msra.mxu0 %v728
  %758 = vmatpush.msra.mxu0 %v724
  %759 = vmatpush.msra.mxu0 %v720
  %760 = vmatpush.msra.mxu0 %v716
  %761 = vmatpush.msra.mxu0 %v712
  %762 = vmatpush.msra.mxu0 %v708
  %763 = vmatpush.msra.mxu0 %v704
  %764 = vmatpush.msra.mxu0 %v700
  %765 = vmatpush.msra.mxu0 %v696
  %766 = vmatpush.msra.mxu0 %v692
  %767 = vmatpush.msra.mxu0 %v688
  %768 = vmatmul.f32.gmra.mxu0 %v681
  %v769 = vpop.f32.mrf.mxu0
  %v770 = vadd.f32 0.0, %v769
  %771 = vdwg.mxu0
  %772 = vmatpush.msra.mxu0 %v749
  %773 = vmatpush.msra.mxu0 %v745
  %774 = vmatpush.msra.mxu0 %v741
  %775 = vmatpush.msra.mxu0 %v737
  %776 = vmatpush.msra.mxu0 %v733
  %777 = vmatpush.msra.mxu0 %v729
  %778 = vmatpush.msra.mxu0 %v725
  %779 = vmatpush.msra.mxu0 %v721
  %780 = vmatpush.msra.mxu0 %v717
  %781 = vmatpush.msra.mxu0 %v713
  %782 = vmatpush.msra.mxu0 %v709
  %783 = vmatpush.msra.mxu0 %v705
  %784 = vmatpush.msra.mxu0 %v701
  %785 = vmatpush.msra.mxu0 %v697
  %786 = vmatpush.msra.mxu0 %v693
  %787 = vmatpush.msra.mxu0 %v689
  %788 = vmatmul.f32.gmra.mxu0 %v681
  %v789 = vpop.f32.mrf.mxu0
  %v790 = vadd.f32 0.0, %v789
  %791 = vdwg.mxu0
  %792 = vmatpush.msra.mxu0 %v750
  %793 = vmatpush.msra.mxu0 %v746
  %794 = vmatpush.msra.mxu0 %v742
  %795 = vmatpush.msra.mxu0 %v738
  %796 = vmatpush.msra.mxu0 %v734
  %797 = vmatpush.msra.mxu0 %v730
  %798 = vmatpush.msra.mxu0 %v726
  %799 = vmatpush.msra.mxu0 %v722
  %800 = vmatpush.msra.mxu0 %v718
  %801 = vmatpush.msra.mxu0 %v714
  %802 = vmatpush.msra.mxu0 %v710
  %803 = vmatpush.msra.mxu0 %v706
  %804 = vmatpush.msra.mxu0 %v702
  %805 = vmatpush.msra.mxu0 %v698
  %806 = vmatpush.msra.mxu0 %v694
  %807 = vmatpush.msra.mxu0 %v690
  %808 = vmatmul.f32.gmra.mxu0 %v681
  %v809 = vpop.f32.mrf.mxu0
  %v810 = vadd.f32 0.0, %v809
  %811 = vdwg.mxu0
  %812 = vmatpush.msra.mxu0 %v751
  %813 = vmatpush.msra.mxu0 %v747
  %814 = vmatpush.msra.mxu0 %v743
  %815 = vmatpush.msra.mxu0 %v739
  %816 = vmatpush.msra.mxu0 %v735
  %817 = vmatpush.msra.mxu0 %v731
  %818 = vmatpush.msra.mxu0 %v727
  %819 = vmatpush.msra.mxu0 %v723
  %820 = vmatpush.msra.mxu0 %v719
  %821 = vmatpush.msra.mxu0 %v715
  %822 = vmatpush.msra.mxu0 %v711
  %823 = vmatpush.msra.mxu0 %v707
  %824 = vmatpush.msra.mxu0 %v703
  %825 = vmatpush.msra.mxu0 %v699
  %826 = vmatpush.msra.mxu0 %v695
  %827 = vmatpush.msra.mxu0 %v691
  %828 = vmatmul.f32.gmra.mxu0 %v681
  %v829 = vpop.f32.mrf.mxu0
  %v830 = vadd.f32 0.0, %v829
  %831 = vdwg.mxu0
  %v832 = vadd.f32 %v684, %v770
  %v833 = vadd.f32 %v685, %v790
  %v834 = vadd.f32 %v686, %v810
  %v835 = vadd.f32 %v687, %v830
  %v836 = vxor.u32 %v832, 2147483648
  %v837 = vmul.f32 %v836, 1.442695
  %v838 = vpow.pop %v837
  %v839 = vadd.f32 %v838, 1.0
  %v840 = vrcp.pop %v839
  %v841 = vmul.f32 %v839, %v840
  %v842 = vsub.f32 1.0, %v841
  %v843 = vmul.f32 %v840, %v842
  %v844 = vadd.f32 %v840, %v843
  %vm845 = vweird.f32 %v839
  %vm846 = vweird.f32 %v840
  %vm847 = vmor %vm845, %vm846
  %v848 = vsel %vm847, %v840, %v844
  %v849 = vand.u32 2147483647, %v839
  %vm850 = vcmp.eq.f32.partialorder %v849, 8.507059e+37
  %v851 = vand.u32 %v839, 2147483648
  %v852 = vor.u32 1.1754944e-38, %v851
  %v853 = vsel %vm850, %v852, %v848
  %v854 = vmul.f32 1.0, %v853
  %v855 = vxor.u32 %v833, 2147483648
  %v856 = vmul.f32 %v855, 1.442695
  %v857 = vpow.pop %v856
  %v858 = vadd.f32 %v857, 1.0
  %v859 = vrcp.pop %v858
  %v860 = vmul.f32 %v858, %v859
  %v861 = vsub.f32 1.0, %v860
  %v862 = vmul.f32 %v859, %v861
  %v863 = vadd.f32 %v859, %v862
  %vm864 = vweird.f32 %v858
  %vm865 = vweird.f32 %v859
  %vm866 = vmor %vm864, %vm865
  %v867 = vsel %vm866, %v859, %v863
  %v868 = vand.u32 2147483647, %v858
  %vm869 = vcmp.eq.f32.partialorder %v868, 8.507059e+37
  %v870 = vand.u32 %v858, 2147483648
  %v871 = vor.u32 1.1754944e-38, %v870
  %v872 = vsel %vm869, %v871, %v867
  %v873 = vmul.f32 1.0, %v872
  %v874 = vtanh.pop %v834
  %v875 = vxor.u32 %v835, 2147483648
  %v876 = vmul.f32 %v875, 1.442695
  %v877 = vpow.pop %v876
  %v878 = vadd.f32 %v877, 1.0
  %v879 = vrcp.pop %v878
  %v880 = vmul.f32 %v878, %v879
  %v881 = vsub.f32 1.0, %v880
  %v882 = vmul.f32 %v879, %v881
  %v883 = vadd.f32 %v879, %v882
  %vm884 = vweird.f32 %v878
  %vm885 = vweird.f32 %v879
  %vm886 = vmor %vm884, %vm885
  %v887 = vsel %vm886, %v879, %v883
  %v888 = vand.u32 2147483647, %v878
  %vm889 = vcmp.eq.f32.partialorder %v888, 8.507059e+37
  %v890 = vand.u32 %v878, 2147483648
  %v891 = vor.u32 1.1754944e-38, %v890
  %v892 = vsel %vm889, %v891, %v887
  %v893 = vmul.f32 1.0, %v892
  %v894 = vmul.f32 %v873, %v682
  %v895 = vmul.f32 %v854, %v874
  %v896 = vadd.f32 %v894, %v895
  %v897 = vtanh.pop %v896
  %v898 = vmul.f32 %v893, %v897
  %899 = vst [vmem:[#allocation2] sm:$0xff] %v898
  %900 = vst [vmem:[#allocation3] sm:$0xff] %v896
  %s901 = scalar_lea.vmem %s2, 24
  %902 = vst [vmem:[%s901] sm:$0xff] %v898
  %v903 = vld [vmem:[#allocation2] sm:$0xff]
  %v904 = vld [vmem:[#allocation3] sm:$0xff]
  %s905 = scalar_lea.vmem %s0, 128
  %v906 = vld [vmem:[%s905] sm:$0xff]
  %v907 = vld [vmem:[%s905 + $0x8] sm:$0xff]
  %v908 = vld [vmem:[%s905 + $0x10] sm:$0xff]
  %v909 = vld [vmem:[%s905 + $0x18] sm:$0xff]
  %v910 = vld [vmem:[%s1] sm:$0xff]
  %v911 = vld [vmem:[%s1 + $0x8] sm:$0xff]
  %v912 = vld [vmem:[%s1 + $0x10] sm:$0xff]
  %v913 = vld [vmem:[%s1 + $0x18] sm:$0xff]
  %v914 = vld [vmem:[%s1 + $0x20] sm:$0xff]
  %v915 = vld [vmem:[%s1 + $0x28] sm:$0xff]
  %v916 = vld [vmem:[%s1 + $0x30] sm:$0xff]
  %v917 = vld [vmem:[%s1 + $0x38] sm:$0xff]
  %v918 = vld [vmem:[%s1 + $0x40] sm:$0xff]
  %v919 = vld [vmem:[%s1 + $0x48] sm:$0xff]
  %v920 = vld [vmem:[%s1 + $0x50] sm:$0xff]
  %v921 = vld [vmem:[%s1 + $0x58] sm:$0xff]
  %v922 = vld [vmem:[%s1 + $0x60] sm:$0xff]
  %v923 = vld [vmem:[%s1 + $0x68] sm:$0xff]
  %v924 = vld [vmem:[%s1 + $0x70] sm:$0xff]
  %v925 = vld [vmem:[%s1 + $0x78] sm:$0xff]
  %v926 = vld [vmem:[%s1 + $0x80] sm:$0xff]
  %v927 = vld [vmem:[%s1 + $0x88] sm:$0xff]
  %v928 = vld [vmem:[%s1 + $0x90] sm:$0xff]
  %v929 = vld [vmem:[%s1 + $0x98] sm:$0xff]
  %v930 = vld [vmem:[%s1 + $0xa0] sm:$0xff]
  %v931 = vld [vmem:[%s1 + $0xa8] sm:$0xff]
  %v932 = vld [vmem:[%s1 + $0xb0] sm:$0xff]
  %v933 = vld [vmem:[%s1 + $0xb8] sm:$0xff]
  %v934 = vld [vmem:[%s1 + $0xc0] sm:$0xff]
  %v935 = vld [vmem:[%s1 + $0xc8] sm:$0xff]
  %v936 = vld [vmem:[%s1 + $0xd0] sm:$0xff]
  %v937 = vld [vmem:[%s1 + $0xd8] sm:$0xff]
  %v938 = vld [vmem:[%s1 + $0xe0] sm:$0xff]
  %v939 = vld [vmem:[%s1 + $0xe8] sm:$0xff]
  %v940 = vld [vmem:[%s1 + $0xf0] sm:$0xff]
  %v941 = vld [vmem:[%s1 + $0xf8] sm:$0xff]
  %v942 = vld [vmem:[%s1 + $0x100] sm:$0xff]
  %v943 = vld [vmem:[%s1 + $0x108] sm:$0xff]
  %v944 = vld [vmem:[%s1 + $0x110] sm:$0xff]
  %v945 = vld [vmem:[%s1 + $0x118] sm:$0xff]
  %v946 = vld [vmem:[%s1 + $0x120] sm:$0xff]
  %v947 = vld [vmem:[%s1 + $0x128] sm:$0xff]
  %v948 = vld [vmem:[%s1 + $0x130] sm:$0xff]
  %v949 = vld [vmem:[%s1 + $0x138] sm:$0xff]
  %v950 = vld [vmem:[%s1 + $0x140] sm:$0xff]
  %v951 = vld [vmem:[%s1 + $0x148] sm:$0xff]
  %v952 = vld [vmem:[%s1 + $0x150] sm:$0xff]
  %v953 = vld [vmem:[%s1 + $0x158] sm:$0xff]
  %v954 = vld [vmem:[%s1 + $0x160] sm:$0xff]
  %v955 = vld [vmem:[%s1 + $0x168] sm:$0xff]
  %v956 = vld [vmem:[%s1 + $0x170] sm:$0xff]
  %v957 = vld [vmem:[%s1 + $0x178] sm:$0xff]
  %v958 = vld [vmem:[%s1 + $0x180] sm:$0xff]
  %v959 = vld [vmem:[%s1 + $0x188] sm:$0xff]
  %v960 = vld [vmem:[%s1 + $0x190] sm:$0xff]
  %v961 = vld [vmem:[%s1 + $0x198] sm:$0xff]
  %v962 = vld [vmem:[%s1 + $0x1a0] sm:$0xff]
  %v963 = vld [vmem:[%s1 + $0x1a8] sm:$0xff]
  %v964 = vld [vmem:[%s1 + $0x1b0] sm:$0xff]
  %v965 = vld [vmem:[%s1 + $0x1b8] sm:$0xff]
  %v966 = vld [vmem:[%s1 + $0x1c0] sm:$0xff]
  %v967 = vld [vmem:[%s1 + $0x1c8] sm:$0xff]
  %v968 = vld [vmem:[%s1 + $0x1d0] sm:$0xff]
  %v969 = vld [vmem:[%s1 + $0x1d8] sm:$0xff]
  %v970 = vld [vmem:[%s1 + $0x1e0] sm:$0xff]
  %v971 = vld [vmem:[%s1 + $0x1e8] sm:$0xff]
  %v972 = vld [vmem:[%s1 + $0x1f0] sm:$0xff]
  %v973 = vld [vmem:[%s1 + $0x1f8] sm:$0xff]
  %974 = vmatpush.msra.mxu0 %v970
  %975 = vmatpush.msra.mxu0 %v966
  %976 = vmatpush.msra.mxu0 %v962
  %977 = vmatpush.msra.mxu0 %v958
  %978 = vmatpush.msra.mxu0 %v954
  %979 = vmatpush.msra.mxu0 %v950
  %980 = vmatpush.msra.mxu0 %v946
  %981 = vmatpush.msra.mxu0 %v942
  %982 = vmatpush.msra.mxu0 %v938
  %983 = vmatpush.msra.mxu0 %v934
  %984 = vmatpush.msra.mxu0 %v930
  %985 = vmatpush.msra.mxu0 %v926
  %986 = vmatpush.msra.mxu0 %v922
  %987 = vmatpush.msra.mxu0 %v918
  %988 = vmatpush.msra.mxu0 %v914
  %989 = vmatpush.msra.mxu0 %v910
  %990 = vmatmul.f32.gmra.mxu0 %v903
  %v991 = vpop.f32.mrf.mxu0
  %v992 = vadd.f32 0.0, %v991
  %993 = vdwg.mxu0
  %994 = vmatpush.msra.mxu0 %v971
  %995 = vmatpush.msra.mxu0 %v967
  %996 = vmatpush.msra.mxu0 %v963
  %997 = vmatpush.msra.mxu0 %v959
  %998 = vmatpush.msra.mxu0 %v955
  %999 = vmatpush.msra.mxu0 %v951
  %1000 = vmatpush.msra.mxu0 %v947
  %1001 = vmatpush.msra.mxu0 %v943
  %1002 = vmatpush.msra.mxu0 %v939
  %1003 = vmatpush.msra.mxu0 %v935
  %1004 = vmatpush.msra.mxu0 %v931
  %1005 = vmatpush.msra.mxu0 %v927
  %1006 = vmatpush.msra.mxu0 %v923
  %1007 = vmatpush.msra.mxu0 %v919
  %1008 = vmatpush.msra.mxu0 %v915
  %1009 = vmatpush.msra.mxu0 %v911
  %1010 = vmatmul.f32.gmra.mxu0 %v903
  %v1011 = vpop.f32.mrf.mxu0
  %v1012 = vadd.f32 0.0, %v1011
  %1013 = vdwg.mxu0
  %1014 = vmatpush.msra.mxu0 %v972
  %1015 = vmatpush.msra.mxu0 %v968
  %1016 = vmatpush.msra.mxu0 %v964
  %1017 = vmatpush.msra.mxu0 %v960
  %1018 = vmatpush.msra.mxu0 %v956
  %1019 = vmatpush.msra.mxu0 %v952
  %1020 = vmatpush.msra.mxu0 %v948
  %1021 = vmatpush.msra.mxu0 %v944
  %1022 = vmatpush.msra.mxu0 %v940
  %1023 = vmatpush.msra.mxu0 %v936
  %1024 = vmatpush.msra.mxu0 %v932
  %1025 = vmatpush.msra.mxu0 %v928
  %1026 = vmatpush.msra.mxu0 %v924
  %1027 = vmatpush.msra.mxu0 %v920
  %1028 = vmatpush.msra.mxu0 %v916
  %1029 = vmatpush.msra.mxu0 %v912
  %1030 = vmatmul.f32.gmra.mxu0 %v903
  %v1031 = vpop.f32.mrf.mxu0
  %v1032 = vadd.f32 0.0, %v1031
  %1033 = vdwg.mxu0
  %1034 = vmatpush.msra.mxu0 %v973
  %1035 = vmatpush.msra.mxu0 %v969
  %1036 = vmatpush.msra.mxu0 %v965
  %1037 = vmatpush.msra.mxu0 %v961
  %1038 = vmatpush.msra.mxu0 %v957
  %1039 = vmatpush.msra.mxu0 %v953
  %1040 = vmatpush.msra.mxu0 %v949
  %1041 = vmatpush.msra.mxu0 %v945
  %1042 = vmatpush.msra.mxu0 %v941
  %1043 = vmatpush.msra.mxu0 %v937
  %1044 = vmatpush.msra.mxu0 %v933
  %1045 = vmatpush.msra.mxu0 %v929
  %1046 = vmatpush.msra.mxu0 %v925
  %1047 = vmatpush.msra.mxu0 %v921
  %1048 = vmatpush.msra.mxu0 %v917
  %1049 = vmatpush.msra.mxu0 %v913
  %1050 = vmatmul.f32.gmra.mxu0 %v903
  %v1051 = vpop.f32.mrf.mxu0
  %v1052 = vadd.f32 0.0, %v1051
  %1053 = vdwg.mxu0
  %v1054 = vadd.f32 %v906, %v992
  %v1055 = vadd.f32 %v907, %v1012
  %v1056 = vadd.f32 %v908, %v1032
  %v1057 = vadd.f32 %v909, %v1052
  %v1058 = vxor.u32 %v1054, 2147483648
  %v1059 = vmul.f32 %v1058, 1.442695
  %v1060 = vpow.pop %v1059
  %v1061 = vadd.f32 %v1060, 1.0
  %v1062 = vrcp.pop %v1061
  %v1063 = vmul.f32 %v1061, %v1062
  %v1064 = vsub.f32 1.0, %v1063
  %v1065 = vmul.f32 %v1062, %v1064
  %v1066 = vadd.f32 %v1062, %v1065
  %vm1067 = vweird.f32 %v1061
  %vm1068 = vweird.f32 %v1062
  %vm1069 = vmor %vm1067, %vm1068
  %v1070 = vsel %vm1069, %v1062, %v1066
  %v1071 = vand.u32 2147483647, %v1061
  %vm1072 = vcmp.eq.f32.partialorder %v1071, 8.507059e+37
  %v1073 = vand.u32 %v1061, 2147483648
  %v1074 = vor.u32 1.1754944e-38, %v1073
  %v1075 = vsel %vm1072, %v1074, %v1070
  %v1076 = vmul.f32 1.0, %v1075
  %v1077 = vxor.u32 %v1055, 2147483648
  %v1078 = vmul.f32 %v1077, 1.442695
  %v1079 = vpow.pop %v1078
  %v1080 = vadd.f32 %v1079, 1.0
  %v1081 = vrcp.pop %v1080
  %v1082 = vmul.f32 %v1080, %v1081
  %v1083 = vsub.f32 1.0, %v1082
  %v1084 = vmul.f32 %v1081, %v1083
  %v1085 = vadd.f32 %v1081, %v1084
  %vm1086 = vweird.f32 %v1080
  %vm1087 = vweird.f32 %v1081
  %vm1088 = vmor %vm1086, %vm1087
  %v1089 = vsel %vm1088, %v1081, %v1085
  %v1090 = vand.u32 2147483647, %v1080
  %vm1091 = vcmp.eq.f32.partialorder %v1090, 8.507059e+37
  %v1092 = vand.u32 %v1080, 2147483648
  %v1093 = vor.u32 1.1754944e-38, %v1092
  %v1094 = vsel %vm1091, %v1093, %v1089
  %v1095 = vmul.f32 1.0, %v1094
  %v1096 = vtanh.pop %v1056
  %v1097 = vxor.u32 %v1057, 2147483648
  %v1098 = vmul.f32 %v1097, 1.442695
  %v1099 = vpow.pop %v1098
  %v1100 = vadd.f32 %v1099, 1.0
  %v1101 = vrcp.pop %v1100
  %v1102 = vmul.f32 %v1100, %v1101
  %v1103 = vsub.f32 1.0, %v1102
  %v1104 = vmul.f32 %v1101, %v1103
  %v1105 = vadd.f32 %v1101, %v1104
  %vm1106 = vweird.f32 %v1100
  %vm1107 = vweird.f32 %v1101
  %vm1108 = vmor %vm1106, %vm1107
  %v1109 = vsel %vm1108, %v1101, %v1105
  %v1110 = vand.u32 2147483647, %v1100
  %vm1111 = vcmp.eq.f32.partialorder %v1110, 8.507059e+37
  %v1112 = vand.u32 %v1100, 2147483648
  %v1113 = vor.u32 1.1754944e-38, %v1112
  %v1114 = vsel %vm1111, %v1113, %v1109
  %v1115 = vmul.f32 1.0, %v1114
  %v1116 = vmul.f32 %v1095, %v904
  %v1117 = vmul.f32 %v1076, %v1096
  %v1118 = vadd.f32 %v1116, %v1117
  %v1119 = vtanh.pop %v1118
  %v1120 = vmul.f32 %v1115, %v1119
  %1121 = vst [vmem:[#allocation2] sm:$0xff] %v1120
  %1122 = vst [vmem:[#allocation3] sm:$0xff] %v1118
  %s1123 = scalar_lea.vmem %s2, 32
  %1124 = vst [vmem:[%s1123] sm:$0xff] %v1120
  %v1125 = vld [vmem:[#allocation2] sm:$0xff]
  %v1126 = vld [vmem:[#allocation3] sm:$0xff]
  %s1127 = scalar_lea.vmem %s0, 160
  %v1128 = vld [vmem:[%s1127] sm:$0xff]
  %v1129 = vld [vmem:[%s1127 + $0x8] sm:$0xff]
  %v1130 = vld [vmem:[%s1127 + $0x10] sm:$0xff]
  %v1131 = vld [vmem:[%s1127 + $0x18] sm:$0xff]
  %v1132 = vld [vmem:[%s1] sm:$0xff]
  %v1133 = vld [vmem:[%s1 + $0x8] sm:$0xff]
  %v1134 = vld [vmem:[%s1 + $0x10] sm:$0xff]
  %v1135 = vld [vmem:[%s1 + $0x18] sm:$0xff]
  %v1136 = vld [vmem:[%s1 + $0x20] sm:$0xff]
  %v1137 = vld [vmem:[%s1 + $0x28] sm:$0xff]
  %v1138 = vld [vmem:[%s1 + $0x30] sm:$0xff]
  %v1139 = vld [vmem:[%s1 + $0x38] sm:$0xff]
  %v1140 = vld [vmem:[%s1 + $0x40] sm:$0xff]
  %v1141 = vld [vmem:[%s1 + $0x48] sm:$0xff]
  %v1142 = vld [vmem:[%s1 + $0x50] sm:$0xff]
  %v1143 = vld [vmem:[%s1 + $0x58] sm:$0xff]
  %v1144 = vld [vmem:[%s1 + $0x60] sm:$0xff]
  %v1145 = vld [vmem:[%s1 + $0x68] sm:$0xff]
  %v1146 = vld [vmem:[%s1 + $0x70] sm:$0xff]
  %v1147 = vld [vmem:[%s1 + $0x78] sm:$0xff]
  %v1148 = vld [vmem:[%s1 + $0x80] sm:$0xff]
  %v1149 = vld [vmem:[%s1 + $0x88] sm:$0xff]
  %v1150 = vld [vmem:[%s1 + $0x90] sm:$0xff]
  %v1151 = vld [vmem:[%s1 + $0x98] sm:$0xff]
  %v1152 = vld [vmem:[%s1 + $0xa0] sm:$0xff]
  %v1153 = vld [vmem:[%s1 + $0xa8] sm:$0xff]
  %v1154 = vld [vmem:[%s1 + $0xb0] sm:$0xff]
  %v1155 = vld [vmem:[%s1 + $0xb8] sm:$0xff]
  %v1156 = vld [vmem:[%s1 + $0xc0] sm:$0xff]
  %v1157 = vld [vmem:[%s1 + $0xc8] sm:$0xff]
  %v1158 = vld [vmem:[%s1 + $0xd0] sm:$0xff]
  %v1159 = vld [vmem:[%s1 + $0xd8] sm:$0xff]
  %v1160 = vld [vmem:[%s1 + $0xe0] sm:$0xff]
  %v1161 = vld [vmem:[%s1 + $0xe8] sm:$0xff]
  %v1162 = vld [vmem:[%s1 + $0xf0] sm:$0xff]
  %v1163 = vld [vmem:[%s1 + $0xf8] sm:$0xff]
  %v1164 = vld [vmem:[%s1 + $0x100] sm:$0xff]
  %v1165 = vld [vmem:[%s1 + $0x108] sm:$0xff]
  %v1166 = vld [vmem:[%s1 + $0x110] sm:$0xff]
  %v1167 = vld [vmem:[%s1 + $0x118] sm:$0xff]
  %v1168 = vld [vmem:[%s1 + $0x120] sm:$0xff]
  %v1169 = vld [vmem:[%s1 + $0x128] sm:$0xff]
  %v1170 = vld [vmem:[%s1 + $0x130] sm:$0xff]
  %v1171 = vld [vmem:[%s1 + $0x138] sm:$0xff]
  %v1172 = vld [vmem:[%s1 + $0x140] sm:$0xff]
  %v1173 = vld [vmem:[%s1 + $0x148] sm:$0xff]
  %v1174 = vld [vmem:[%s1 + $0x150] sm:$0xff]
  %v1175 = vld [vmem:[%s1 + $0x158] sm:$0xff]
  %v1176 = vld [vmem:[%s1 + $0x160] sm:$0xff]
  %v1177 = vld [vmem:[%s1 + $0x168] sm:$0xff]
  %v1178 = vld [vmem:[%s1 + $0x170] sm:$0xff]
  %v1179 = vld [vmem:[%s1 + $0x178] sm:$0xff]
  %v1180 = vld [vmem:[%s1 + $0x180] sm:$0xff]
  %v1181 = vld [vmem:[%s1 + $0x188] sm:$0xff]
  %v1182 = vld [vmem:[%s1 + $0x190] sm:$0xff]
  %v1183 = vld [vmem:[%s1 + $0x198] sm:$0xff]
  %v1184 = vld [vmem:[%s1 + $0x1a0] sm:$0xff]
  %v1185 = vld [vmem:[%s1 + $0x1a8] sm:$0xff]
  %v1186 = vld [vmem:[%s1 + $0x1b0] sm:$0xff]
  %v1187 = vld [vmem:[%s1 + $0x1b8] sm:$0xff]
  %v1188 = vld [vmem:[%s1 + $0x1c0] sm:$0xff]
  %v1189 = vld [vmem:[%s1 + $0x1c8] sm:$0xff]
  %v1190 = vld [vmem:[%s1 + $0x1d0] sm:$0xff]
  %v1191 = vld [vmem:[%s1 + $0x1d8] sm:$0xff]
  %v1192 = vld [vmem:[%s1 + $0x1e0] sm:$0xff]
  %v1193 = vld [vmem:[%s1 + $0x1e8] sm:$0xff]
  %v1194 = vld [vmem:[%s1 + $0x1f0] sm:$0xff]
  %v1195 = vld [vmem:[%s1 + $0x1f8] sm:$0xff]
  %1196 = vmatpush.msra.mxu0 %v1192
  %1197 = vmatpush.msra.mxu0 %v1188
  %1198 = vmatpush.msra.mxu0 %v1184
  %1199 = vmatpush.msra.mxu0 %v1180
  %1200 = vmatpush.msra.mxu0 %v1176
  %1201 = vmatpush.msra.mxu0 %v1172
  %1202 = vmatpush.msra.mxu0 %v1168
  %1203 = vmatpush.msra.mxu0 %v1164
  %1204 = vmatpush.msra.mxu0 %v1160
  %1205 = vmatpush.msra.mxu0 %v1156
  %1206 = vmatpush.msra.mxu0 %v1152
  %1207 = vmatpush.msra.mxu0 %v1148
  %1208 = vmatpush.msra.mxu0 %v1144
  %1209 = vmatpush.msra.mxu0 %v1140
  %1210 = vmatpush.msra.mxu0 %v1136
  %1211 = vmatpush.msra.mxu0 %v1132
  %1212 = vmatmul.f32.gmra.mxu0 %v1125
  %v1213 = vpop.f32.mrf.mxu0
  %v1214 = vadd.f32 0.0, %v1213
  %1215 = vdwg.mxu0
  %1216 = vmatpush.msra.mxu0 %v1193
  %1217 = vmatpush.msra.mxu0 %v1189
  %1218 = vmatpush.msra.mxu0 %v1185
  %1219 = vmatpush.msra.mxu0 %v1181
  %1220 = vmatpush.msra.mxu0 %v1177
  %1221 = vmatpush.msra.mxu0 %v1173
  %1222 = vmatpush.msra.mxu0 %v1169
  %1223 = vmatpush.msra.mxu0 %v1165
  %1224 = vmatpush.msra.mxu0 %v1161
  %1225 = vmatpush.msra.mxu0 %v1157
  %1226 = vmatpush.msra.mxu0 %v1153
  %1227 = vmatpush.msra.mxu0 %v1149
  %1228 = vmatpush.msra.mxu0 %v1145
  %1229 = vmatpush.msra.mxu0 %v1141
  %1230 = vmatpush.msra.mxu0 %v1137
  %1231 = vmatpush.msra.mxu0 %v1133
  %1232 = vmatmul.f32.gmra.mxu0 %v1125
  %v1233 = vpop.f32.mrf.mxu0
  %v1234 = vadd.f32 0.0, %v1233
  %1235 = vdwg.mxu0
  %1236 = vmatpush.msra.mxu0 %v1194
  %1237 = vmatpush.msra.mxu0 %v1190
  %1238 = vmatpush.msra.mxu0 %v1186
  %1239 = vmatpush.msra.mxu0 %v1182
  %1240 = vmatpush.msra.mxu0 %v1178
  %1241 = vmatpush.msra.mxu0 %v1174
  %1242 = vmatpush.msra.mxu0 %v1170
  %1243 = vmatpush.msra.mxu0 %v1166
  %1244 = vmatpush.msra.mxu0 %v1162
  %1245 = vmatpush.msra.mxu0 %v1158
  %1246 = vmatpush.msra.mxu0 %v1154
  %1247 = vmatpush.msra.mxu0 %v1150
  %1248 = vmatpush.msra.mxu0 %v1146
  %1249 = vmatpush.msra.mxu0 %v1142
  %1250 = vmatpush.msra.mxu0 %v1138
  %1251 = vmatpush.msra.mxu0 %v1134
  %1252 = vmatmul.f32.gmra.mxu0 %v1125
  %v1253 = vpop.f32.mrf.mxu0
  %v1254 = vadd.f32 0.0, %v1253
  %1255 = vdwg.mxu0
  %1256 = vmatpush.msra.mxu0 %v1195
  %1257 = vmatpush.msra.mxu0 %v1191
  %1258 = vmatpush.msra.mxu0 %v1187
  %1259 = vmatpush.msra.mxu0 %v1183
  %1260 = vmatpush.msra.mxu0 %v1179
  %1261 = vmatpush.msra.mxu0 %v1175
  %1262 = vmatpush.msra.mxu0 %v1171
  %1263 = vmatpush.msra.mxu0 %v1167
  %1264 = vmatpush.msra.mxu0 %v1163
  %1265 = vmatpush.msra.mxu0 %v1159
  %1266 = vmatpush.msra.mxu0 %v1155
  %1267 = vmatpush.msra.mxu0 %v1151
  %1268 = vmatpush.msra.mxu0 %v1147
  %1269 = vmatpush.msra.mxu0 %v1143
  %1270 = vmatpush.msra.mxu0 %v1139
  %1271 = vmatpush.msra.mxu0 %v1135
  %1272 = vmatmul.f32.gmra.mxu0 %v1125
  %v1273 = vpop.f32.mrf.mxu0
  %v1274 = vadd.f32 0.0, %v1273
  %1275 = vdwg.mxu0
  %v1276 = vadd.f32 %v1128, %v1214
  %v1277 = vadd.f32 %v1129, %v1234
  %v1278 = vadd.f32 %v1130, %v1254
  %v1279 = vadd.f32 %v1131, %v1274
  %v1280 = vxor.u32 %v1276, 2147483648
  %v1281 = vmul.f32 %v1280, 1.442695
  %v1282 = vpow.pop %v1281
  %v1283 = vadd.f32 %v1282, 1.0
  %v1284 = vrcp.pop %v1283
  %v1285 = vmul.f32 %v1283, %v1284
  %v1286 = vsub.f32 1.0, %v1285
  %v1287 = vmul.f32 %v1284, %v1286
  %v1288 = vadd.f32 %v1284, %v1287
  %vm1289 = vweird.f32 %v1283
  %vm1290 = vweird.f32 %v1284
  %vm1291 = vmor %vm1289, %vm1290
  %v1292 = vsel %vm1291, %v1284, %v1288
  %v1293 = vand.u32 2147483647, %v1283
  %vm1294 = vcmp.eq.f32.partialorder %v1293, 8.507059e+37
  %v1295 = vand.u32 %v1283, 2147483648
  %v1296 = vor.u32 1.1754944e-38, %v1295
  %v1297 = vsel %vm1294, %v1296, %v1292
  %v1298 = vmul.f32 1.0, %v1297
  %v1299 = vxor.u32 %v1277, 2147483648
  %v1300 = vmul.f32 %v1299, 1.442695
  %v1301 = vpow.pop %v1300
  %v1302 = vadd.f32 %v1301, 1.0
  %v1303 = vrcp.pop %v1302
  %v1304 = vmul.f32 %v1302, %v1303
  %v1305 = vsub.f32 1.0, %v1304
  %v1306 = vmul.f32 %v1303, %v1305
  %v1307 = vadd.f32 %v1303, %v1306
  %vm1308 = vweird.f32 %v1302
  %vm1309 = vweird.f32 %v1303
  %vm1310 = vmor %vm1308, %vm1309
  %v1311 = vsel %vm1310, %v1303, %v1307
  %v1312 = vand.u32 2147483647, %v1302
  %vm1313 = vcmp.eq.f32.partialorder %v1312, 8.507059e+37
  %v1314 = vand.u32 %v1302, 2147483648
  %v1315 = vor.u32 1.1754944e-38, %v1314
  %v1316 = vsel %vm1313, %v1315, %v1311
  %v1317 = vmul.f32 1.0, %v1316
  %v1318 = vtanh.pop %v1278
  %v1319 = vxor.u32 %v1279, 2147483648
  %v1320 = vmul.f32 %v1319, 1.442695
  %v1321 = vpow.pop %v1320
  %v1322 = vadd.f32 %v1321, 1.0
  %v1323 = vrcp.pop %v1322
  %v1324 = vmul.f32 %v1322, %v1323
  %v1325 = vsub.f32 1.0, %v1324
  %v1326 = vmul.f32 %v1323, %v1325
  %v1327 = vadd.f32 %v1323, %v1326
  %vm1328 = vweird.f32 %v1322
  %vm1329 = vweird.f32 %v1323
  %vm1330 = vmor %vm1328, %vm1329
  %v1331 = vsel %vm1330, %v1323, %v1327
  %v1332 = vand.u32 2147483647, %v1322
  %vm1333 = vcmp.eq.f32.partialorder %v1332, 8.507059e+37
  %v1334 = vand.u32 %v1322, 2147483648
  %v1335 = vor.u32 1.1754944e-38, %v1334
  %v1336 = vsel %vm1333, %v1335, %v1331
  %v1337 = vmul.f32 1.0, %v1336
  %v1338 = vmul.f32 %v1317, %v1126
  %v1339 = vmul.f32 %v1298, %v1318
  %v1340 = vadd.f32 %v1338, %v1339
  %v1341 = vtanh.pop %v1340
  %v1342 = vmul.f32 %v1337, %v1341
  %1343 = vst [vmem:[#allocation2] sm:$0xff] %v1342
  %1344 = vst [vmem:[#allocation3] sm:$0xff] %v1340
  %s1345 = scalar_lea.vmem %s2, 40
  %1346 = vst [vmem:[%s1345] sm:$0xff] %v1342
  %v1347 = vld [vmem:[#allocation2] sm:$0xff]
  %v1348 = vld [vmem:[#allocation3] sm:$0xff]
  %s1349 = scalar_lea.vmem %s0, 192
  %v1350 = vld [vmem:[%s1349] sm:$0xff]
  %v1351 = vld [vmem:[%s1349 + $0x8] sm:$0xff]
  %v1352 = vld [vmem:[%s1349 + $0x10] sm:$0xff]
  %v1353 = vld [vmem:[%s1349 + $0x18] sm:$0xff]
  %v1354 = vld [vmem:[%s1] sm:$0xff]
  %v1355 = vld [vmem:[%s1 + $0x8] sm:$0xff]
  %v1356 = vld [vmem:[%s1 + $0x10] sm:$0xff]
  %v1357 = vld [vmem:[%s1 + $0x18] sm:$0xff]
  %v1358 = vld [vmem:[%s1 + $0x20] sm:$0xff]
  %v1359 = vld [vmem:[%s1 + $0x28] sm:$0xff]
  %v1360 = vld [vmem:[%s1 + $0x30] sm:$0xff]
  %v1361 = vld [vmem:[%s1 + $0x38] sm:$0xff]
  %v1362 = vld [vmem:[%s1 + $0x40] sm:$0xff]
  %v1363 = vld [vmem:[%s1 + $0x48] sm:$0xff]
  %v1364 = vld [vmem:[%s1 + $0x50] sm:$0xff]
  %v1365 = vld [vmem:[%s1 + $0x58] sm:$0xff]
  %v1366 = vld [vmem:[%s1 + $0x60] sm:$0xff]
  %v1367 = vld [vmem:[%s1 + $0x68] sm:$0xff]
  %v1368 = vld [vmem:[%s1 + $0x70] sm:$0xff]
  %v1369 = vld [vmem:[%s1 + $0x78] sm:$0xff]
  %v1370 = vld [vmem:[%s1 + $0x80] sm:$0xff]
  %v1371 = vld [vmem:[%s1 + $0x88] sm:$0xff]
  %v1372 = vld [vmem:[%s1 + $0x90] sm:$0xff]
  %v1373 = vld [vmem:[%s1 + $0x98] sm:$0xff]
  %v1374 = vld [vmem:[%s1 + $0xa0] sm:$0xff]
  %v1375 = vld [vmem:[%s1 + $0xa8] sm:$0xff]
  %v1376 = vld [vmem:[%s1 + $0xb0] sm:$0xff]
  %v1377 = vld [vmem:[%s1 + $0xb8] sm:$0xff]
  %v1378 = vld [vmem:[%s1 + $0xc0] sm:$0xff]
  %v1379 = vld [vmem:[%s1 + $0xc8] sm:$0xff]
  %v1380 = vld [vmem:[%s1 + $0xd0] sm:$0xff]
  %v1381 = vld [vmem:[%s1 + $0xd8] sm:$0xff]
  %v1382 = vld [vmem:[%s1 + $0xe0] sm:$0xff]
  %v1383 = vld [vmem:[%s1 + $0xe8] sm:$0xff]
  %v1384 = vld [vmem:[%s1 + $0xf0] sm:$0xff]
  %v1385 = vld [vmem:[%s1 + $0xf8] sm:$0xff]
  %v1386 = vld [vmem:[%s1 + $0x100] sm:$0xff]
  %v1387 = vld [vmem:[%s1 + $0x108] sm:$0xff]
  %v1388 = vld [vmem:[%s1 + $0x110] sm:$0xff]
  %v1389 = vld [vmem:[%s1 + $0x118] sm:$0xff]
  %v1390 = vld [vmem:[%s1 + $0x120] sm:$0xff]
  %v1391 = vld [vmem:[%s1 + $0x128] sm:$0xff]
  %v1392 = vld [vmem:[%s1 + $0x130] sm:$0xff]
  %v1393 = vld [vmem:[%s1 + $0x138] sm:$0xff]
  %v1394 = vld [vmem:[%s1 + $0x140] sm:$0xff]
  %v1395 = vld [vmem:[%s1 + $0x148] sm:$0xff]
  %v1396 = vld [vmem:[%s1 + $0x150] sm:$0xff]
  %v1397 = vld [vmem:[%s1 + $0x158] sm:$0xff]
  %v1398 = vld [vmem:[%s1 + $0x160] sm:$0xff]
  %v1399 = vld [vmem:[%s1 + $0x168] sm:$0xff]
  %v1400 = vld [vmem:[%s1 + $0x170] sm:$0xff]
  %v1401 = vld [vmem:[%s1 + $0x178] sm:$0xff]
  %v1402 = vld [vmem:[%s1 + $0x180] sm:$0xff]
  %v1403 = vld [vmem:[%s1 + $0x188] sm:$0xff]
  %v1404 = vld [vmem:[%s1 + $0x190] sm:$0xff]
  %v1405 = vld [vmem:[%s1 + $0x198] sm:$0xff]
  %v1406 = vld [vmem:[%s1 + $0x1a0] sm:$0xff]
  %v1407 = vld [vmem:[%s1 + $0x1a8] sm:$0xff]
  %v1408 = vld [vmem:[%s1 + $0x1b0] sm:$0xff]
  %v1409 = vld [vmem:[%s1 + $0x1b8] sm:$0xff]
  %v1410 = vld [vmem:[%s1 + $0x1c0] sm:$0xff]
  %v1411 = vld [vmem:[%s1 + $0x1c8] sm:$0xff]
  %v1412 = vld [vmem:[%s1 + $0x1d0] sm:$0xff]
  %v1413 = vld [vmem:[%s1 + $0x1d8] sm:$0xff]
  %v1414 = vld [vmem:[%s1 + $0x1e0] sm:$0xff]
  %v1415 = vld [vmem:[%s1 + $0x1e8] sm:$0xff]
  %v1416 = vld [vmem:[%s1 + $0x1f0] sm:$0xff]
  %v1417 = vld [vmem:[%s1 + $0x1f8] sm:$0xff]
  %1418 = vmatpush.msra.mxu0 %v1414
  %1419 = vmatpush.msra.mxu0 %v1410
  %1420 = vmatpush.msra.mxu0 %v1406
  %1421 = vmatpush.msra.mxu0 %v1402
  %1422 = vmatpush.msra.mxu0 %v1398
  %1423 = vmatpush.msra.mxu0 %v1394
  %1424 = vmatpush.msra.mxu0 %v1390
  %1425 = vmatpush.msra.mxu0 %v1386
  %1426 = vmatpush.msra.mxu0 %v1382
  %1427 = vmatpush.msra.mxu0 %v1378
  %1428 = vmatpush.msra.mxu0 %v1374
  %1429 = vmatpush.msra.mxu0 %v1370
  %1430 = vmatpush.msra.mxu0 %v1366
  %1431 = vmatpush.msra.mxu0 %v1362
  %1432 = vmatpush.msra.mxu0 %v1358
  %1433 = vmatpush.msra.mxu0 %v1354
  %1434 = vmatmul.f32.gmra.mxu0 %v1347
  %v1435 = vpop.f32.mrf.mxu0
  %v1436 = vadd.f32 0.0, %v1435
  %1437 = vdwg.mxu0
  %1438 = vmatpush.msra.mxu0 %v1415
  %1439 = vmatpush.msra.mxu0 %v1411
  %1440 = vmatpush.msra.mxu0 %v1407
  %1441 = vmatpush.msra.mxu0 %v1403
  %1442 = vmatpush.msra.mxu0 %v1399
  %1443 = vmatpush.msra.mxu0 %v1395
  %1444 = vmatpush.msra.mxu0 %v1391
  %1445 = vmatpush.msra.mxu0 %v1387
  %1446 = vmatpush.msra.mxu0 %v1383
  %1447 = vmatpush.msra.mxu0 %v1379
  %1448 = vmatpush.msra.mxu0 %v1375
  %1449 = vmatpush.msra.mxu0 %v1371
  %1450 = vmatpush.msra.mxu0 %v1367
  %1451 = vmatpush.msra.mxu0 %v1363
  %1452 = vmatpush.msra.mxu0 %v1359
  %1453 = vmatpush.msra.mxu0 %v1355
  %1454 = vmatmul.f32.gmra.mxu0 %v1347
  %v1455 = vpop.f32.mrf.mxu0
  %v1456 = vadd.f32 0.0, %v1455
  %1457 = vdwg.mxu0
  %1458 = vmatpush.msra.mxu0 %v1416
  %1459 = vmatpush.msra.mxu0 %v1412
  %1460 = vmatpush.msra.mxu0 %v1408
  %1461 = vmatpush.msra.mxu0 %v1404
  %1462 = vmatpush.msra.mxu0 %v1400
  %1463 = vmatpush.msra.mxu0 %v1396
  %1464 = vmatpush.msra.mxu0 %v1392
  %1465 = vmatpush.msra.mxu0 %v1388
  %1466 = vmatpush.msra.mxu0 %v1384
  %1467 = vmatpush.msra.mxu0 %v1380
  %1468 = vmatpush.msra.mxu0 %v1376
  %1469 = vmatpush.msra.mxu0 %v1372
  %1470 = vmatpush.msra.mxu0 %v1368
  %1471 = vmatpush.msra.mxu0 %v1364
  %1472 = vmatpush.msra.mxu0 %v1360
  %1473 = vmatpush.msra.mxu0 %v1356
  %1474 = vmatmul.f32.gmra.mxu0 %v1347
  %v1475 = vpop.f32.mrf.mxu0
  %v1476 = vadd.f32 0.0, %v1475
  %1477 = vdwg.mxu0
  %1478 = vmatpush.msra.mxu0 %v1417
  %1479 = vmatpush.msra.mxu0 %v1413
  %1480 = vmatpush.msra.mxu0 %v1409
  %1481 = vmatpush.msra.mxu0 %v1405
  %1482 = vmatpush.msra.mxu0 %v1401
  %1483 = vmatpush.msra.mxu0 %v1397
  %1484 = vmatpush.msra.mxu0 %v1393
  %1485 = vmatpush.msra.mxu0 %v1389
  %1486 = vmatpush.msra.mxu0 %v1385
  %1487 = vmatpush.msra.mxu0 %v1381
  %1488 = vmatpush.msra.mxu0 %v1377
  %1489 = vmatpush.msra.mxu0 %v1373
  %1490 = vmatpush.msra.mxu0 %v1369
  %1491 = vmatpush.msra.mxu0 %v1365
  %1492 = vmatpush.msra.mxu0 %v1361
  %1493 = vmatpush.msra.mxu0 %v1357
  %1494 = vmatmul.f32.gmra.mxu0 %v1347
  %v1495 = vpop.f32.mrf.mxu0
  %v1496 = vadd.f32 0.0, %v1495
  %1497 = vdwg.mxu0
  %v1498 = vadd.f32 %v1350, %v1436
  %v1499 = vadd.f32 %v1351, %v1456
  %v1500 = vadd.f32 %v1352, %v1476
  %v1501 = vadd.f32 %v1353, %v1496
  %v1502 = vxor.u32 %v1498, 2147483648
  %v1503 = vmul.f32 %v1502, 1.442695
  %v1504 = vpow.pop %v1503
  %v1505 = vadd.f32 %v1504, 1.0
  %v1506 = vrcp.pop %v1505
  %v1507 = vmul.f32 %v1505, %v1506
  %v1508 = vsub.f32 1.0, %v1507
  %v1509 = vmul.f32 %v1506, %v1508
  %v1510 = vadd.f32 %v1506, %v1509
  %vm1511 = vweird.f32 %v1505
  %vm1512 = vweird.f32 %v1506
  %vm1513 = vmor %vm1511, %vm1512
  %v1514 = vsel %vm1513, %v1506, %v1510
  %v1515 = vand.u32 2147483647, %v1505
  %vm1516 = vcmp.eq.f32.partialorder %v1515, 8.507059e+37
  %v1517 = vand.u32 %v1505, 2147483648
  %v1518 = vor.u32 1.1754944e-38, %v1517
  %v1519 = vsel %vm1516, %v1518, %v1514
  %v1520 = vmul.f32 1.0, %v1519
  %v1521 = vxor.u32 %v1499, 2147483648
  %v1522 = vmul.f32 %v1521, 1.442695
  %v1523 = vpow.pop %v1522
  %v1524 = vadd.f32 %v1523, 1.0
  %v1525 = vrcp.pop %v1524
  %v1526 = vmul.f32 %v1524, %v1525
  %v1527 = vsub.f32 1.0, %v1526
  %v1528 = vmul.f32 %v1525, %v1527
  %v1529 = vadd.f32 %v1525, %v1528
  %vm1530 = vweird.f32 %v1524
  %vm1531 = vweird.f32 %v1525
  %vm1532 = vmor %vm1530, %vm1531
  %v1533 = vsel %vm1532, %v1525, %v1529
  %v1534 = vand.u32 2147483647, %v1524
  %vm1535 = vcmp.eq.f32.partialorder %v1534, 8.507059e+37
  %v1536 = vand.u32 %v1524, 2147483648
  %v1537 = vor.u32 1.1754944e-38, %v1536
  %v1538 = vsel %vm1535, %v1537, %v1533
  %v1539 = vmul.f32 1.0, %v1538
  %v1540 = vtanh.pop %v1500
  %v1541 = vxor.u32 %v1501, 2147483648
  %v1542 = vmul.f32 %v1541, 1.442695
  %v1543 = vpow.pop %v1542
  %v1544 = vadd.f32 %v1543, 1.0
  %v1545 = vrcp.pop %v1544
  %v1546 = vmul.f32 %v1544, %v1545
  %v1547 = vsub.f32 1.0, %v1546
  %v1548 = vmul.f32 %v1545, %v1547
  %v1549 = vadd.f32 %v1545, %v1548
  %vm1550 = vweird.f32 %v1544
  %vm1551 = vweird.f32 %v1545
  %vm1552 = vmor %vm1550, %vm1551
  %v1553 = vsel %vm1552, %v1545, %v1549
  %v1554 = vand.u32 2147483647, %v1544
  %vm1555 = vcmp.eq.f32.partialorder %v1554, 8.507059e+37
  %v1556 = vand.u32 %v1544, 2147483648
  %v1557 = vor.u32 1.1754944e-38, %v1556
  %v1558 = vsel %vm1555, %v1557, %v1553
  %v1559 = vmul.f32 1.0, %v1558
  %v1560 = vmul.f32 %v1539, %v1348
  %v1561 = vmul.f32 %v1520, %v1540
  %v1562 = vadd.f32 %v1560, %v1561
  %v1563 = vtanh.pop %v1562
  %v1564 = vmul.f32 %v1559, %v1563
  %1565 = vst [vmem:[#allocation2] sm:$0xff] %v1564
  %1566 = vst [vmem:[#allocation3] sm:$0xff] %v1562
  %s1567 = scalar_lea.vmem %s2, 48
  %1568 = vst [vmem:[%s1567] sm:$0xff] %v1564
  %v1569 = vld [vmem:[#allocation2] sm:$0xff]
  %v1570 = vld [vmem:[#allocation3] sm:$0xff]
  %s1571 = scalar_lea.vmem %s0, 224
  %v1572 = vld [vmem:[%s1571] sm:$0xff]
  %v1573 = vld [vmem:[%s1571 + $0x8] sm:$0xff]
  %v1574 = vld [vmem:[%s1571 + $0x10] sm:$0xff]
  %v1575 = vld [vmem:[%s1571 + $0x18] sm:$0xff]
  %v1576 = vld [vmem:[%s1] sm:$0xff]
  %v1577 = vld [vmem:[%s1 + $0x8] sm:$0xff]
  %v1578 = vld [vmem:[%s1 + $0x10] sm:$0xff]
  %v1579 = vld [vmem:[%s1 + $0x18] sm:$0xff]
  %v1580 = vld [vmem:[%s1 + $0x20] sm:$0xff]
  %v1581 = vld [vmem:[%s1 + $0x28] sm:$0xff]
  %v1582 = vld [vmem:[%s1 + $0x30] sm:$0xff]
  %v1583 = vld [vmem:[%s1 + $0x38] sm:$0xff]
  %v1584 = vld [vmem:[%s1 + $0x40] sm:$0xff]
  %v1585 = vld [vmem:[%s1 + $0x48] sm:$0xff]
  %v1586 = vld [vmem:[%s1 + $0x50] sm:$0xff]
  %v1587 = vld [vmem:[%s1 + $0x58] sm:$0xff]
  %v1588 = vld [vmem:[%s1 + $0x60] sm:$0xff]
  %v1589 = vld [vmem:[%s1 + $0x68] sm:$0xff]
  %v1590 = vld [vmem:[%s1 + $0x70] sm:$0xff]
  %v1591 = vld [vmem:[%s1 + $0x78] sm:$0xff]
  %v1592 = vld [vmem:[%s1 + $0x80] sm:$0xff]
  %v1593 = vld [vmem:[%s1 + $0x88] sm:$0xff]
  %v1594 = vld [vmem:[%s1 + $0x90] sm:$0xff]
  %v1595 = vld [vmem:[%s1 + $0x98] sm:$0xff]
  %v1596 = vld [vmem:[%s1 + $0xa0] sm:$0xff]
  %v1597 = vld [vmem:[%s1 + $0xa8] sm:$0xff]
  %v1598 = vld [vmem:[%s1 + $0xb0] sm:$0xff]
  %v1599 = vld [vmem:[%s1 + $0xb8] sm:$0xff]
  %v1600 = vld [vmem:[%s1 + $0xc0] sm:$0xff]
  %v1601 = vld [vmem:[%s1 + $0xc8] sm:$0xff]
  %v1602 = vld [vmem:[%s1 + $0xd0] sm:$0xff]
  %v1603 = vld [vmem:[%s1 + $0xd8] sm:$0xff]
  %v1604 = vld [vmem:[%s1 + $0xe0] sm:$0xff]
  %v1605 = vld [vmem:[%s1 + $0xe8] sm:$0xff]
  %v1606 = vld [vmem:[%s1 + $0xf0] sm:$0xff]
  %v1607 = vld [vmem:[%s1 + $0xf8] sm:$0xff]
  %v1608 = vld [vmem:[%s1 + $0x100] sm:$0xff]
  %v1609 = vld [vmem:[%s1 + $0x108] sm:$0xff]
  %v1610 = vld [vmem:[%s1 + $0x110] sm:$0xff]
  %v1611 = vld [vmem:[%s1 + $0x118] sm:$0xff]
  %v1612 = vld [vmem:[%s1 + $0x120] sm:$0xff]
  %v1613 = vld [vmem:[%s1 + $0x128] sm:$0xff]
  %v1614 = vld [vmem:[%s1 + $0x130] sm:$0xff]
  %v1615 = vld [vmem:[%s1 + $0x138] sm:$0xff]
  %v1616 = vld [vmem:[%s1 + $0x140] sm:$0xff]
  %v1617 = vld [vmem:[%s1 + $0x148] sm:$0xff]
  %v1618 = vld [vmem:[%s1 + $0x150] sm:$0xff]
  %v1619 = vld [vmem:[%s1 + $0x158] sm:$0xff]
  %v1620 = vld [vmem:[%s1 + $0x160] sm:$0xff]
  %v1621 = vld [vmem:[%s1 + $0x168] sm:$0xff]
  %v1622 = vld [vmem:[%s1 + $0x170] sm:$0xff]
  %v1623 = vld [vmem:[%s1 + $0x178] sm:$0xff]
  %v1624 = vld [vmem:[%s1 + $0x180] sm:$0xff]
  %v1625 = vld [vmem:[%s1 + $0x188] sm:$0xff]
  %v1626 = vld [vmem:[%s1 + $0x190] sm:$0xff]
  %v1627 = vld [vmem:[%s1 + $0x198] sm:$0xff]
  %v1628 = vld [vmem:[%s1 + $0x1a0] sm:$0xff]
  %v1629 = vld [vmem:[%s1 + $0x1a8] sm:$0xff]
  %v1630 = vld [vmem:[%s1 + $0x1b0] sm:$0xff]
  %v1631 = vld [vmem:[%s1 + $0x1b8] sm:$0xff]
  %v1632 = vld [vmem:[%s1 + $0x1c0] sm:$0xff]
  %v1633 = vld [vmem:[%s1 + $0x1c8] sm:$0xff]
  %v1634 = vld [vmem:[%s1 + $0x1d0] sm:$0xff]
  %v1635 = vld [vmem:[%s1 + $0x1d8] sm:$0xff]
  %v1636 = vld [vmem:[%s1 + $0x1e0] sm:$0xff]
  %v1637 = vld [vmem:[%s1 + $0x1e8] sm:$0xff]
  %v1638 = vld [vmem:[%s1 + $0x1f0] sm:$0xff]
  %v1639 = vld [vmem:[%s1 + $0x1f8] sm:$0xff]
  %1640 = vmatpush.msra.mxu0 %v1636
  %1641 = vmatpush.msra.mxu0 %v1632
  %1642 = vmatpush.msra.mxu0 %v1628
  %1643 = vmatpush.msra.mxu0 %v1624
  %1644 = vmatpush.msra.mxu0 %v1620
  %1645 = vmatpush.msra.mxu0 %v1616
  %1646 = vmatpush.msra.mxu0 %v1612
  %1647 = vmatpush.msra.mxu0 %v1608
  %1648 = vmatpush.msra.mxu0 %v1604
  %1649 = vmatpush.msra.mxu0 %v1600
  %1650 = vmatpush.msra.mxu0 %v1596
  %1651 = vmatpush.msra.mxu0 %v1592
  %1652 = vmatpush.msra.mxu0 %v1588
  %1653 = vmatpush.msra.mxu0 %v1584
  %1654 = vmatpush.msra.mxu0 %v1580
  %1655 = vmatpush.msra.mxu0 %v1576
  %1656 = vmatmul.f32.gmra.mxu0 %v1569
  %v1657 = vpop.f32.mrf.mxu0
  %v1658 = vadd.f32 0.0, %v1657
  %1659 = vdwg.mxu0
  %1660 = vmatpush.msra.mxu0 %v1637
  %1661 = vmatpush.msra.mxu0 %v1633
  %1662 = vmatpush.msra.mxu0 %v1629
  %1663 = vmatpush.msra.mxu0 %v1625
  %1664 = vmatpush.msra.mxu0 %v1621
  %1665 = vmatpush.msra.mxu0 %v1617
  %1666 = vmatpush.msra.mxu0 %v1613
  %1667 = vmatpush.msra.mxu0 %v1609
  %1668 = vmatpush.msra.mxu0 %v1605
  %1669 = vmatpush.msra.mxu0 %v1601
  %1670 = vmatpush.msra.mxu0 %v1597
  %1671 = vmatpush.msra.mxu0 %v1593
  %1672 = vmatpush.msra.mxu0 %v1589
  %1673 = vmatpush.msra.mxu0 %v1585
  %1674 = vmatpush.msra.mxu0 %v1581
  %1675 = vmatpush.msra.mxu0 %v1577
  %1676 = vmatmul.f32.gmra.mxu0 %v1569
  %v1677 = vpop.f32.mrf.mxu0
  %v1678 = vadd.f32 0.0, %v1677
  %1679 = vdwg.mxu0
  %1680 = vmatpush.msra.mxu0 %v1638
  %1681 = vmatpush.msra.mxu0 %v1634
  %1682 = vmatpush.msra.mxu0 %v1630
  %1683 = vmatpush.msra.mxu0 %v1626
  %1684 = vmatpush.msra.mxu0 %v1622
  %1685 = vmatpush.msra.mxu0 %v1618
  %1686 = vmatpush.msra.mxu0 %v1614
  %1687 = vmatpush.msra.mxu0 %v1610
  %1688 = vmatpush.msra.mxu0 %v1606
  %1689 = vmatpush.msra.mxu0 %v1602
  %1690 = vmatpush.msra.mxu0 %v1598
  %1691 = vmatpush.msra.mxu0 %v1594
  %1692 = vmatpush.msra.mxu0 %v1590
  %1693 = vmatpush.msra.mxu0 %v1586
  %1694 = vmatpush.msra.mxu0 %v1582
  %1695 = vmatpush.msra.mxu0 %v1578
  %1696 = vmatmul.f32.gmra.mxu0 %v1569
  %v1697 = vpop.f32.mrf.mxu0
  %v1698 = vadd.f32 0.0, %v1697
  %1699 = vdwg.mxu0
  %1700 = vmatpush.msra.mxu0 %v1639
  %1701 = vmatpush.msra.mxu0 %v1635
  %1702 = vmatpush.msra.mxu0 %v1631
  %1703 = vmatpush.msra.mxu0 %v1627
  %1704 = vmatpush.msra.mxu0 %v1623
  %1705 = vmatpush.msra.mxu0 %v1619
  %1706 = vmatpush.msra.mxu0 %v1615
  %1707 = vmatpush.msra.mxu0 %v1611
  %1708 = vmatpush.msra.mxu0 %v1607
  %1709 = vmatpush.msra.mxu0 %v1603
  %1710 = vmatpush.msra.mxu0 %v1599
  %1711 = vmatpush.msra.mxu0 %v1595
  %1712 = vmatpush.msra.mxu0 %v1591
  %1713 = vmatpush.msra.mxu0 %v1587
  %1714 = vmatpush.msra.mxu0 %v1583
  %1715 = vmatpush.msra.mxu0 %v1579
  %1716 = vmatmul.f32.gmra.mxu0 %v1569
  %v1717 = vpop.f32.mrf.mxu0
  %v1718 = vadd.f32 0.0, %v1717
  %1719 = vdwg.mxu0
  %v1720 = vadd.f32 %v1572, %v1658
  %v1721 = vadd.f32 %v1573, %v1678
  %v1722 = vadd.f32 %v1574, %v1698
  %v1723 = vadd.f32 %v1575, %v1718
  %v1724 = vxor.u32 %v1720, 2147483648
  %v1725 = vmul.f32 %v1724, 1.442695
  %v1726 = vpow.pop %v1725
  %v1727 = vadd.f32 %v1726, 1.0
  %v1728 = vrcp.pop %v1727
  %v1729 = vmul.f32 %v1727, %v1728
  %v1730 = vsub.f32 1.0, %v1729
  %v1731 = vmul.f32 %v1728, %v1730
  %v1732 = vadd.f32 %v1728, %v1731
  %vm1733 = vweird.f32 %v1727
  %vm1734 = vweird.f32 %v1728
  %vm1735 = vmor %vm1733, %vm1734
  %v1736 = vsel %vm1735, %v1728, %v1732
  %v1737 = vand.u32 2147483647, %v1727
  %vm1738 = vcmp.eq.f32.partialorder %v1737, 8.507059e+37
  %v1739 = vand.u32 %v1727, 2147483648
  %v1740 = vor.u32 1.1754944e-38, %v1739
  %v1741 = vsel %vm1738, %v1740, %v1736
  %v1742 = vmul.f32 1.0, %v1741
  %v1743 = vxor.u32 %v1721, 2147483648
  %v1744 = vmul.f32 %v1743, 1.442695
  %v1745 = vpow.pop %v1744
  %v1746 = vadd.f32 %v1745, 1.0
  %v1747 = vrcp.pop %v1746
  %v1748 = vmul.f32 %v1746, %v1747
  %v1749 = vsub.f32 1.0, %v1748
  %v1750 = vmul.f32 %v1747, %v1749
  %v1751 = vadd.f32 %v1747, %v1750
  %vm1752 = vweird.f32 %v1746
  %vm1753 = vweird.f32 %v1747
  %vm1754 = vmor %vm1752, %vm1753
  %v1755 = vsel %vm1754, %v1747, %v1751
  %v1756 = vand.u32 2147483647, %v1746
  %vm1757 = vcmp.eq.f32.partialorder %v1756, 8.507059e+37
  %v1758 = vand.u32 %v1746, 2147483648
  %v1759 = vor.u32 1.1754944e-38, %v1758
  %v1760 = vsel %vm1757, %v1759, %v1755
  %v1761 = vmul.f32 1.0, %v1760
  %v1762 = vtanh.pop %v1722
  %v1763 = vxor.u32 %v1723, 2147483648
  %v1764 = vmul.f32 %v1763, 1.442695
  %v1765 = vpow.pop %v1764
  %v1766 = vadd.f32 %v1765, 1.0
  %v1767 = vrcp.pop %v1766
  %v1768 = vmul.f32 %v1766, %v1767
  %v1769 = vsub.f32 1.0, %v1768
  %v1770 = vmul.f32 %v1767, %v1769
  %v1771 = vadd.f32 %v1767, %v1770
  %vm1772 = vweird.f32 %v1766
  %vm1773 = vweird.f32 %v1767
  %vm1774 = vmor %vm1772, %vm1773
  %v1775 = vsel %vm1774, %v1767, %v1771
  %v1776 = vand.u32 2147483647, %v1766
  %vm1777 = vcmp.eq.f32.partialorder %v1776, 8.507059e+37
  %v1778 = vand.u32 %v1766, 2147483648
  %v1779 = vor.u32 1.1754944e-38, %v1778
  %v1780 = vsel %vm1777, %v1779, %v1775
  %v1781 = vmul.f32 1.0, %v1780
  %v1782 = vmul.f32 %v1761, %v1570
  %v1783 = vmul.f32 %v1742, %v1762
  %v1784 = vadd.f32 %v1782, %v1783
  %v1785 = vtanh.pop %v1784
  %v1786 = vmul.f32 %v1781, %v1785
  %1787 = vst [vmem:[#allocation2] sm:$0xff] %v1786
  %1788 = vst [vmem:[#allocation3] sm:$0xff] %v1784
  %s1789 = scalar_lea.vmem %s2, 56
  %1790 = vst [vmem:[%s1789] sm:$0xff] %v1786
  // Predicated region
  $region14: #{decoder_rnn_forward.4} parent=0 // pred_check
    _
  $region15: #{decoder_rnn_forward.4} parent=0 // pred_check_branch
    %1792 = sbr.rel (0) target = $region17
  $region16: #{decoder_rnn_forward.4} parent=0 // pred_region
    _
  $region17: #{decoder_rnn_forward.4} parent=0 // pred_fallthru
    _
  // Predicated region
  $region18: #{decoder_rnn_forward.4} parent=0 // pred_check
    _
  $region19: #{decoder_rnn_forward.4} parent=0 // pred_check_branch
    %1794 = sbr.rel (0) target = $region21
  $region20: #{decoder_rnn_forward.4} parent=0 // pred_region
    _
  $region21: #{decoder_rnn_forward.4} parent=0 // pred_fallthru
    _

</llo_original>
